<compile_context>
chip_gen: v7x
topology: tpu7x:2x2x1
jax: 0.10.0
libtpu: 0.0.40
codegen_flags: <defaults>
</compile_context>

<pallas_src>
import math
import functools

import jax
import jax.numpy as jnp
from jax.experimental import pallas as pl
from jax.experimental.pallas import tpu as pltpu


# ----------------------------------------------------------------------------
# Tiled matmul + bias (+ReLU) kernel  — used for conv-as-matmul and logits
# ----------------------------------------------------------------------------
def _matmul_bias_kernel(x_ref, w_ref, b_ref, o_ref, acc_ref, *, activation):
    @pl.when(pl.program_id(2) == 0)
    def _():
        acc_ref[...] = jnp.zeros_like(acc_ref)

    acc_ref[...] += jnp.dot(x_ref[...], w_ref[...],
                            preferred_element_type=jnp.float32)

    @pl.when(pl.program_id(2) == pl.num_programs(2) - 1)
    def _():
        out = acc_ref[...] + b_ref[...]          # bias is (1, tn) -> broadcast
        if activation == "relu":
            out = jnp.maximum(out, 0.0)
        o_ref[...] = out.astype(o_ref.dtype)


def _pick_tile(dim, pref, unit):
    """Largest tile <= pref that divides dim and is a multiple of `unit`;
    fall back to the full dim (block == array extent is always legal)."""
    if dim <= pref:
        return dim
    t = (pref // unit) * unit
    while t >= unit:
        if dim % t == 0:
            return t
        t -= unit
    return dim


def matmul_bias(x, w, b, activation=None):
    """x:(M,K) @ w:(K,N) + b:(N,) -> (M,N).  bf16 MXU inputs, f32 accumulate."""
    M, K = x.shape
    K2, N = w.shape
    assert K == K2
    tm = _pick_tile(M, 256, 8)      # sublane-aligned
    tn = _pick_tile(N, 256, 128)    # lane-dense output
    tk = _pick_tile(K, 512, 128)
    grid = (M // tm, N // tn, K // tk)
    b2 = b.reshape(1, N).astype(jnp.float32)
    kern = functools.partial(_matmul_bias_kernel, activation=activation)
    return pl.pallas_call(
        kern,
        out_shape=jax.ShapeDtypeStruct((M, N), jnp.float32),
        grid_spec=pltpu.PrefetchScalarGridSpec(
            num_scalar_prefetch=0,
            grid=grid,
            in_specs=[
                pl.BlockSpec((tm, tk), lambda i, j, k: (i, k)),
                pl.BlockSpec((tk, tn), lambda i, j, k: (k, j)),
                pl.BlockSpec((1, tn), lambda i, j, k: (0, j)),
            ],
            out_specs=pl.BlockSpec((tm, tn), lambda i, j, k: (i, j)),
            scratch_shapes=[pltpu.VMEM((tm, tn), jnp.float32)],
        ),
        compiler_params=pltpu.CompilerParams(
            dimension_semantics=("parallel", "parallel", "arbitrary")),
    )(x.astype(jnp.bfloat16), w.astype(jnp.bfloat16), b2)


# ----------------------------------------------------------------------------
# Fully fused transformer decoder layer (one pallas_call, grid over batch)
# ----------------------------------------------------------------------------
def _decoder_layer_kernel(x_ref, pe_ref, mem_ref,
                          sa_wqkv_ref, sa_bqkv_ref, sa_wo_ref, sa_bo_ref,
                          ca_wq_ref, ca_bq_ref, ca_wkv_ref, ca_bkv_ref,
                          ca_wo_ref, ca_bo_ref,
                          ln_g_ref, ln_b_ref,
                          ffn_w1_ref, ffn_b1_ref, ffn_w2_ref, ffn_b2_ref,
                          o_ref, attn_scratch,
                          *, num_heads, embed_scale, eps):
    f32 = jnp.float32
    x = x_ref[0].astype(f32) * embed_scale + pe_ref[...]   # emb*sqrt(E) + PE
    mem = mem_ref[0].astype(f32)
    T, E = x.shape
    dh = E // num_heads
    scale = 1.0 / math.sqrt(dh)
    ln_g = ln_g_ref[...]
    ln_b = ln_b_ref[...]

    def layer_norm(y, idx):
        mu = jnp.mean(y, axis=-1, keepdims=True)
        var = jnp.mean((y - mu) ** 2, axis=-1, keepdims=True)
        return ((y - mu) * jax.lax.rsqrt(var + eps)
                * ln_g[idx:idx + 1, :] + ln_b[idx:idx + 1, :])

    def attention(q, k, v, causal):
        # q: (T, E), k/v: (S, E).  Heads packed along the lane dim; static
        # per-head loop, each head writes its slice of the (T, E) scratch.
        for h in range(num_heads):
            sl = slice(h * dh, (h + 1) * dh)
            qh, kh, vh = q[:, sl], k[:, sl], v[:, sl]
            s = jax.lax.dot_general(qh, kh, (((1,), (1,)), ((), ())),
                                    preferred_element_type=f32) * scale
            if causal:
                row_i = jax.lax.broadcasted_iota(jnp.int32, s.shape, 0)
                col_i = jax.lax.broadcasted_iota(jnp.int32, s.shape, 1)
                s = jnp.where(col_i > row_i, f32(-1e30), s)
            m = jnp.max(s, axis=-1, keepdims=True)
            p = jnp.exp(s - m)
            denom = jnp.sum(p, axis=-1, keepdims=True)
            oh = jnp.dot(p, vh, preferred_element_type=f32)
            attn_scratch[:, sl] = oh * pl.reciprocal(denom, approx=True)
        return attn_scratch[...]

    # ---- self-attention (post-norm, like nn.TransformerDecoderLayer) -------
    qkv = jnp.dot(x, sa_wqkv_ref[...], preferred_element_type=f32) + sa_bqkv_ref[...]
    a = attention(qkv[:, :E], qkv[:, E:2 * E], qkv[:, 2 * E:], causal=True)
    a = jnp.dot(a, sa_wo_ref[...], preferred_element_type=f32) + sa_bo_ref[...]
    x = layer_norm(x + a, 0)

    # ---- cross-attention over CNN memory (no mask needed) ------------------
    q = jnp.dot(x, ca_wq_ref[...], preferred_element_type=f32) + ca_bq_ref[...]
    kv = jnp.dot(mem, ca_wkv_ref[...], preferred_element_type=f32) + ca_bkv_ref[...]
    a = attention(q, kv[:, :E], kv[:, E:], causal=False)
    a = jnp.dot(a, ca_wo_ref[...], preferred_element_type=f32) + ca_bo_ref[...]
    x = layer_norm(x + a, 1)

    # ---- feed-forward -------------------------------------------------------
    h1 = jnp.maximum(jnp.dot(x, ffn_w1_ref[...], preferred_element_type=f32)
                     + ffn_b1_ref[...], 0.0)
    h2 = jnp.dot(h1, ffn_w2_ref[...], preferred_element_type=f32) + ffn_b2_ref[...]
    x = layer_norm(x + h2, 2)

    # TODO(synk): dropout is identity (eval mode); no RNG dropout applied.
    o_ref[0] = x.astype(o_ref.dtype)


def decoder_layer(p, x_emb, pe, memory, num_heads, embed_scale, eps=1e-5):
    B, T, E = x_emb.shape
    S = memory.shape[1]
    D = p["ffn_w1"].shape[1]

    def bc(shape):
        nd = len(shape)
        return pl.BlockSpec(shape, lambda b, _n=nd: (0,) * _n)

    row = lambda v: v.reshape(1, -1).astype(jnp.float32)
    kern = functools.partial(_decoder_layer_kernel, num_heads=num_heads,
                             embed_scale=embed_scale, eps=eps)
    return pl.pallas_call(
        kern,
        out_shape=jax.ShapeDtypeStruct((B, T, E), jnp.float32),
        grid_spec=pltpu.PrefetchScalarGridSpec(
            num_scalar_prefetch=0,
            grid=(B,),
            in_specs=[
                pl.BlockSpec((1, T, E), lambda b: (b, 0, 0)),   # token embeds
                bc((T, E)),                                     # positional enc
                pl.BlockSpec((1, S, E), lambda b: (b, 0, 0)),   # CNN memory
                bc((E, 3 * E)), bc((1, 3 * E)), bc((E, E)), bc((1, E)),   # self-attn
                bc((E, E)), bc((1, E)), bc((E, 2 * E)), bc((1, 2 * E)),   # cross q/kv
                bc((E, E)), bc((1, E)),                                    # cross out
                bc((3, E)), bc((3, E)),                                    # ln gamma/beta
                bc((E, D)), bc((1, D)), bc((D, E)), bc((1, E)),            # FFN
            ],
            out_specs=pl.BlockSpec((1, T, E), lambda b: (b, 0, 0)),
            scratch_shapes=[pltpu.VMEM((T, E), jnp.float32)],
        ),
        compiler_params=pltpu.CompilerParams(dimension_semantics=("parallel",)),
    )(x_emb.astype(jnp.float32), pe.astype(jnp.float32), memory.astype(jnp.float32),
      p["sa_wqkv"], row(p["sa_bqkv"]), p["sa_wo"], row(p["sa_bo"]),
      p["ca_wq"], row(p["ca_bq"]), p["ca_wkv"], row(p["ca_bkv"]),
      p["ca_wo"], row(p["ca_bo"]),
      p["ln_g"], p["ln_b"],
      p["ffn_w1"], row(p["ffn_b1"]), p["ffn_w2"], row(p["ffn_b2"]))


# ----------------------------------------------------------------------------
# CNN encoder: im2col (NHWC, no inter-conv transpose) + fused matmul+bias+ReLU
# ----------------------------------------------------------------------------
def _im2col_nhwc(x, kh, kw, stride, pad):
    # TODO(synk): im2col patch extraction stays in XLA (cheap layout plumbing
    # at these sizes); an in-kernel strided gather would remove the extra HBM
    # round-trip for large images.
    xp = jnp.pad(x, ((0, 0), (pad, pad), (pad, pad), (0, 0)))
    B, Hp, Wp, C = xp.shape
    Ho = (Hp - kh) // stride + 1
    Wo = (Wp - kw) // stride + 1
    cols = []
    for i in range(kh):
        for j in range(kw):
            cols.append(xp[:, i:i + stride * Ho:stride, j:j + stride * Wo:stride, :])
    patches = jnp.stack(cols, axis=3)                 # (B, Ho, Wo, kh*kw, C)
    patches = patches.reshape(B * Ho * Wo, kh * kw * C)
    return patches, Ho, Wo


def conv2d_relu_nhwc(x, w, b, stride, pad):
    # x: (B, H, W, Cin); w: (Cout, Cin, kh, kw) torch layout; b: (Cout,)
    B = x.shape[0]
    Cout, Cin, kh, kw = w.shape
    patches, Ho, Wo = _im2col_nhwc(x, kh, kw, stride, pad)
    w2 = w.transpose(2, 3, 1, 0).reshape(kh * kw * Cin, Cout)   # matches patch order
    y = matmul_bias(patches, w2, b, activation="relu")          # Pallas GEMM
    return y.reshape(B, Ho, Wo, Cout)


def cnn_encoder(p, images):
    x = images.transpose(0, 2, 3, 1)                            # NCHW -> NHWC once
    y = conv2d_relu_nhwc(x, p["w1"], p["b1"], stride=2, pad=1)  # (B, H/2, W/2, c1)
    y = conv2d_relu_nhwc(y, p["w2"], p["b2"], stride=2, pad=1)  # (B, H/4, W/4, E)
    B, Ho, Wo, E = y.shape
    return y.reshape(B, Ho * Wo, E)                             # (B, S_mem, E)


# ----------------------------------------------------------------------------
# Full forward
# ----------------------------------------------------------------------------
def image_captioning_forward(params, images, captions, num_heads):
    """images: (B, 3, H, W) float32 NCHW; captions: (B, T) int32 -> (B, T, vocab)."""
    memory = cnn_encoder(params["encoder"], images)             # (B, S_mem, E)
    dec = params["decoder"]
    B, T = captions.shape
    E = dec["tok_emb"].shape[1]
    # TODO(synk): token-embedding gather stays in XLA (jnp.take).
    x_emb = jnp.take(dec["tok_emb"], captions, axis=0)          # (B, T, E)
    pe = dec["pos_enc"][:T]                                     # (T, E)
    x = decoder_layer(dec["layer"], x_emb, pe, memory, num_heads,
                      embed_scale=math.sqrt(E))                 # fused decoder layer
    logits = matmul_bias(x.reshape(B * T, E), dec["fc_w"], dec["fc_b"])
    vocab = dec["fc_w"].shape[1]
    return logits.reshape(B, T, vocab)


# ----------------------------------------------------------------------------
# Deterministic parameter initialization
# ----------------------------------------------------------------------------
def _sinusoidal_pe(max_len, d):
    pos = jnp.arange(max_len, dtype=jnp.float32)[:, None]
    div = jnp.exp(jnp.arange(0, d, 2, dtype=jnp.float32) * (-math.log(10000.0) / d))
    pe = jnp.zeros((max_len, d), jnp.float32)
    pe = pe.at[:, 0::2].set(jnp.sin(pos * div))
    pe = pe.at[:, 1::2].set(jnp.cos(pos * div))
    return pe


def init_params(key, vocab_size, embed_size, decoder_dim, max_len, conv1_ch=16):
    keys = iter(jax.random.split(key, 32))
    E = embed_size

    def dense(fan_in, fan_out):
        w = jax.random.normal(next(keys), (fan_in, fan_out), jnp.float32)
        return w / math.sqrt(fan_in), jnp.zeros((fan_out,), jnp.float32)

    def conv(cout, cin, k):
        w = jax.random.normal(next(keys), (cout, cin, k, k), jnp.float32)
        return w / math.sqrt(cin * k * k), jnp.zeros((cout,), jnp.float32)

    w1, b1 = conv(conv1_ch, 3, 3)
    w2, b2 = conv(E, conv1_ch, 3)
    encoder = dict(w1=w1, b1=b1, w2=w2, b2=b2)

    sa_wqkv, sa_bqkv = dense(E, 3 * E)          # merged Q|K|V for self-attn
    sa_wo, sa_bo = dense(E, E)
    ca_wq, ca_bq = dense(E, E)
    ca_wkv, ca_bkv = dense(E, 2 * E)            # merged K|V for cross-attn
    ca_wo, ca_bo = dense(E, E)
    ffn_w1, ffn_b1 = dense(E, decoder_dim)
    ffn_w2, ffn_b2 = dense(decoder_dim, E)
    layer = dict(
        sa_wqkv=sa_wqkv, sa_bqkv=sa_bqkv, sa_wo=sa_wo, sa_bo=sa_bo,
        ca_wq=ca_wq, ca_bq=ca_bq, ca_wkv=ca_wkv, ca_bkv=ca_bkv,
        ca_wo=ca_wo, ca_bo=ca_bo,
        ln_g=jnp.ones((3, E), jnp.float32), ln_b=jnp.zeros((3, E), jnp.float32),
        ffn_w1=ffn_w1, ffn_b1=ffn_b1, ffn_w2=ffn_w2, ffn_b2=ffn_b2,
    )
    fc_w, fc_b = dense(E, vocab_size)
    tok_emb = jax.random.normal(next(keys), (vocab_size, E), jnp.float32) * 0.02
    decoder = dict(tok_emb=tok_emb, pos_enc=_sinusoidal_pe(max_len, E),
                   layer=layer, fc_w=fc_w, fc_b=fc_b)
    return dict(encoder=encoder, decoder=decoder)


# ----------------------------------------------------------------------------
if __name__ == "__main__":
    # Hyperparameters (attention_dim is accepted-but-unused, like the torch module)
    vocab_size, embed_size, decoder_dim, attention_dim = 128, 32, 64, 64
    max_len, num_heads = 50, 4
    B, H, W, T = 2, 16, 16, 8

    key = jax.random.PRNGKey(0)
    k_img, k_cap = jax.random.split(key, 2)
    images = jax.random.normal(k_img, (B, 3, H, W), jnp.float32)     # NCHW
    captions = jax.random.randint(k_cap, (B, T), 0, vocab_size, jnp.int32)
    params = init_params(jax.random.PRNGKey(42), vocab_size, embed_size,
                         decoder_dim, max_len)

    fwd = jax.jit(functools.partial(image_captioning_forward, num_heads=num_heads))
    out = jax.block_until_ready(fwd(params, images, captions))
    assert out.shape == (B, T, vocab_size), out.shape
    assert bool(jnp.all(jnp.isfinite(out)))
    print("KERNEL_OK")
</pallas_src>

<mosaic_0001>
module attributes {stable_mosaic.version = 11 : i64} {
  func.func @_matmul_bias_kernel(%arg0: i32, %arg1: i32, %arg2: i32, %arg3: memref<128x27xbf16, #tpu.memory_space<vmem>>, %arg4: memref<27x16xbf16, #tpu.memory_space<vmem>>, %arg5: memref<1x16xf32, #tpu.memory_space<vmem>>, %arg6: memref<128x16xf32, #tpu.memory_space<vmem>>, %arg7: memref<128x16xf32, #tpu.memory_space<vmem>>) attributes {dimension_semantics = [#tpu.dimension_semantics<parallel>, #tpu.dimension_semantics<parallel>, #tpu.dimension_semantics<arbitrary>], iteration_bounds = array<i64: 1, 1, 1>, scalar_prefetch = 0 : i64, scratch_operands = 1 : i64, tpu.core_type = #tpu.core_type<tc>, window_params = [{transform_indices = @transform_0, window_bounds = array<i64: 128, 27>}, {transform_indices = @transform_1, window_bounds = array<i64: 27, 16>}, {transform_indices = @transform_2, window_bounds = array<i64: 1, 16>}, {transform_indices = @transform_3, window_bounds = array<i64: 128, 16>}]} {
    %c0_i32 = arith.constant 0 : i32
    %0 = arith.cmpi eq, %arg2, %c0_i32 : i32
    %1 = arith.extui %0 : i1 to i32
    %c0_i32_0 = arith.constant 0 : i32
    %2 = arith.cmpi ne, %1, %c0_i32_0 : i32
    scf.if %2 {
      %cst_10 = arith.constant 0.000000e+00 : f32
      %12 = vector.broadcast %cst_10 : f32 to vector<128x16xf32>
      %c0_11 = arith.constant 0 : index
      %c0_12 = arith.constant 0 : index
      %13 = vector.load %arg7[%c0_11, %c0_12] : memref<128x16xf32, #tpu.memory_space<vmem>>, vector<128x16xf32>
      tpu.vector_store %arg7[%c0_11, %c0_12], %12 {strides = array<i32>} : memref<128x16xf32, #tpu.memory_space<vmem>>, vector<128x16xf32>,
    } else {
    }
    %c0 = arith.constant 0 : index
    %c0_1 = arith.constant 0 : index
    %3 = vector.load %arg7[%c0, %c0_1] : memref<128x16xf32, #tpu.memory_space<vmem>>, vector<128x16xf32>
    %c0_2 = arith.constant 0 : index
    %c0_3 = arith.constant 0 : index
    %4 = vector.load %arg3[%c0_2, %c0_3] : memref<128x27xbf16, #tpu.memory_space<vmem>>, vector<128x27xbf16>
    %c0_4 = arith.constant 0 : index
    %c0_5 = arith.constant 0 : index
    %5 = vector.load %arg4[%c0_4, %c0_5] : memref<27x16xbf16, #tpu.memory_space<vmem>>, vector<27x16xbf16>
    %cst = arith.constant dense<0.000000e+00> : vector<128x16xf32>
    %6 = tpu.matmul %4, %5, %cst {dimension_numbers = #tpu.dot_dimension_numbers<[1], [0], [0], [1], [0, 0, 1, 1], [], []>} : vector<128x27xbf16>, vector<27x16xbf16>, vector<128x16xf32> -> vector<128x16xf32>
    %7 = arith.addf %3, %6 : vector<128x16xf32>
    %c0_6 = arith.constant 0 : index
    %c0_7 = arith.constant 0 : index
    %8 = vector.load %arg7[%c0_6, %c0_7] : memref<128x16xf32, #tpu.memory_space<vmem>>, vector<128x16xf32>
    tpu.vector_store %arg7[%c0_6, %c0_7], %7 {strides = array<i32>} : memref<128x16xf32, #tpu.memory_space<vmem>>, vector<128x16xf32>,
    %c0_i32_8 = arith.constant 0 : i32
    %9 = arith.cmpi eq, %arg2, %c0_i32_8 : i32
    %10 = arith.extui %9 : i1 to i32
    %c0_i32_9 = arith.constant 0 : i32
    %11 = arith.cmpi ne, %10, %c0_i32_9 : i32
    scf.if %11 {
      %c0_10 = arith.constant 0 : index
      %c0_11 = arith.constant 0 : index
      %12 = vector.load %arg7[%c0_10, %c0_11] : memref<128x16xf32, #tpu.memory_space<vmem>>, vector<128x16xf32>
      %c0_12 = arith.constant 0 : index
      %c0_13 = arith.constant 0 : index
      %13 = vector.load %arg5[%c0_12, %c0_13] : memref<1x16xf32, #tpu.memory_space<vmem>>, vector<1x16xf32>
      %14 = vector.broadcast %13 : vector<1x16xf32> to vector<128x16xf32>
      %15 = arith.addf %12, %14 : vector<128x16xf32>
      %cst_14 = arith.constant 0.000000e+00 : f32
      %16 = vector.broadcast %cst_14 : f32 to vector<128x16xf32>
      %17 = arith.maximumf %15, %16 : vector<128x16xf32>
      %c0_15 = arith.constant 0 : index
      %c0_16 = arith.constant 0 : index
      %18 = vector.load %arg6[%c0_15, %c0_16] : memref<128x16xf32, #tpu.memory_space<vmem>>, vector<128x16xf32>
      tpu.vector_store %arg6[%c0_15, %c0_16], %17 {strides = array<i32>} : memref<128x16xf32, #tpu.memory_space<vmem>>, vector<128x16xf32>,
    } else {
    }
    return
  }
  func.func @transform_0(%arg0: i32, %arg1: i32, %arg2: i32) -> (i32, i32) {
    %c0_i32 = arith.constant 0 : i32
    return %arg0, %arg2 : i32, i32
  }
  func.func @transform_1(%arg0: i32, %arg1: i32, %arg2: i32) -> (i32, i32) {
    %c0_i32 = arith.constant 0 : i32
    return %arg2, %arg1 : i32, i32
  }
  func.func @transform_2(%arg0: i32, %arg1: i32, %arg2: i32) -> (i32, i32) {
    %c0_i32 = arith.constant 0 : i32
    %c0_i32_0 = arith.constant 0 : i32
    return %c0_i32, %arg1 : i32, i32
  }
  func.func @transform_3(%arg0: i32, %arg1: i32, %arg2: i32) -> (i32, i32) {
    %c0_i32 = arith.constant 0 : i32
    return %arg0, %arg1 : i32, i32
  }
}

module attributes {stable_mosaic.version = 11 : i64} {
  func.func @_matmul_bias_kernel(%arg0: i32, %arg1: i32, %arg2: i32, %arg3: memref<32x144xbf16, #tpu.memory_space<vmem>>, %arg4: memref<144x32xbf16, #tpu.memory_space<vmem>>, %arg5: memref<1x32xf32, #tpu.memory_space<vmem>>, %arg6: memref<32x32xf32, #tpu.memory_space<vmem>>, %arg7: memref<32x32xf32, #tpu.memory_space<vmem>>) attributes {dimension_semantics = [#tpu.dimension_semantics<parallel>, #tpu.dimension_semantics<parallel>, #tpu.dimension_semantics<arbitrary>], iteration_bounds = array<i64: 1, 1, 1>, scalar_prefetch = 0 : i64, scratch_operands = 1 : i64, tpu.core_type = #tpu.core_type<tc>, window_params = [{transform_indices = @transform_0, window_bounds = array<i64: 32, 144>}, {transform_indices = @transform_1, window_bounds = array<i64: 144, 32>}, {transform_indices = @transform_2, window_bounds = array<i64: 1, 32>}, {transform_indices = @transform_3, window_bounds = array<i64: 32, 32>}]} {
    %c0_i32 = arith.constant 0 : i32
    %0 = arith.cmpi eq, %arg2, %c0_i32 : i32
    %1 = arith.extui %0 : i1 to i32
    %c0_i32_0 = arith.constant 0 : i32
    %2 = arith.cmpi ne, %1, %c0_i32_0 : i32
    scf.if %2 {
      %cst_10 = arith.constant 0.000000e+00 : f32
      %12 = vector.broadcast %cst_10 : f32 to vector<32x32xf32>
      %c0_11 = arith.constant 0 : index
      %c0_12 = arith.constant 0 : index
      %13 = vector.load %arg7[%c0_11, %c0_12] : memref<32x32xf32, #tpu.memory_space<vmem>>, vector<32x32xf32>
      tpu.vector_store %arg7[%c0_11, %c0_12], %12 {strides = array<i32>} : memref<32x32xf32, #tpu.memory_space<vmem>>, vector<32x32xf32>,
    } else {
    }
    %c0 = arith.constant 0 : index
    %c0_1 = arith.constant 0 : index
    %3 = vector.load %arg7[%c0, %c0_1] : memref<32x32xf32, #tpu.memory_space<vmem>>, vector<32x32xf32>
    %c0_2 = arith.constant 0 : index
    %c0_3 = arith.constant 0 : index
    %4 = vector.load %arg3[%c0_2, %c0_3] : memref<32x144xbf16, #tpu.memory_space<vmem>>, vector<32x144xbf16>
    %c0_4 = arith.constant 0 : index
    %c0_5 = arith.constant 0 : index
    %5 = vector.load %arg4[%c0_4, %c0_5] : memref<144x32xbf16, #tpu.memory_space<vmem>>, vector<144x32xbf16>
    %cst = arith.constant dense<0.000000e+00> : vector<32x32xf32>
    %6 = tpu.matmul %4, %5, %cst {dimension_numbers = #tpu.dot_dimension_numbers<[1], [0], [0], [1], [0, 0, 1, 1], [], []>} : vector<32x144xbf16>, vector<144x32xbf16>, vector<32x32xf32> -> vector<32x32xf32>
    %7 = arith.addf %3, %6 : vector<32x32xf32>
    %c0_6 = arith.constant 0 : index
    %c0_7 = arith.constant 0 : index
    %8 = vector.load %arg7[%c0_6, %c0_7] : memref<32x32xf32, #tpu.memory_space<vmem>>, vector<32x32xf32>
    tpu.vector_store %arg7[%c0_6, %c0_7], %7 {strides = array<i32>} : memref<32x32xf32, #tpu.memory_space<vmem>>, vector<32x32xf32>,
    %c0_i32_8 = arith.constant 0 : i32
    %9 = arith.cmpi eq, %arg2, %c0_i32_8 : i32
    %10 = arith.extui %9 : i1 to i32
    %c0_i32_9 = arith.constant 0 : i32
    %11 = arith.cmpi ne, %10, %c0_i32_9 : i32
    scf.if %11 {
      %c0_10 = arith.constant 0 : index
      %c0_11 = arith.constant 0 : index
      %12 = vector.load %arg7[%c0_10, %c0_11] : memref<32x32xf32, #tpu.memory_space<vmem>>, vector<32x32xf32>
      %c0_12 = arith.constant 0 : index
      %c0_13 = arith.constant 0 : index
      %13 = vector.load %arg5[%c0_12, %c0_13] : memref<1x32xf32, #tpu.memory_space<vmem>>, vector<1x32xf32>
      %14 = vector.broadcast %13 : vector<1x32xf32> to vector<32x32xf32>
      %15 = arith.addf %12, %14 : vector<32x32xf32>
      %cst_14 = arith.constant 0.000000e+00 : f32
      %16 = vector.broadcast %cst_14 : f32 to vector<32x32xf32>
      %17 = arith.maximumf %15, %16 : vector<32x32xf32>
      %c0_15 = arith.constant 0 : index
      %c0_16 = arith.constant 0 : index
      %18 = vector.load %arg6[%c0_15, %c0_16] : memref<32x32xf32, #tpu.memory_space<vmem>>, vector<32x32xf32>
      tpu.vector_store %arg6[%c0_15, %c0_16], %17 {strides = array<i32>} : memref<32x32xf32, #tpu.memory_space<vmem>>, vector<32x32xf32>,
    } else {
    }
    return
  }
  func.func @transform_0(%arg0: i32, %arg1: i32, %arg2: i32) -> (i32, i32) {
    %c0_i32 = arith.constant 0 : i32
    return %arg0, %arg2 : i32, i32
  }
  func.func @transform_1(%arg0: i32, %arg1: i32, %arg2: i32) -> (i32, i32) {
    %c0_i32 = arith.constant 0 : i32
    return %arg2, %arg1 : i32, i32
  }
  func.func @transform_2(%arg0: i32, %arg1: i32, %arg2: i32) -> (i32, i32) {
    %c0_i32 = arith.constant 0 : i32
    %c0_i32_0 = arith.constant 0 : i32
    return %c0_i32, %arg1 : i32, i32
  }
  func.func @transform_3(%arg0: i32, %arg1: i32, %arg2: i32) -> (i32, i32) {
    %c0_i32 = arith.constant 0 : i32
    return %arg0, %arg1 : i32, i32
  }
}

module attributes {stable_mosaic.version = 11 : i64} {
  func.func @_decoder_layer_kernel(%arg0: i32, %arg1: memref<1x8x32xf32, #tpu.memory_space<vmem>>, %arg2: memref<8x32xf32, #tpu.memory_space<vmem>>, %arg3: memref<1x16x32xf32, #tpu.memory_space<vmem>>, %arg4: memref<32x96xf32, #tpu.memory_space<vmem>>, %arg5: memref<1x96xf32, #tpu.memory_space<vmem>>, %arg6: memref<32x32xf32, #tpu.memory_space<vmem>>, %arg7: memref<1x32xf32, #tpu.memory_space<vmem>>, %arg8: memref<32x32xf32, #tpu.memory_space<vmem>>, %arg9: memref<1x32xf32, #tpu.memory_space<vmem>>, %arg10: memref<32x64xf32, #tpu.memory_space<vmem>>, %arg11: memref<1x64xf32, #tpu.memory_space<vmem>>, %arg12: memref<32x32xf32, #tpu.memory_space<vmem>>, %arg13: memref<1x32xf32, #tpu.memory_space<vmem>>, %arg14: memref<3x32xf32, #tpu.memory_space<vmem>>, %arg15: memref<3x32xf32, #tpu.memory_space<vmem>>, %arg16: memref<32x64xf32, #tpu.memory_space<vmem>>, %arg17: memref<1x64xf32, #tpu.memory_space<vmem>>, %arg18: memref<64x32xf32, #tpu.memory_space<vmem>>, %arg19: memref<1x32xf32, #tpu.memory_space<vmem>>, %arg20: memref<1x8x32xf32, #tpu.memory_space<vmem>>, %arg21: memref<8x32xf32, #tpu.memory_space<vmem>>) attributes {dimension_semantics = [#tpu.dimension_semantics<parallel>], iteration_bounds = array<i64: 2>, scalar_prefetch = 0 : i64, scratch_operands = 1 : i64, tpu.core_type = #tpu.core_type<tc>, window_params = [{transform_indices = @transform_0, window_bounds = array<i64: 1, 8, 32>}, {pipeline_mode = #tpu.pipeline_mode<synchronous>, transform_indices = @transform_1, window_bounds = array<i64: 8, 32>}, {transform_indices = @transform_2, window_bounds = array<i64: 1, 16, 32>}, {pipeline_mode = #tpu.pipeline_mode<synchronous>, transform_indices = @transform_3, window_bounds = array<i64: 32, 96>}, {pipeline_mode = #tpu.pipeline_mode<synchronous>, transform_indices = @transform_4, window_bounds = array<i64: 1, 96>}, {pipeline_mode = #tpu.pipeline_mode<synchronous>, transform_indices = @transform_5, window_bounds = array<i64: 32, 32>}, {pipeline_mode = #tpu.pipeline_mode<synchronous>, transform_indices = @transform_6, window_bounds = array<i64: 1, 32>}, {pipeline_mode = #tpu.pipeline_mode<synchronous>, transform_indices = @transform_7, window_bounds = array<i64: 32, 32>}, {pipeline_mode = #tpu.pipeline_mode<synchronous>, transform_indices = @transform_8, window_bounds = array<i64: 1, 32>}, {pipeline_mode = #tpu.pipeline_mode<synchronous>, transform_indices = @transform_9, window_bounds = array<i64: 32, 64>}, {pipeline_mode = #tpu.pipeline_mode<synchronous>, transform_indices = @transform_10, window_bounds = array<i64: 1, 64>}, {pipeline_mode = #tpu.pipeline_mode<synchronous>, transform_indices = @transform_11, window_bounds = array<i64: 32, 32>}, {pipeline_mode = #tpu.pipeline_mode<synchronous>, transform_indices = @transform_12, window_bounds = array<i64: 1, 32>}, {pipeline_mode = #tpu.pipeline_mode<synchronous>, transform_indices = @transform_13, window_bounds = array<i64: 3, 32>}, {pipeline_mode = #tpu.pipeline_mode<synchronous>, transform_indices = @transform_14, window_bounds = array<i64: 3, 32>}, {pipeline_mode = #tpu.pipeline_mode<synchronous>, transform_indices = @transform_15, window_bounds = array<i64: 32, 64>}, {pipeline_mode = #tpu.pipeline_mode<synchronous>, transform_indices = @transform_16, window_bounds = array<i64: 1, 64>}, {pipeline_mode = #tpu.pipeline_mode<synchronous>, transform_indices = @transform_17, window_bounds = array<i64: 64, 32>}, {pipeline_mode = #tpu.pipeline_mode<synchronous>, transform_indices = @transform_18, window_bounds = array<i64: 1, 32>}, {transform_indices = @transform_19, window_bounds = array<i64: 1, 8, 32>}]} {
    %c0 = arith.constant 0 : index
    %c0_0 = arith.constant 0 : index
    %c0_1 = arith.constant 0 : index
    %0 = vector.load %arg1[%c0, %c0_0, %c0_1] : memref<1x8x32xf32, #tpu.memory_space<vmem>>, vector<1x8x32xf32>
    %1 = vector.shape_cast %0 : vector<1x8x32xf32> to vector<8x32xf32>
    %cst = arith.constant 5.65685415 : f32
    %2 = vector.broadcast %cst : f32 to vector<8x32xf32>
    %3 = arith.mulf %1, %2 : vector<8x32xf32>
    %c0_2 = arith.constant 0 : index
    %c0_3 = arith.constant 0 : index
    %4 = vector.load %arg2[%c0_2, %c0_3] : memref<8x32xf32, #tpu.memory_space<vmem>>, vector<8x32xf32>
    %5 = arith.addf %3, %4 : vector<8x32xf32>
    %c0_4 = arith.constant 0 : index
    %c0_5 = arith.constant 0 : index
    %c0_6 = arith.constant 0 : index
    %6 = vector.load %arg3[%c0_4, %c0_5, %c0_6] : memref<1x16x32xf32, #tpu.memory_space<vmem>>, vector<1x16x32xf32>
    %7 = vector.shape_cast %6 : vector<1x16x32xf32> to vector<16x32xf32>
    %c0_7 = arith.constant 0 : index
    %c0_8 = arith.constant 0 : index
    %8 = vector.load %arg14[%c0_7, %c0_8] : memref<3x32xf32, #tpu.memory_space<vmem>>, vector<3x32xf32>
    %c0_9 = arith.constant 0 : index
    %c0_10 = arith.constant 0 : index
    %9 = vector.load %arg15[%c0_9, %c0_10] : memref<3x32xf32, #tpu.memory_space<vmem>>, vector<3x32xf32>
    %c0_11 = arith.constant 0 : index
    %c0_12 = arith.constant 0 : index
    %10 = vector.load %arg4[%c0_11, %c0_12] : memref<32x96xf32, #tpu.memory_space<vmem>>, vector<32x96xf32>
    %cst_13 = arith.constant dense<0.000000e+00> : vector<8x96xf32>
    %11 = tpu.matmul %5, %10, %cst_13 {dimension_numbers = #tpu.dot_dimension_numbers<[1], [0], [0], [1], [0, 0, 1, 1], [], []>} : vector<8x32xf32>, vector<32x96xf32>, vector<8x96xf32> -> vector<8x96xf32>
    %c0_14 = arith.constant 0 : index
    %c0_15 = arith.constant 0 : index
    %12 = vector.load %arg5[%c0_14, %c0_15] : memref<1x96xf32, #tpu.memory_space<vmem>>, vector<1x96xf32>
    %13 = vector.broadcast %12 : vector<1x96xf32> to vector<8x96xf32>
    %14 = arith.addf %11, %13 : vector<8x96xf32>
    %15 = vector.extract_strided_slice %14 {offsets = [0, 0], sizes = [8, 32], strides = [1, 1]} : vector<8x96xf32> to vector<8x32xf32>
    %16 = vector.extract_strided_slice %14 {offsets = [0, 32], sizes = [8, 32], strides = [1, 1]} : vector<8x96xf32> to vector<8x32xf32>
    %17 = vector.extract_strided_slice %14 {offsets = [0, 64], sizes = [8, 32], strides = [1, 1]} : vector<8x96xf32> to vector<8x32xf32>
    %18 = vector.extract_strided_slice %15 {offsets = [0, 0], sizes = [8, 8], strides = [1, 1]} : vector<8x32xf32> to vector<8x8xf32>
    %19 = vector.extract_strided_slice %16 {offsets = [0, 0], sizes = [8, 8], strides = [1, 1]} : vector<8x32xf32> to vector<8x8xf32>
    %20 = vector.extract_strided_slice %17 {offsets = [0, 0], sizes = [8, 8], strides = [1, 1]} : vector<8x32xf32> to vector<8x8xf32>
    %cst_16 = arith.constant dense<0.000000e+00> : vector<8x8xf32>
    %21 = tpu.matmul %18, %19, %cst_16 {dimension_numbers = #tpu.dot_dimension_numbers<[1], [1], [0], [0], [0, 0, 1, 0], [], []>} : vector<8x8xf32>, vector<8x8xf32>, vector<8x8xf32> -> vector<8x8xf32>
    %cst_17 = arith.constant 0.353553385 : f32
    %22 = vector.broadcast %cst_17 : f32 to vector<8x8xf32>
    %23 = arith.mulf %21, %22 : vector<8x8xf32>
    %24 = tpu.iota {dimensions = array<i32: 0>} : vector<8x8xi32>
    %25 = tpu.iota {dimensions = array<i32: 1>} : vector<8x8xi32>
    %26 = arith.cmpi sgt, %25, %24 : vector<8x8xi32>
    %cst_18 = arith.constant -1.000000e+30 : f32
    %27 = vector.broadcast %cst_18 : f32 to vector<8x8xf32>
    %28 = arith.select %26, %27, %23 : vector<8x8xi1>, vector<8x8xf32>
    %cst_19 = arith.constant dense<0xFF800000> : vector<8xf32>
    %29 = vector.multi_reduction <maximumf>, %28, %cst_19 [1] : vector<8x8xf32> to vector<8xf32>
    %30 = vector.shape_cast %29 : vector<8xf32> to vector<8x1xf32>
    %31 = vector.broadcast %30 : vector<8x1xf32> to vector<8x8xf32>
    %32 = arith.subf %28, %31 : vector<8x8xf32>
    %33 = math.exp %32 : vector<8x8xf32>
    %cst_20 = arith.constant dense<0.000000e+00> : vector<8xf32>
    %34 = vector.multi_reduction <add>, %33, %cst_20 [1] : vector<8x8xf32> to vector<8xf32>
    %35 = vector.shape_cast %34 : vector<8xf32> to vector<8x1xf32>
    %cst_21 = arith.constant dense<0.000000e+00> : vector<8x8xf32>
    %36 = tpu.matmul %33, %20, %cst_21 {dimension_numbers = #tpu.dot_dimension_numbers<[1], [0], [0], [1], [0, 0, 1, 1], [], []>} : vector<8x8xf32>, vector<8x8xf32>, vector<8x8xf32> -> vector<8x8xf32>
    %37 = tpu.reciprocal %35 {approx = true} : vector<8x1xf32> -> vector<8x1xf32>
    %38 = vector.broadcast %37 : vector<8x1xf32> to vector<8x8xf32>
    %39 = arith.mulf %36, %38 : vector<8x8xf32>
    %c0_22 = arith.constant 0 : index
    %c0_23 = arith.constant 0 : index
    %40 = vector.load %arg21[%c0_22, %c0_23] : memref<8x32xf32, #tpu.memory_space<vmem>>, vector<8x8xf32>
    tpu.vector_store %arg21[%c0_22, %c0_23], %39 {strides = array<i32>} : memref<8x32xf32, #tpu.memory_space<vmem>>, vector<8x8xf32>,
    %41 = vector.extract_strided_slice %15 {offsets = [0, 8], sizes = [8, 8], strides = [1, 1]} : vector<8x32xf32> to vector<8x8xf32>
    %42 = vector.extract_strided_slice %16 {offsets = [0, 8], sizes = [8, 8], strides = [1, 1]} : vector<8x32xf32> to vector<8x8xf32>
    %43 = vector.extract_strided_slice %17 {offsets = [0, 8], sizes = [8, 8], strides = [1, 1]} : vector<8x32xf32> to vector<8x8xf32>
    %cst_24 = arith.constant dense<0.000000e+00> : vector<8x8xf32>
    %44 = tpu.matmul %41, %42, %cst_24 {dimension_numbers = #tpu.dot_dimension_numbers<[1], [1], [0], [0], [0, 0, 1, 0], [], []>} : vector<8x8xf32>, vector<8x8xf32>, vector<8x8xf32> -> vector<8x8xf32>
    %cst_25 = arith.constant 0.353553385 : f32
    %45 = vector.broadcast %cst_25 : f32 to vector<8x8xf32>
    %46 = arith.mulf %44, %45 : vector<8x8xf32>
    %47 = tpu.iota {dimensions = array<i32: 0>} : vector<8x8xi32>
    %48 = tpu.iota {dimensions = array<i32: 1>} : vector<8x8xi32>
    %49 = arith.cmpi sgt, %48, %47 : vector<8x8xi32>
    %cst_26 = arith.constant -1.000000e+30 : f32
    %50 = vector.broadcast %cst_26 : f32 to vector<8x8xf32>
    %51 = arith.select %49, %50, %46 : vector<8x8xi1>, vector<8x8xf32>
    %cst_27 = arith.constant dense<0xFF800000> : vector<8xf32>
    %52 = vector.multi_reduction <maximumf>, %51, %cst_27 [1] : vector<8x8xf32> to vector<8xf32>
    %53 = vector.shape_cast %52 : vector<8xf32> to vector<8x1xf32>
    %54 = vector.broadcast %53 : vector<8x1xf32> to vector<8x8xf32>
    %55 = arith.subf %51, %54 : vector<8x8xf32>
    %56 = math.exp %55 : vector<8x8xf32>
    %cst_28 = arith.constant dense<0.000000e+00> : vector<8xf32>
    %57 = vector.multi_reduction <add>, %56, %cst_28 [1] : vector<8x8xf32> to vector<8xf32>
    %58 = vector.shape_cast %57 : vector<8xf32> to vector<8x1xf32>
    %cst_29 = arith.constant dense<0.000000e+00> : vector<8x8xf32>
    %59 = tpu.matmul %56, %43, %cst_29 {dimension_numbers = #tpu.dot_dimension_numbers<[1], [0], [0], [1], [0, 0, 1, 1], [], []>} : vector<8x8xf32>, vector<8x8xf32>, vector<8x8xf32> -> vector<8x8xf32>
    %60 = tpu.reciprocal %58 {approx = true} : vector<8x1xf32> -> vector<8x1xf32>
    %61 = vector.broadcast %60 : vector<8x1xf32> to vector<8x8xf32>
    %62 = arith.mulf %59, %61 : vector<8x8xf32>
    %c0_30 = arith.constant 0 : index
    %c8 = arith.constant 8 : index
    %63 = vector.load %arg21[%c0_30, %c8] : memref<8x32xf32, #tpu.memory_space<vmem>>, vector<8x8xf32>
    tpu.vector_store %arg21[%c0_30, %c8], %62 {strides = array<i32>} : memref<8x32xf32, #tpu.memory_space<vmem>>, vector<8x8xf32>,
    %64 = vector.extract_strided_slice %15 {offsets = [0, 16], sizes = [8, 8], strides = [1, 1]} : vector<8x32xf32> to vector<8x8xf32>
    %65 = vector.extract_strided_slice %16 {offsets = [0, 16], sizes = [8, 8], strides = [1, 1]} : vector<8x32xf32> to vector<8x8xf32>
    %66 = vector.extract_strided_slice %17 {offsets = [0, 16], sizes = [8, 8], strides = [1, 1]} : vector<8x32xf32> to vector<8x8xf32>
    %cst_31 = arith.constant dense<0.000000e+00> : vector<8x8xf32>
    %67 = tpu.matmul %64, %65, %cst_31 {dimension_numbers = #tpu.dot_dimension_numbers<[1], [1], [0], [0], [0, 0, 1, 0], [], []>} : vector<8x8xf32>, vector<8x8xf32>, vector<8x8xf32> -> vector<8x8xf32>
    %cst_32 = arith.constant 0.353553385 : f32
    %68 = vector.broadcast %cst_32 : f32 to vector<8x8xf32>
    %69 = arith.mulf %67, %68 : vector<8x8xf32>
    %70 = tpu.iota {dimensions = array<i32: 0>} : vector<8x8xi32>
    %71 = tpu.iota {dimensions = array<i32: 1>} : vector<8x8xi32>
    %72 = arith.cmpi sgt, %71, %70 : vector<8x8xi32>
    %cst_33 = arith.constant -1.000000e+30 : f32
    %73 = vector.broadcast %cst_33 : f32 to vector<8x8xf32>
    %74 = arith.select %72, %73, %69 : vector<8x8xi1>, vector<8x8xf32>
    %cst_34 = arith.constant dense<0xFF800000> : vector<8xf32>
    %75 = vector.multi_reduction <maximumf>, %74, %cst_34 [1] : vector<8x8xf32> to vector<8xf32>
    %76 = vector.shape_cast %75 : vector<8xf32> to vector<8x1xf32>
    %77 = vector.broadcast %76 : vector<8x1xf32> to vector<8x8xf32>
    %78 = arith.subf %74, %77 : vector<8x8xf32>
    %79 = math.exp %78 : vector<8x8xf32>
    %cst_35 = arith.constant dense<0.000000e+00> : vector<8xf32>
    %80 = vector.multi_reduction <add>, %79, %cst_35 [1] : vector<8x8xf32> to vector<8xf32>
    %81 = vector.shape_cast %80 : vector<8xf32> to vector<8x1xf32>
    %cst_36 = arith.constant dense<0.000000e+00> : vector<8x8xf32>
    %82 = tpu.matmul %79, %66, %cst_36 {dimension_numbers = #tpu.dot_dimension_numbers<[1], [0], [0], [1], [0, 0, 1, 1], [], []>} : vector<8x8xf32>, vector<8x8xf32>, vector<8x8xf32> -> vector<8x8xf32>
    %83 = tpu.reciprocal %81 {approx = true} : vector<8x1xf32> -> vector<8x1xf32>
    %84 = vector.broadcast %83 : vector<8x1xf32> to vector<8x8xf32>
    %85 = arith.mulf %82, %84 : vector<8x8xf32>
    %c0_37 = arith.constant 0 : index
    %c16 = arith.constant 16 : index
    %86 = vector.load %arg21[%c0_37, %c16] : memref<8x32xf32, #tpu.memory_space<vmem>>, vector<8x8xf32>
    tpu.vector_store %arg21[%c0_37, %c16], %85 {strides = array<i32>} : memref<8x32xf32, #tpu.memory_space<vmem>>, vector<8x8xf32>,
    %87 = vector.extract_strided_slice %15 {offsets = [0, 24], sizes = [8, 8], strides = [1, 1]} : vector<8x32xf32> to vector<8x8xf32>
    %88 = vector.extract_strided_slice %16 {offsets = [0, 24], sizes = [8, 8], strides = [1, 1]} : vector<8x32xf32> to vector<8x8xf32>
    %89 = vector.extract_strided_slice %17 {offsets = [0, 24], sizes = [8, 8], strides = [1, 1]} : vector<8x32xf32> to vector<8x8xf32>
    %cst_38 = arith.constant dense<0.000000e+00> : vector<8x8xf32>
    %90 = tpu.matmul %87, %88, %cst_38 {dimension_numbers = #tpu.dot_dimension_numbers<[1], [1], [0], [0], [0, 0, 1, 0], [], []>} : vector<8x8xf32>, vector<8x8xf32>, vector<8x8xf32> -> vector<8x8xf32>
    %cst_39 = arith.constant 0.353553385 : f32
    %91 = vector.broadcast %cst_39 : f32 to vector<8x8xf32>
    %92 = arith.mulf %90, %91 : vector<8x8xf32>
    %93 = tpu.iota {dimensions = array<i32: 0>} : vector<8x8xi32>
    %94 = tpu.iota {dimensions = array<i32: 1>} : vector<8x8xi32>
    %95 = arith.cmpi sgt, %94, %93 : vector<8x8xi32>
    %cst_40 = arith.constant -1.000000e+30 : f32
    %96 = vector.broadcast %cst_40 : f32 to vector<8x8xf32>
    %97 = arith.select %95, %96, %92 : vector<8x8xi1>, vector<8x8xf32>
    %cst_41 = arith.constant dense<0xFF800000> : vector<8xf32>
    %98 = vector.multi_reduction <maximumf>, %97, %cst_41 [1] : vector<8x8xf32> to vector<8xf32>
    %99 = vector.shape_cast %98 : vector<8xf32> to vector<8x1xf32>
    %100 = vector.broadcast %99 : vector<8x1xf32> to vector<8x8xf32>
    %101 = arith.subf %97, %100 : vector<8x8xf32>
    %102 = math.exp %101 : vector<8x8xf32>
    %cst_42 = arith.constant dense<0.000000e+00> : vector<8xf32>
    %103 = vector.multi_reduction <add>, %102, %cst_42 [1] : vector<8x8xf32> to vector<8xf32>
    %104 = vector.shape_cast %103 : vector<8xf32> to vector<8x1xf32>
    %cst_43 = arith.constant dense<0.000000e+00> : vector<8x8xf32>
    %105 = tpu.matmul %102, %89, %cst_43 {dimension_numbers = #tpu.dot_dimension_numbers<[1], [0], [0], [1], [0, 0, 1, 1], [], []>} : vector<8x8xf32>, vector<8x8xf32>, vector<8x8xf32> -> vector<8x8xf32>
    %106 = tpu.reciprocal %104 {approx = true} : vector<8x1xf32> -> vector<8x1xf32>
    %107 = vector.broadcast %106 : vector<8x1xf32> to vector<8x8xf32>
    %108 = arith.mulf %105, %107 : vector<8x8xf32>
    %c0_44 = arith.constant 0 : index
    %c24 = arith.constant 24 : index
    %109 = vector.load %arg21[%c0_44, %c24] : memref<8x32xf32, #tpu.memory_space<vmem>>, vector<8x8xf32>
    tpu.vector_store %arg21[%c0_44, %c24], %108 {strides = array<i32>} : memref<8x32xf32, #tpu.memory_space<vmem>>, vector<8x8xf32>,
    %c0_45 = arith.constant 0 : index
    %c0_46 = arith.constant 0 : index
    %110 = vector.load %arg21[%c0_45, %c0_46] : memref<8x32xf32, #tpu.memory_space<vmem>>, vector<8x32xf32>
    %c0_47 = arith.constant 0 : index
    %c0_48 = arith.constant 0 : index
    %111 = vector.load %arg6[%c0_47, %c0_48] : memref<32x32xf32, #tpu.memory_space<vmem>>, vector<32x32xf32>
    %cst_49 = arith.constant dense<0.000000e+00> : vector<8x32xf32>
    %112 = tpu.matmul %110, %111, %cst_49 {dimension_numbers = #tpu.dot_dimension_numbers<[1], [0], [0], [1], [0, 0, 1, 1], [], []>} : vector<8x32xf32>, vector<32x32xf32>, vector<8x32xf32> -> vector<8x32xf32>
    %c0_50 = arith.constant 0 : index
    %c0_51 = arith.constant 0 : index
    %113 = vector.load %arg7[%c0_50, %c0_51] : memref<1x32xf32, #tpu.memory_space<vmem>>, vector<1x32xf32>
    %114 = vector.broadcast %113 : vector<1x32xf32> to vector<8x32xf32>
    %115 = arith.addf %112, %114 : vector<8x32xf32>
    %116 = arith.addf %5, %115 : vector<8x32xf32>
    %cst_52 = arith.constant dense<0.000000e+00> : vector<8xf32>
    %117 = vector.multi_reduction <add>, %116, %cst_52 [1] : vector<8x32xf32> to vector<8xf32>
    %118 = vector.shape_cast %117 : vector<8xf32> to vector<8x1xf32>
    %cst_53 = arith.constant 3.200000e+01 : f32
    %119 = vector.broadcast %cst_53 : f32 to vector<8x1xf32>
    %120 = arith.divf %118, %119 : vector<8x1xf32>
    %121 = vector.broadcast %120 : vector<8x1xf32> to vector<8x32xf32>
    %122 = arith.subf %116, %121 : vector<8x32xf32>
    %123 = arith.mulf %122, %122 : vector<8x32xf32>
    %cst_54 = arith.constant dense<0.000000e+00> : vector<8xf32>
    %124 = vector.multi_reduction <add>, %123, %cst_54 [1] : vector<8x32xf32> to vector<8xf32>
    %125 = vector.shape_cast %124 : vector<8xf32> to vector<8x1xf32>
    %cst_55 = arith.constant 3.200000e+01 : f32
    %126 = vector.broadcast %cst_55 : f32 to vector<8x1xf32>
    %127 = arith.divf %125, %126 : vector<8x1xf32>
    %128 = vector.broadcast %120 : vector<8x1xf32> to vector<8x32xf32>
    %129 = arith.subf %116, %128 : vector<8x32xf32>
    %cst_56 = arith.constant 9.99999974E-6 : f32
    %130 = vector.broadcast %cst_56 : f32 to vector<8x1xf32>
    %131 = arith.addf %127, %130 : vector<8x1xf32>
    %132 = math.rsqrt %131 : vector<8x1xf32>
    %133 = vector.broadcast %132 : vector<8x1xf32> to vector<8x32xf32>
    %134 = arith.mulf %129, %133 : vector<8x32xf32>
    %135 = vector.extract_strided_slice %8 {offsets = [0, 0], sizes = [1, 32], strides = [1, 1]} : vector<3x32xf32> to vector<1x32xf32>
    %136 = vector.broadcast %135 : vector<1x32xf32> to vector<8x32xf32>
    %137 = arith.mulf %134, %136 : vector<8x32xf32>
    %138 = vector.extract_strided_slice %9 {offsets = [0, 0], sizes = [1, 32], strides = [1, 1]} : vector<3x32xf32> to vector<1x32xf32>
    %139 = vector.broadcast %138 : vector<1x32xf32> to vector<8x32xf32>
    %140 = arith.addf %137, %139 : vector<8x32xf32>
    %c0_57 = arith.constant 0 : index
    %c0_58 = arith.constant 0 : index
    %141 = vector.load %arg8[%c0_57, %c0_58] : memref<32x32xf32, #tpu.memory_space<vmem>>, vector<32x32xf32>
    %cst_59 = arith.constant dense<0.000000e+00> : vector<8x32xf32>
    %142 = tpu.matmul %140, %141, %cst_59 {dimension_numbers = #tpu.dot_dimension_numbers<[1], [0], [0], [1], [0, 0, 1, 1], [], []>} : vector<8x32xf32>, vector<32x32xf32>, vector<8x32xf32> -> vector<8x32xf32>
    %c0_60 = arith.constant 0 : index
    %c0_61 = arith.constant 0 : index
    %143 = vector.load %arg9[%c0_60, %c0_61] : memref<1x32xf32, #tpu.memory_space<vmem>>, vector<1x32xf32>
    %144 = vector.broadcast %143 : vector<1x32xf32> to vector<8x32xf32>
    %145 = arith.addf %142, %144 : vector<8x32xf32>
    %c0_62 = arith.constant 0 : index
    %c0_63 = arith.constant 0 : index
    %146 = vector.load %arg10[%c0_62, %c0_63] : memref<32x64xf32, #tpu.memory_space<vmem>>, vector<32x64xf32>
    %cst_64 = arith.constant dense<0.000000e+00> : vector<16x64xf32>
    %147 = tpu.matmul %7, %146, %cst_64 {dimension_numbers = #tpu.dot_dimension_numbers<[1], [0], [0], [1], [0, 0, 1, 1], [], []>} : vector<16x32xf32>, vector<32x64xf32>, vector<16x64xf32> -> vector<16x64xf32>
    %c0_65 = arith.constant 0 : index
    %c0_66 = arith.constant 0 : index
    %148 = vector.load %arg11[%c0_65, %c0_66] : memref<1x64xf32, #tpu.memory_space<vmem>>, vector<1x64xf32>
    %149 = vector.broadcast %148 : vector<1x64xf32> to vector<16x64xf32>
    %150 = arith.addf %147, %149 : vector<16x64xf32>
    %151 = vector.extract_strided_slice %150 {offsets = [0, 0], sizes = [16, 32], strides = [1, 1]} : vector<16x64xf32> to vector<16x32xf32>
    %152 = vector.extract_strided_slice %150 {offsets = [0, 32], sizes = [16, 32], strides = [1, 1]} : vector<16x64xf32> to vector<16x32xf32>
    %153 = vector.extract_strided_slice %145 {offsets = [0, 0], sizes = [8, 8], strides = [1, 1]} : vector<8x32xf32> to vector<8x8xf32>
    %154 = vector.extract_strided_slice %151 {offsets = [0, 0], sizes = [16, 8], strides = [1, 1]} : vector<16x32xf32> to vector<16x8xf32>
    %155 = vector.extract_strided_slice %152 {offsets = [0, 0], sizes = [16, 8], strides = [1, 1]} : vector<16x32xf32> to vector<16x8xf32>
    %cst_67 = arith.constant dense<0.000000e+00> : vector<8x16xf32>
    %156 = tpu.matmul %153, %154, %cst_67 {dimension_numbers = #tpu.dot_dimension_numbers<[1], [1], [0], [0], [0, 0, 1, 0], [], []>} : vector<8x8xf32>, vector<16x8xf32>, vector<8x16xf32> -> vector<8x16xf32>
    %cst_68 = arith.constant 0.353553385 : f32
    %157 = vector.broadcast %cst_68 : f32 to vector<8x16xf32>
    %158 = arith.mulf %156, %157 : vector<8x16xf32>
    %cst_69 = arith.constant dense<0xFF800000> : vector<8xf32>
    %159 = vector.multi_reduction <maximumf>, %158, %cst_69 [1] : vector<8x16xf32> to vector<8xf32>
    %160 = vector.shape_cast %159 : vector<8xf32> to vector<8x1xf32>
    %161 = vector.broadcast %160 : vector<8x1xf32> to vector<8x16xf32>
    %162 = arith.subf %158, %161 : vector<8x16xf32>
    %163 = math.exp %162 : vector<8x16xf32>
    %cst_70 = arith.constant dense<0.000000e+00> : vector<8xf32>
    %164 = vector.multi_reduction <add>, %163, %cst_70 [1] : vector<8x16xf32> to vector<8xf32>
    %165 = vector.shape_cast %164 : vector<8xf32> to vector<8x1xf32>
    %cst_71 = arith.constant dense<0.000000e+00> : vector<8x8xf32>
    %166 = tpu.matmul %163, %155, %cst_71 {dimension_numbers = #tpu.dot_dimension_numbers<[1], [0], [0], [1], [0, 0, 1, 1], [], []>} : vector<8x16xf32>, vector<16x8xf32>, vector<8x8xf32> -> vector<8x8xf32>
    %167 = tpu.reciprocal %165 {approx = true} : vector<8x1xf32> -> vector<8x1xf32>
    %168 = vector.broadcast %167 : vector<8x1xf32> to vector<8x8xf32>
    %169 = arith.mulf %166, %168 : vector<8x8xf32>
    %c0_72 = arith.constant 0 : index
    %c0_73 = arith.constant 0 : index
    %170 = vector.load %arg21[%c0_72, %c0_73] : memref<8x32xf32, #tpu.memory_space<vmem>>, vector<8x8xf32>
    tpu.vector_store %arg21[%c0_72, %c0_73], %169 {strides = array<i32>} : memref<8x32xf32, #tpu.memory_space<vmem>>, vector<8x8xf32>,
    %171 = vector.extract_strided_slice %145 {offsets = [0, 8], sizes = [8, 8], strides = [1, 1]} : vector<8x32xf32> to vector<8x8xf32>
    %172 = vector.extract_strided_slice %151 {offsets = [0, 8], sizes = [16, 8], strides = [1, 1]} : vector<16x32xf32> to vector<16x8xf32>
    %173 = vector.extract_strided_slice %152 {offsets = [0, 8], sizes = [16, 8], strides = [1, 1]} : vector<16x32xf32> to vector<16x8xf32>
    %cst_74 = arith.constant dense<0.000000e+00> : vector<8x16xf32>
    %174 = tpu.matmul %171, %172, %cst_74 {dimension_numbers = #tpu.dot_dimension_numbers<[1], [1], [0], [0], [0, 0, 1, 0], [], []>} : vector<8x8xf32>, vector<16x8xf32>, vector<8x16xf32> -> vector<8x16xf32>
    %cst_75 = arith.constant 0.353553385 : f32
    %175 = vector.broadcast %cst_75 : f32 to vector<8x16xf32>
    %176 = arith.mulf %174, %175 : vector<8x16xf32>
    %cst_76 = arith.constant dense<0xFF800000> : vector<8xf32>
    %177 = vector.multi_reduction <maximumf>, %176, %cst_76 [1] : vector<8x16xf32> to vector<8xf32>
    %178 = vector.shape_cast %177 : vector<8xf32> to vector<8x1xf32>
    %179 = vector.broadcast %178 : vector<8x1xf32> to vector<8x16xf32>
    %180 = arith.subf %176, %179 : vector<8x16xf32>
    %181 = math.exp %180 : vector<8x16xf32>
    %cst_77 = arith.constant dense<0.000000e+00> : vector<8xf32>
    %182 = vector.multi_reduction <add>, %181, %cst_77 [1] : vector<8x16xf32> to vector<8xf32>
    %183 = vector.shape_cast %182 : vector<8xf32> to vector<8x1xf32>
    %cst_78 = arith.constant dense<0.000000e+00> : vector<8x8xf32>
    %184 = tpu.matmul %181, %173, %cst_78 {dimension_numbers = #tpu.dot_dimension_numbers<[1], [0], [0], [1], [0, 0, 1, 1], [], []>} : vector<8x16xf32>, vector<16x8xf32>, vector<8x8xf32> -> vector<8x8xf32>
    %185 = tpu.reciprocal %183 {approx = true} : vector<8x1xf32> -> vector<8x1xf32>
    %186 = vector.broadcast %185 : vector<8x1xf32> to vector<8x8xf32>
    %187 = arith.mulf %184, %186 : vector<8x8xf32>
    %c0_79 = arith.constant 0 : index
    %c8_80 = arith.constant 8 : index
    %188 = vector.load %arg21[%c0_79, %c8_80] : memref<8x32xf32, #tpu.memory_space<vmem>>, vector<8x8xf32>
    tpu.vector_store %arg21[%c0_79, %c8_80], %187 {strides = array<i32>} : memref<8x32xf32, #tpu.memory_space<vmem>>, vector<8x8xf32>,
    %189 = vector.extract_strided_slice %145 {offsets = [0, 16], sizes = [8, 8], strides = [1, 1]} : vector<8x32xf32> to vector<8x8xf32>
    %190 = vector.extract_strided_slice %151 {offsets = [0, 16], sizes = [16, 8], strides = [1, 1]} : vector<16x32xf32> to vector<16x8xf32>
    %191 = vector.extract_strided_slice %152 {offsets = [0, 16], sizes = [16, 8], strides = [1, 1]} : vector<16x32xf32> to vector<16x8xf32>
    %cst_81 = arith.constant dense<0.000000e+00> : vector<8x16xf32>
    %192 = tpu.matmul %189, %190, %cst_81 {dimension_numbers = #tpu.dot_dimension_numbers<[1], [1], [0], [0], [0, 0, 1, 0], [], []>} : vector<8x8xf32>, vector<16x8xf32>, vector<8x16xf32> -> vector<8x16xf32>
    %cst_82 = arith.constant 0.353553385 : f32
    %193 = vector.broadcast %cst_82 : f32 to vector<8x16xf32>
    %194 = arith.mulf %192, %193 : vector<8x16xf32>
    %cst_83 = arith.constant dense<0xFF800000> : vector<8xf32>
    %195 = vector.multi_reduction <maximumf>, %194, %cst_83 [1] : vector<8x16xf32> to vector<8xf32>
    %196 = vector.shape_cast %195 : vector<8xf32> to vector<8x1xf32>
    %197 = vector.broadcast %196 : vector<8x1xf32> to vector<8x16xf32>
    %198 = arith.subf %194, %197 : vector<8x16xf32>
    %199 = math.exp %198 : vector<8x16xf32>
    %cst_84 = arith.constant dense<0.000000e+00> : vector<8xf32>
    %200 = vector.multi_reduction <add>, %199, %cst_84 [1] : vector<8x16xf32> to vector<8xf32>
    %201 = vector.shape_cast %200 : vector<8xf32> to vector<8x1xf32>
    %cst_85 = arith.constant dense<0.000000e+00> : vector<8x8xf32>
    %202 = tpu.matmul %199, %191, %cst_85 {dimension_numbers = #tpu.dot_dimension_numbers<[1], [0], [0], [1], [0, 0, 1, 1], [], []>} : vector<8x16xf32>, vector<16x8xf32>, vector<8x8xf32> -> vector<8x8xf32>
    %203 = tpu.reciprocal %201 {approx = true} : vector<8x1xf32> -> vector<8x1xf32>
    %204 = vector.broadcast %203 : vector<8x1xf32> to vector<8x8xf32>
    %205 = arith.mulf %202, %204 : vector<8x8xf32>
    %c0_86 = arith.constant 0 : index
    %c16_87 = arith.constant 16 : index
    %206 = vector.load %arg21[%c0_86, %c16_87] : memref<8x32xf32, #tpu.memory_space<vmem>>, vector<8x8xf32>
    tpu.vector_store %arg21[%c0_86, %c16_87], %205 {strides = array<i32>} : memref<8x32xf32, #tpu.memory_space<vmem>>, vector<8x8xf32>,
    %207 = vector.extract_strided_slice %145 {offsets = [0, 24], sizes = [8, 8], strides = [1, 1]} : vector<8x32xf32> to vector<8x8xf32>
    %208 = vector.extract_strided_slice %151 {offsets = [0, 24], sizes = [16, 8], strides = [1, 1]} : vector<16x32xf32> to vector<16x8xf32>
    %209 = vector.extract_strided_slice %152 {offsets = [0, 24], sizes = [16, 8], strides = [1, 1]} : vector<16x32xf32> to vector<16x8xf32>
    %cst_88 = arith.constant dense<0.000000e+00> : vector<8x16xf32>
    %210 = tpu.matmul %207, %208, %cst_88 {dimension_numbers = #tpu.dot_dimension_numbers<[1], [1], [0], [0], [0, 0, 1, 0], [], []>} : vector<8x8xf32>, vector<16x8xf32>, vector<8x16xf32> -> vector<8x16xf32>
    %cst_89 = arith.constant 0.353553385 : f32
    %211 = vector.broadcast %cst_89 : f32 to vector<8x16xf32>
    %212 = arith.mulf %210, %211 : vector<8x16xf32>
    %cst_90 = arith.constant dense<0xFF800000> : vector<8xf32>
    %213 = vector.multi_reduction <maximumf>, %212, %cst_90 [1] : vector<8x16xf32> to vector<8xf32>
    %214 = vector.shape_cast %213 : vector<8xf32> to vector<8x1xf32>
    %215 = vector.broadcast %214 : vector<8x1xf32> to vector<8x16xf32>
    %216 = arith.subf %212, %215 : vector<8x16xf32>
    %217 = math.exp %216 : vector<8x16xf32>
    %cst_91 = arith.constant dense<0.000000e+00> : vector<8xf32>
    %218 = vector.multi_reduction <add>, %217, %cst_91 [1] : vector<8x16xf32> to vector<8xf32>
    %219 = vector.shape_cast %218 : vector<8xf32> to vector<8x1xf32>
    %cst_92 = arith.constant dense<0.000000e+00> : vector<8x8xf32>
    %220 = tpu.matmul %217, %209, %cst_92 {dimension_numbers = #tpu.dot_dimension_numbers<[1], [0], [0], [1], [0, 0, 1, 1], [], []>} : vector<8x16xf32>, vector<16x8xf32>, vector<8x8xf32> -> vector<8x8xf32>
    %221 = tpu.reciprocal %219 {approx = true} : vector<8x1xf32> -> vector<8x1xf32>
    %222 = vector.broadcast %221 : vector<8x1xf32> to vector<8x8xf32>
    %223 = arith.mulf %220, %222 : vector<8x8xf32>
    %c0_93 = arith.constant 0 : index
    %c24_94 = arith.constant 24 : index
    %224 = vector.load %arg21[%c0_93, %c24_94] : memref<8x32xf32, #tpu.memory_space<vmem>>, vector<8x8xf32>
    tpu.vector_store %arg21[%c0_93, %c24_94], %223 {strides = array<i32>} : memref<8x32xf32, #tpu.memory_space<vmem>>, vector<8x8xf32>,
    %c0_95 = arith.constant 0 : index
    %c0_96 = arith.constant 0 : index
    %225 = vector.load %arg21[%c0_95, %c0_96] : memref<8x32xf32, #tpu.memory_space<vmem>>, vector<8x32xf32>
    %c0_97 = arith.constant 0 : index
    %c0_98 = arith.constant 0 : index
    %226 = vector.load %arg12[%c0_97, %c0_98] : memref<32x32xf32, #tpu.memory_space<vmem>>, vector<32x32xf32>
    %cst_99 = arith.constant dense<0.000000e+00> : vector<8x32xf32>
    %227 = tpu.matmul %225, %226, %cst_99 {dimension_numbers = #tpu.dot_dimension_numbers<[1], [0], [0], [1], [0, 0, 1, 1], [], []>} : vector<8x32xf32>, vector<32x32xf32>, vector<8x32xf32> -> vector<8x32xf32>
    %c0_100 = arith.constant 0 : index
    %c0_101 = arith.constant 0 : index
    %228 = vector.load %arg13[%c0_100, %c0_101] : memref<1x32xf32, #tpu.memory_space<vmem>>, vector<1x32xf32>
    %229 = vector.broadcast %228 : vector<1x32xf32> to vector<8x32xf32>
    %230 = arith.addf %227, %229 : vector<8x32xf32>
    %231 = arith.addf %140, %230 : vector<8x32xf32>
    %cst_102 = arith.constant dense<0.000000e+00> : vector<8xf32>
    %232 = vector.multi_reduction <add>, %231, %cst_102 [1] : vector<8x32xf32> to vector<8xf32>
    %233 = vector.shape_cast %232 : vector<8xf32> to vector<8x1xf32>
    %cst_103 = arith.constant 3.200000e+01 : f32
    %234 = vector.broadcast %cst_103 : f32 to vector<8x1xf32>
    %235 = arith.divf %233, %234 : vector<8x1xf32>
    %236 = vector.broadcast %235 : vector<8x1xf32> to vector<8x32xf32>
    %237 = arith.subf %231, %236 : vector<8x32xf32>
    %238 = arith.mulf %237, %237 : vector<8x32xf32>
    %cst_104 = arith.constant dense<0.000000e+00> : vector<8xf32>
    %239 = vector.multi_reduction <add>, %238, %cst_104 [1] : vector<8x32xf32> to vector<8xf32>
    %240 = vector.shape_cast %239 : vector<8xf32> to vector<8x1xf32>
    %cst_105 = arith.constant 3.200000e+01 : f32
    %241 = vector.broadcast %cst_105 : f32 to vector<8x1xf32>
    %242 = arith.divf %240, %241 : vector<8x1xf32>
    %243 = vector.broadcast %235 : vector<8x1xf32> to vector<8x32xf32>
    %244 = arith.subf %231, %243 : vector<8x32xf32>
    %cst_106 = arith.constant 9.99999974E-6 : f32
    %245 = vector.broadcast %cst_106 : f32 to vector<8x1xf32>
    %246 = arith.addf %242, %245 : vector<8x1xf32>
    %247 = math.rsqrt %246 : vector<8x1xf32>
    %248 = vector.broadcast %247 : vector<8x1xf32> to vector<8x32xf32>
    %249 = arith.mulf %244, %248 : vector<8x32xf32>
    %250 = vector.extract_strided_slice %8 {offsets = [1, 0], sizes = [1, 32], strides = [1, 1]} : vector<3x32xf32> to vector<1x32xf32>
    %251 = vector.broadcast %250 : vector<1x32xf32> to vector<8x32xf32>
    %252 = arith.mulf %249, %251 : vector<8x32xf32>
    %253 = vector.extract_strided_slice %9 {offsets = [1, 0], sizes = [1, 32], strides = [1, 1]} : vector<3x32xf32> to vector<1x32xf32>
    %254 = vector.broadcast %253 : vector<1x32xf32> to vector<8x32xf32>
    %255 = arith.addf %252, %254 : vector<8x32xf32>
    %c0_107 = arith.constant 0 : index
    %c0_108 = arith.constant 0 : index
    %256 = vector.load %arg16[%c0_107, %c0_108] : memref<32x64xf32, #tpu.memory_space<vmem>>, vector<32x64xf32>
    %cst_109 = arith.constant dense<0.000000e+00> : vector<8x64xf32>
    %257 = tpu.matmul %255, %256, %cst_109 {dimension_numbers = #tpu.dot_dimension_numbers<[1], [0], [0], [1], [0, 0, 1, 1], [], []>} : vector<8x32xf32>, vector<32x64xf32>, vector<8x64xf32> -> vector<8x64xf32>
    %c0_110 = arith.constant 0 : index
    %c0_111 = arith.constant 0 : index
    %258 = vector.load %arg17[%c0_110, %c0_111] : memref<1x64xf32, #tpu.memory_space<vmem>>, vector<1x64xf32>
    %259 = vector.broadcast %258 : vector<1x64xf32> to vector<8x64xf32>
    %260 = arith.addf %257, %259 : vector<8x64xf32>
    %cst_112 = arith.constant 0.000000e+00 : f32
    %261 = vector.broadcast %cst_112 : f32 to vector<8x64xf32>
    %262 = arith.maximumf %260, %261 : vector<8x64xf32>
    %c0_113 = arith.constant 0 : index
    %c0_114 = arith.constant 0 : index
    %263 = vector.load %arg18[%c0_113, %c0_114] : memref<64x32xf32, #tpu.memory_space<vmem>>, vector<64x32xf32>
    %cst_115 = arith.constant dense<0.000000e+00> : vector<8x32xf32>
    %264 = tpu.matmul %262, %263, %cst_115 {dimension_numbers = #tpu.dot_dimension_numbers<[1], [0], [0], [1], [0, 0, 1, 1], [], []>} : vector<8x64xf32>, vector<64x32xf32>, vector<8x32xf32> -> vector<8x32xf32>
    %c0_116 = arith.constant 0 : index
    %c0_117 = arith.constant 0 : index
    %265 = vector.load %arg19[%c0_116, %c0_117] : memref<1x32xf32, #tpu.memory_space<vmem>>, vector<1x32xf32>
    %266 = vector.broadcast %265 : vector<1x32xf32> to vector<8x32xf32>
    %267 = arith.addf %264, %266 : vector<8x32xf32>
    %268 = arith.addf %255, %267 : vector<8x32xf32>
    %cst_118 = arith.constant dense<0.000000e+00> : vector<8xf32>
    %269 = vector.multi_reduction <add>, %268, %cst_118 [1] : vector<8x32xf32> to vector<8xf32>
    %270 = vector.shape_cast %269 : vector<8xf32> to vector<8x1xf32>
    %cst_119 = arith.constant 3.200000e+01 : f32
    %271 = vector.broadcast %cst_119 : f32 to vector<8x1xf32>
    %272 = arith.divf %270, %271 : vector<8x1xf32>
    %273 = vector.broadcast %272 : vector<8x1xf32> to vector<8x32xf32>
    %274 = arith.subf %268, %273 : vector<8x32xf32>
    %275 = arith.mulf %274, %274 : vector<8x32xf32>
    %cst_120 = arith.constant dense<0.000000e+00> : vector<8xf32>
    %276 = vector.multi_reduction <add>, %275, %cst_120 [1] : vector<8x32xf32> to vector<8xf32>
    %277 = vector.shape_cast %276 : vector<8xf32> to vector<8x1xf32>
    %cst_121 = arith.constant 3.200000e+01 : f32
    %278 = vector.broadcast %cst_121 : f32 to vector<8x1xf32>
    %279 = arith.divf %277, %278 : vector<8x1xf32>
    %280 = vector.broadcast %272 : vector<8x1xf32> to vector<8x32xf32>
    %281 = arith.subf %268, %280 : vector<8x32xf32>
    %cst_122 = arith.constant 9.99999974E-6 : f32
    %282 = vector.broadcast %cst_122 : f32 to vector<8x1xf32>
    %283 = arith.addf %279, %282 : vector<8x1xf32>
    %284 = math.rsqrt %283 : vector<8x1xf32>
    %285 = vector.broadcast %284 : vector<8x1xf32> to vector<8x32xf32>
    %286 = arith.mulf %281, %285 : vector<8x32xf32>
    %287 = vector.extract_strided_slice %8 {offsets = [2, 0], sizes = [1, 32], strides = [1, 1]} : vector<3x32xf32> to vector<1x32xf32>
    %288 = vector.broadcast %287 : vector<1x32xf32> to vector<8x32xf32>
    %289 = arith.mulf %286, %288 : vector<8x32xf32>
    %290 = vector.extract_strided_slice %9 {offsets = [2, 0], sizes = [1, 32], strides = [1, 1]} : vector<3x32xf32> to vector<1x32xf32>
    %291 = vector.broadcast %290 : vector<1x32xf32> to vector<8x32xf32>
    %292 = arith.addf %289, %291 : vector<8x32xf32>
    %c0_123 = arith.constant 0 : index
    %c0_124 = arith.constant 0 : index
    %c0_125 = arith.constant 0 : index
    %293 = vector.load %arg20[%c0_123, %c0_124, %c0_125] : memref<1x8x32xf32, #tpu.memory_space<vmem>>, vector<1x8x32xf32>
    %294 = vector.shape_cast %293 : vector<1x8x32xf32> to vector<8x32xf32>
    %295 = vector.shape_cast %292 : vector<8x32xf32> to vector<1x8x32xf32>
    tpu.vector_store %arg20[%c0_123, %c0_124, %c0_125], %295 {strides = array<i32>} : memref<1x8x32xf32, #tpu.memory_space<vmem>>, vector<1x8x32xf32>,
    return
  }
  func.func @transform_0(%arg0: i32) -> (i32, i32, i32) {
    %c0_i32 = arith.constant 0 : i32
    %c0_i32_0 = arith.constant 0 : i32
    %c0_i32_1 = arith.constant 0 : i32
    return %arg0, %c0_i32, %c0_i32_0 : i32, i32, i32
  }
  func.func @transform_1(%arg0: i32) -> (i32, i32) {
    %c0_i32 = arith.constant 0 : i32
    %c0_i32_0 = arith.constant 0 : i32
    %c0_i32_1 = arith.constant 0 : i32
    return %c0_i32, %c0_i32_0 : i32, i32
  }
  func.func @transform_2(%arg0: i32) -> (i32, i32, i32) {
    %c0_i32 = arith.constant 0 : i32
    %c0_i32_0 = arith.constant 0 : i32
    %c0_i32_1 = arith.constant 0 : i32
    return %arg0, %c0_i32, %c0_i32_0 : i32, i32, i32
  }
  func.func @transform_3(%arg0: i32) -> (i32, i32) {
    %c0_i32 = arith.constant 0 : i32
    %c0_i32_0 = arith.constant 0 : i32
    %c0_i32_1 = arith.constant 0 : i32
    return %c0_i32, %c0_i32_0 : i32, i32
  }
  func.func @transform_4(%arg0: i32) -> (i32, i32) {
    %c0_i32 = arith.constant 0 : i32
    %c0_i32_0 = arith.constant 0 : i32
    %c0_i32_1 = arith.constant 0 : i32
    return %c0_i32, %c0_i32_0 : i32, i32
  }
  func.func @transform_5(%arg0: i32) -> (i32, i32) {
    %c0_i32 = arith.constant 0 : i32
    %c0_i32_0 = arith.constant 0 : i32
    %c0_i32_1 = arith.constant 0 : i32
    return %c0_i32, %c0_i32_0 : i32, i32
  }
  func.func @transform_6(%arg0: i32) -> (i32, i32) {
    %c0_i32 = arith.constant 0 : i32
    %c0_i32_0 = arith.constant 0 : i32
    %c0_i32_1 = arith.constant 0 : i32
    return %c0_i32, %c0_i32_0 : i32, i32
  }
  func.func @transform_7(%arg0: i32) -> (i32, i32) {
    %c0_i32 = arith.constant 0 : i32
    %c0_i32_0 = arith.constant 0 : i32
    %c0_i32_1 = arith.constant 0 : i32
    return %c0_i32, %c0_i32_0 : i32, i32
  }
  func.func @transform_8(%arg0: i32) -> (i32, i32) {
    %c0_i32 = arith.constant 0 : i32
    %c0_i32_0 = arith.constant 0 : i32
    %c0_i32_1 = arith.constant 0 : i32
    return %c0_i32, %c0_i32_0 : i32, i32
  }
  func.func @transform_9(%arg0: i32) -> (i32, i32) {
    %c0_i32 = arith.constant 0 : i32
    %c0_i32_0 = arith.constant 0 : i32
    %c0_i32_1 = arith.constant 0 : i32
    return %c0_i32, %c0_i32_0 : i32, i32
  }
  func.func @transform_10(%arg0: i32) -> (i32, i32) {
    %c0_i32 = arith.constant 0 : i32
    %c0_i32_0 = arith.constant 0 : i32
    %c0_i32_1 = arith.constant 0 : i32
    return %c0_i32, %c0_i32_0 : i32, i32
  }
  func.func @transform_11(%arg0: i32) -> (i32, i32) {
    %c0_i32 = arith.constant 0 : i32
    %c0_i32_0 = arith.constant 0 : i32
    %c0_i32_1 = arith.constant 0 : i32
    return %c0_i32, %c0_i32_0 : i32, i32
  }
  func.func @transform_12(%arg0: i32) -> (i32, i32) {
    %c0_i32 = arith.constant 0 : i32
    %c0_i32_0 = arith.constant 0 : i32
    %c0_i32_1 = arith.constant 0 : i32
    return %c0_i32, %c0_i32_0 : i32, i32
  }
  func.func @transform_13(%arg0: i32) -> (i32, i32) {
    %c0_i32 = arith.constant 0 : i32
    %c0_i32_0 = arith.constant 0 : i32
    %c0_i32_1 = arith.constant 0 : i32
    return %c0_i32, %c0_i32_0 : i32, i32
  }
  func.func @transform_14(%arg0: i32) -> (i32, i32) {
    %c0_i32 = arith.constant 0 : i32
    %c0_i32_0 = arith.constant 0 : i32
    %c0_i32_1 = arith.constant 0 : i32
    return %c0_i32, %c0_i32_0 : i32, i32
  }
  func.func @transform_15(%arg0: i32) -> (i32, i32) {
    %c0_i32 = arith.constant 0 : i32
    %c0_i32_0 = arith.constant 0 : i32
    %c0_i32_1 = arith.constant 0 : i32
    return %c0_i32, %c0_i32_0 : i32, i32
  }
  func.func @transform_16(%arg0: i32) -> (i32, i32) {
    %c0_i32 = arith.constant 0 : i32
    %c0_i32_0 = arith.constant 0 : i32
    %c0_i32_1 = arith.constant 0 : i32
    return %c0_i32, %c0_i32_0 : i32, i32
  }
  func.func @transform_17(%arg0: i32) -> (i32, i32) {
    %c0_i32 = arith.constant 0 : i32
    %c0_i32_0 = arith.constant 0 : i32
    %c0_i32_1 = arith.constant 0 : i32
    return %c0_i32, %c0_i32_0 : i32, i32
  }
  func.func @transform_18(%arg0: i32) -> (i32, i32) {
    %c0_i32 = arith.constant 0 : i32
    %c0_i32_0 = arith.constant 0 : i32
    %c0_i32_1 = arith.constant 0 : i32
    return %c0_i32, %c0_i32_0 : i32, i32
  }
  func.func @transform_19(%arg0: i32) -> (i32, i32, i32) {
    %c0_i32 = arith.constant 0 : i32
    %c0_i32_0 = arith.constant 0 : i32
    %c0_i32_1 = arith.constant 0 : i32
    return %arg0, %c0_i32, %c0_i32_0 : i32, i32, i32
  }
}

module attributes {stable_mosaic.version = 11 : i64} {
  func.func @_matmul_bias_kernel(%arg0: i32, %arg1: i32, %arg2: i32, %arg3: memref<16x32xbf16, #tpu.memory_space<vmem>>, %arg4: memref<32x128xbf16, #tpu.memory_space<vmem>>, %arg5: memref<1x128xf32, #tpu.memory_space<vmem>>, %arg6: memref<16x128xf32, #tpu.memory_space<vmem>>, %arg7: memref<16x128xf32, #tpu.memory_space<vmem>>) attributes {dimension_semantics = [#tpu.dimension_semantics<parallel>, #tpu.dimension_semantics<parallel>, #tpu.dimension_semantics<arbitrary>], iteration_bounds = array<i64: 1, 1, 1>, scalar_prefetch = 0 : i64, scratch_operands = 1 : i64, tpu.core_type = #tpu.core_type<tc>, window_params = [{transform_indices = @transform_0, window_bounds = array<i64: 16, 32>}, {transform_indices = @transform_1, window_bounds = array<i64: 32, 128>}, {transform_indices = @transform_2, window_bounds = array<i64: 1, 128>}, {transform_indices = @transform_3, window_bounds = array<i64: 16, 128>}]} {
    %c0_i32 = arith.constant 0 : i32
    %0 = arith.cmpi eq, %arg2, %c0_i32 : i32
    %1 = arith.extui %0 : i1 to i32
    %c0_i32_0 = arith.constant 0 : i32
    %2 = arith.cmpi ne, %1, %c0_i32_0 : i32
    scf.if %2 {
      %cst_10 = arith.constant 0.000000e+00 : f32
      %12 = vector.broadcast %cst_10 : f32 to vector<16x128xf32>
      %c0_11 = arith.constant 0 : index
      %c0_12 = arith.constant 0 : index
      %13 = vector.load %arg7[%c0_11, %c0_12] : memref<16x128xf32, #tpu.memory_space<vmem>>, vector<16x128xf32>
      tpu.vector_store %arg7[%c0_11, %c0_12], %12 {strides = array<i32>} : memref<16x128xf32, #tpu.memory_space<vmem>>, vector<16x128xf32>,
    } else {
    }
    %c0 = arith.constant 0 : index
    %c0_1 = arith.constant 0 : index
    %3 = vector.load %arg7[%c0, %c0_1] : memref<16x128xf32, #tpu.memory_space<vmem>>, vector<16x128xf32>
    %c0_2 = arith.constant 0 : index
    %c0_3 = arith.constant 0 : index
    %4 = vector.load %arg3[%c0_2, %c0_3] : memref<16x32xbf16, #tpu.memory_space<vmem>>, vector<16x32xbf16>
    %c0_4 = arith.constant 0 : index
    %c0_5 = arith.constant 0 : index
    %5 = vector.load %arg4[%c0_4, %c0_5] : memref<32x128xbf16, #tpu.memory_space<vmem>>, vector<32x128xbf16>
    %cst = arith.constant dense<0.000000e+00> : vector<16x128xf32>
    %6 = tpu.matmul %4, %5, %cst {dimension_numbers = #tpu.dot_dimension_numbers<[1], [0], [0], [1], [0, 0, 1, 1], [], []>} : vector<16x32xbf16>, vector<32x128xbf16>, vector<16x128xf32> -> vector<16x128xf32>
    %7 = arith.addf %3, %6 : vector<16x128xf32>
    %c0_6 = arith.constant 0 : index
    %c0_7 = arith.constant 0 : index
    %8 = vector.load %arg7[%c0_6, %c0_7] : memref<16x128xf32, #tpu.memory_space<vmem>>, vector<16x128xf32>
    tpu.vector_store %arg7[%c0_6, %c0_7], %7 {strides = array<i32>} : memref<16x128xf32, #tpu.memory_space<vmem>>, vector<16x128xf32>,
    %c0_i32_8 = arith.constant 0 : i32
    %9 = arith.cmpi eq, %arg2, %c0_i32_8 : i32
    %10 = arith.extui %9 : i1 to i32
    %c0_i32_9 = arith.constant 0 : i32
    %11 = arith.cmpi ne, %10, %c0_i32_9 : i32
    scf.if %11 {
      %c0_10 = arith.constant 0 : index
      %c0_11 = arith.constant 0 : index
      %12 = vector.load %arg7[%c0_10, %c0_11] : memref<16x128xf32, #tpu.memory_space<vmem>>, vector<16x128xf32>
      %c0_12 = arith.constant 0 : index
      %c0_13 = arith.constant 0 : index
      %13 = vector.load %arg5[%c0_12, %c0_13] : memref<1x128xf32, #tpu.memory_space<vmem>>, vector<1x128xf32>
      %14 = vector.broadcast %13 : vector<1x128xf32> to vector<16x128xf32>
      %15 = arith.addf %12, %14 : vector<16x128xf32>
      %c0_14 = arith.constant 0 : index
      %c0_15 = arith.constant 0 : index
      %16 = vector.load %arg6[%c0_14, %c0_15] : memref<16x128xf32, #tpu.memory_space<vmem>>, vector<16x128xf32>
      tpu.vector_store %arg6[%c0_14, %c0_15], %15 {strides = array<i32>} : memref<16x128xf32, #tpu.memory_space<vmem>>, vector<16x128xf32>,
    } else {
    }
    return
  }
  func.func @transform_0(%arg0: i32, %arg1: i32, %arg2: i32) -> (i32, i32) {
    %c0_i32 = arith.constant 0 : i32
    return %arg0, %arg2 : i32, i32
  }
  func.func @transform_1(%arg0: i32, %arg1: i32, %arg2: i32) -> (i32, i32) {
    %c0_i32 = arith.constant 0 : i32
    return %arg2, %arg1 : i32, i32
  }
  func.func @transform_2(%arg0: i32, %arg1: i32, %arg2: i32) -> (i32, i32) {
    %c0_i32 = arith.constant 0 : i32
    %c0_i32_0 = arith.constant 0 : i32
    return %c0_i32, %arg1 : i32, i32
  }
  func.func @transform_3(%arg0: i32, %arg1: i32, %arg2: i32) -> (i32, i32) {
    %c0_i32 = arith.constant 0 : i32
    return %arg0, %arg1 : i32, i32
  }
}

</mosaic_0001>

<llo_original>
// kernel: image_captioning_forward.4
$region0: #{image_captioning_forward.4}
  #allocation0 [shape = 'u32[]', space=smem, size = 0x4, offset = 0x4, fixed_abs, tag = 'smem constant byte address 0x4 - core index']
  #allocation1 [shape = 'u32[144,128]{1,0:T(1,128)}', space=vmem, size = 0x12000, scoped, tag = 'internal scratch']
  #allocation2 [shape = 'f32[128,16]{1,0:T(8,128)}', space=vmem, size = 0x10000, scoped, tag = 'scratch operand']
  %s0 = inlined_call_operand.vmem [shape: bf16[128,27], index: 0, kind: input, shape index: {}]
  %s1 = inlined_call_operand.vmem [shape: bf16[27,16], index: 1, kind: input, shape index: {}]
  %s2 = inlined_call_operand.vmem [shape: f32[1,16], index: 2, kind: input, shape index: {}]
  %s3 = inlined_call_operand.vmem [shape: f32[128,16], index: 3, kind: output, shape index: {}]
  %s4 = sld [smem:[#allocation0]]
  $region30: #{image_captioning_forward.4} parent=0
    _
  %s6 = ssub.s32 1, %s4
  %s7 = scalar_select 0, %s6, %s4
  // Predicated region
  $region2: #{image_captioning_forward.4} parent=0 // pred_check
    _
  $region3: #{image_captioning_forward.4} parent=0 // pred_check_branch
    %9 = sbr.rel (0) target = $region5
  $region4: #{image_captioning_forward.4} parent=0 // pred_region
    _
  $region5: #{image_captioning_forward.4} parent=0 // pred_fallthru
    _
  // Predicated region
  $region6: #{image_captioning_forward.4} parent=0 // pred_check
    _
  $region7: #{image_captioning_forward.4} parent=0 // pred_check_branch
    %11 = sbr.rel (0) target = $region9
  $region8: #{image_captioning_forward.4} parent=0 // pred_region
    _
  $region9: #{image_captioning_forward.4} parent=0 // pred_fallthru
    _
  // Predicated region
  $region10: #{image_captioning_forward.4} parent=0 // pred_check
    _
  $region11: #{image_captioning_forward.4} parent=0 // pred_check_branch
    %13 = sbr.rel (0) target = $region13
  $region12: #{image_captioning_forward.4} parent=0 // pred_region
    _
  $region13: #{image_captioning_forward.4} parent=0 // pred_fallthru
    _
  %p15 = scmp.eq.s32.totalorder 0, 0
  // Predicated region
  $region14: #{image_captioning_forward.4} parent=0 // pred_check
    %p16 = pneg %p15
  $region15: #{image_captioning_forward.4} parent=0 // pred_check_branch
    %18 = sbr.rel (%p16) target = $region17
  $region16: #{image_captioning_forward.4} parent=0 // pred_region
    %vm19 = vcmask 130048
    %20 = vst.msk [vmem:[#allocation2] sm:$0xff] %vm19, 0.0
    %21 = vst.msk [vmem:[#allocation2 + $0x8] sm:$0xff] %vm19, 0.0
    %22 = vst.msk [vmem:[#allocation2 + $0x10] sm:$0xff] %vm19, 0.0
    %23 = vst.msk [vmem:[#allocation2 + $0x18] sm:$0xff] %vm19, 0.0
    %24 = vst.msk [vmem:[#allocation2 + $0x20] sm:$0xff] %vm19, 0.0
    %25 = vst.msk [vmem:[#allocation2 + $0x28] sm:$0xff] %vm19, 0.0
    %26 = vst.msk [vmem:[#allocation2 + $0x30] sm:$0xff] %vm19, 0.0
    %27 = vst.msk [vmem:[#allocation2 + $0x38] sm:$0xff] %vm19, 0.0
    %28 = vst.msk [vmem:[#allocation2 + $0x40] sm:$0xff] %vm19, 0.0
    %29 = vst.msk [vmem:[#allocation2 + $0x48] sm:$0xff] %vm19, 0.0
    %30 = vst.msk [vmem:[#allocation2 + $0x50] sm:$0xff] %vm19, 0.0
    %31 = vst.msk [vmem:[#allocation2 + $0x58] sm:$0xff] %vm19, 0.0
    %32 = vst.msk [vmem:[#allocation2 + $0x60] sm:$0xff] %vm19, 0.0
    %33 = vst.msk [vmem:[#allocation2 + $0x68] sm:$0xff] %vm19, 0.0
    %34 = vst.msk [vmem:[#allocation2 + $0x70] sm:$0xff] %vm19, 0.0
    %35 = vst.msk [vmem:[#allocation2 + $0x78] sm:$0xff] %vm19, 0.0
  $region17: #{image_captioning_forward.4} parent=0 // pred_fallthru
    _
  %v36 = vld [vmem:[#allocation2] sm:$0xff]
  %v37 = vld [vmem:[#allocation2 + $0x8] sm:$0xff]
  %v38 = vld [vmem:[#allocation2 + $0x10] sm:$0xff]
  %v39 = vld [vmem:[#allocation2 + $0x18] sm:$0xff]
  %v40 = vld [vmem:[#allocation2 + $0x20] sm:$0xff]
  %v41 = vld [vmem:[#allocation2 + $0x28] sm:$0xff]
  %v42 = vld [vmem:[#allocation2 + $0x30] sm:$0xff]
  %v43 = vld [vmem:[#allocation2 + $0x38] sm:$0xff]
  %v44 = vld [vmem:[#allocation2 + $0x40] sm:$0xff]
  %v45 = vld [vmem:[#allocation2 + $0x48] sm:$0xff]
  %v46 = vld [vmem:[#allocation2 + $0x50] sm:$0xff]
  %v47 = vld [vmem:[#allocation2 + $0x58] sm:$0xff]
  %v48 = vld [vmem:[#allocation2 + $0x60] sm:$0xff]
  %v49 = vld [vmem:[#allocation2 + $0x68] sm:$0xff]
  %v50 = vld [vmem:[#allocation2 + $0x70] sm:$0xff]
  %v51 = vld [vmem:[#allocation2 + $0x78] sm:$0xff]
  %v52 = vld [vmem:[%s0] sm:$0xf]
  %v53 = vld [vmem:[%s0 + $0x4] sm:$0xf]
  %v54 = vld [vmem:[%s0 + $0x8] sm:$0xf]
  %v55 = vld [vmem:[%s0 + $0xc] sm:$0xf]
  %v56 = vld [vmem:[%s0 + $0x10] sm:$0xf]
  %v57 = vld [vmem:[%s0 + $0x14] sm:$0xf]
  %v58 = vld [vmem:[%s0 + $0x18] sm:$0xf]
  %v59 = vld [vmem:[%s0 + $0x1c] sm:$0xf]
  %v60 = vld [vmem:[%s0 + $0x20] sm:$0xf]
  %v61 = vld [vmem:[%s0 + $0x24] sm:$0xf]
  %v62 = vld [vmem:[%s0 + $0x28] sm:$0xf]
  %v63 = vld [vmem:[%s0 + $0x2c] sm:$0xf]
  %v64 = vld [vmem:[%s0 + $0x30] sm:$0xf]
  %v65 = vld [vmem:[%s0 + $0x34] sm:$0xf]
  %v66 = vld [vmem:[%s0 + $0x38] sm:$0xf]
  %v67 = vld [vmem:[%s0 + $0x3c] sm:$0xf]
  %v68 = vld [vmem:[%s1] sm:$0xf]
  %v69 = vld [vmem:[%s1 + $0x4] sm:$0xf]
  %v70 = vld [vmem:[%s1 + $0x8] sm:$0xf]
  %v71 = vld [vmem:[%s1 + $0xc] sm:$0x3]
  %v88 = vunpack.c.l.b16 %v52
  %v89 = vunpack.c.l.b16 %v53
  %v90 = vunpack.c.l.b16 %v54
  %v91 = vunpack.c.l.b16 %v55
  %v92 = vunpack.c.l.b16 %v56
  %v93 = vunpack.c.l.b16 %v57
  %v94 = vunpack.c.l.b16 %v58
  %v95 = vunpack.c.l.b16 %v59
  %v96 = vunpack.c.l.b16 %v60
  %v97 = vunpack.c.l.b16 %v61
  %v98 = vunpack.c.l.b16 %v62
  %v99 = vunpack.c.l.b16 %v63
  %v100 = vunpack.c.l.b16 %v64
  %v101 = vunpack.c.l.b16 %v65
  %v102 = vunpack.c.l.b16 %v66
  %v103 = vunpack.c.l.b16 %v67
  %v104 = vpack.c.b16 %v89, %v88
  %v105 = vpack.c.b16 %v91, %v90
  %v106 = vpack.c.b16 %v93, %v92
  %v107 = vpack.c.b16 %v95, %v94
  %v108 = vpack.c.b16 %v97, %v96
  %v109 = vpack.c.b16 %v99, %v98
  %v110 = vpack.c.b16 %v101, %v100
  %v111 = vpack.c.b16 %v103, %v102
  %v116 = vunpack.c.l.b16 %v68
  %v117 = vunpack.c.l.b16 %v69
  %v118 = vunpack.c.l.b16 %v70
  %v119 = vunpack.c.l.b16 %v71
  %v120 = vpack.c.b16 %v117, %v116
  %v121 = vpack.c.b16 %v119, %v118
  %vm123 = vcmask 220160
  %v125 = vsel %vm123, %v104, 0
  %v128 = vsel %vm123, %v105, 0
  %v131 = vsel %vm123, %v106, 0
  %v134 = vsel %vm123, %v107, 0
  %v137 = vsel %vm123, %v108, 0
  %v140 = vsel %vm123, %v109, 0
  %v143 = vsel %vm123, %v110, 0
  %v146 = vsel %vm123, %v111, 0
  %vm148 = vcmask 1044480
  %vm149 = vcmask 1045504
  %v150 = vsel %vm148, 4294967295, 65535
  %v151 = vsel %vm149, %v150, 0
  %v153 = vand.u32 %v121, %v151
  %155 = vmatprep.subr.bf16.mxu0 0
  %156 = vmatpush1.bf16.msra.mxu0 %v120
  %157 = vmatprep.subr.bf16.mxu0 0
  %158 = vmatpush1.bf16.msra.mxu0 %v153
  %159 = vmatprep.subr.bf16.mxu0 0
  %160 = vmatpush1.bf16.msra.mxu0 0
  %161 = vmatprep.subr.bf16.mxu0 0
  %162 = vmatpush1.bf16.msra.mxu0 0
  %163 = vmatprep.subr.bf16.mxu0 0
  %164 = vmatpush1.bf16.msra.mxu0 0
  %165 = vmatprep.subr.bf16.mxu0 0
  %166 = vmatpush1.bf16.msra.mxu0 0
  %167 = vmatprep.subr.bf16.mxu0 0
  %168 = vmatpush1.bf16.msra.mxu0 0
  %169 = vmatprep.subr.bf16.mxu0 0
  %170 = vmatpush1.bf16.msra.mxu0 0
  %171 = vmatprep.subr.bf16.mxu0 0
  %172 = vmatpush1.bf16.msra.mxu0 0
  %173 = vmatprep.subr.bf16.mxu0 0
  %174 = vmatpush1.bf16.msra.mxu0 0
  %175 = vmatprep.subr.bf16.mxu0 0
  %176 = vmatpush1.bf16.msra.mxu0 0
  %177 = vmatprep.subr.bf16.mxu0 0
  %178 = vmatpush1.bf16.msra.mxu0 0
  %179 = vmatprep.subr.bf16.mxu0 0
  %180 = vmatpush1.bf16.msra.mxu0 0
  %181 = vmatprep.subr.bf16.mxu0 0
  %182 = vmatpush1.bf16.msra.mxu0 0
  %183 = vmatprep.subr.bf16.mxu0 0
  %184 = vmatpush1.bf16.msra.mxu0 0
  %185 = vmatprep.subr.bf16.mxu0 0
  %186 = vmatpush1.bf16.msra.mxu0 0
  %187 = vmatprep.mubr.bf16.mxu0 0
  %188 = vmatmul.mubr.bf16.gmra.mrb[0].mxu0 %v125
  %v189 = vpop.f32.mrb[0].mxu0
  %v190 = vadd.f32 0.0, %v189
  %v191 = vpop.f32.mrb[0].mxu0
  %v192 = vpop.f32.mrb[0].mxu0
  %v193 = vadd.f32 0.0, %v192
  %v194 = vpop.f32.mrb[0].mxu0
  %195 = vmatprep.mubr.bf16.mxu0 0
  %196 = vmatmul.mubr.bf16.gmra.mrb[0].mxu0 %v128
  %v197 = vpop.f32.mrb[0].mxu0
  %v198 = vadd.f32 0.0, %v197
  %v199 = vpop.f32.mrb[0].mxu0
  %v200 = vpop.f32.mrb[0].mxu0
  %v201 = vadd.f32 0.0, %v200
  %v202 = vpop.f32.mrb[0].mxu0
  %203 = vmatprep.mubr.bf16.mxu0 0
  %204 = vmatmul.mubr.bf16.gmra.mrb[0].mxu0 %v131
  %v205 = vpop.f32.mrb[0].mxu0
  %v206 = vadd.f32 0.0, %v205
  %v207 = vpop.f32.mrb[0].mxu0
  %v208 = vpop.f32.mrb[0].mxu0
  %v209 = vadd.f32 0.0, %v208
  %v210 = vpop.f32.mrb[0].mxu0
  %211 = vmatprep.mubr.bf16.mxu0 0
  %212 = vmatmul.mubr.bf16.gmra.mrb[0].mxu0 %v134
  %v213 = vpop.f32.mrb[0].mxu0
  %v214 = vadd.f32 0.0, %v213
  %v215 = vpop.f32.mrb[0].mxu0
  %v216 = vpop.f32.mrb[0].mxu0
  %v217 = vadd.f32 0.0, %v216
  %v218 = vpop.f32.mrb[0].mxu0
  %219 = vmatprep.mubr.bf16.mxu0 0
  %220 = vmatmul.mubr.bf16.gmra.mrb[0].mxu0 %v137
  %v221 = vpop.f32.mrb[0].mxu0
  %v222 = vadd.f32 0.0, %v221
  %v223 = vpop.f32.mrb[0].mxu0
  %v224 = vpop.f32.mrb[0].mxu0
  %v225 = vadd.f32 0.0, %v224
  %v226 = vpop.f32.mrb[0].mxu0
  %227 = vmatprep.mubr.bf16.mxu0 0
  %228 = vmatmul.mubr.bf16.gmra.mrb[0].mxu0 %v140
  %v229 = vpop.f32.mrb[0].mxu0
  %v230 = vadd.f32 0.0, %v229
  %v231 = vpop.f32.mrb[0].mxu0
  %v232 = vpop.f32.mrb[0].mxu0
  %v233 = vadd.f32 0.0, %v232
  %v234 = vpop.f32.mrb[0].mxu0
  %235 = vmatprep.mubr.bf16.mxu0 0
  %236 = vmatmul.mubr.bf16.gmra.mrb[0].mxu0 %v143
  %v237 = vpop.f32.mrb[0].mxu0
  %v238 = vadd.f32 0.0, %v237
  %v239 = vpop.f32.mrb[0].mxu0
  %v240 = vpop.f32.mrb[0].mxu0
  %v241 = vadd.f32 0.0, %v240
  %v242 = vpop.f32.mrb[0].mxu0
  %243 = vmatprep.mubr.bf16.mxu0 0
  %244 = vmatmul.mubr.bf16.gmra.mrb[0].mxu0 %v146
  %v245 = vpop.f32.mrb[0].mxu0
  %v246 = vadd.f32 0.0, %v245
  %v247 = vpop.f32.mrb[0].mxu0
  %v248 = vpop.f32.mrb[0].mxu0
  %v249 = vadd.f32 0.0, %v248
  %v250 = vpop.f32.mrb[0].mxu0
  %251 = vdwg.mxu0
  %v252 = vadd.f32 %v36, %v190
  %v253 = vadd.f32 %v37, %v193
  %v254 = vadd.f32 %v38, %v198
  %v255 = vadd.f32 %v39, %v201
  %v256 = vadd.f32 %v40, %v206
  %v257 = vadd.f32 %v41, %v209
  %v258 = vadd.f32 %v42, %v214
  %v259 = vadd.f32 %v43, %v217
  %v260 = vadd.f32 %v44, %v222
  %v261 = vadd.f32 %v45, %v225
  %v262 = vadd.f32 %v46, %v230
  %v263 = vadd.f32 %v47, %v233
  %v264 = vadd.f32 %v48, %v238
  %v265 = vadd.f32 %v49, %v241
  %v266 = vadd.f32 %v50, %v246
  %v267 = vadd.f32 %v51, %v249
  %vm268 = vcmask 130048
  %269 = vst.msk [vmem:[#allocation2] sm:$0xff] %vm268, %v252
  %270 = vst.msk [vmem:[#allocation2 + $0x8] sm:$0xff] %vm268, %v253
  %271 = vst.msk [vmem:[#allocation2 + $0x10] sm:$0xff] %vm268, %v254
  %272 = vst.msk [vmem:[#allocation2 + $0x18] sm:$0xff] %vm268, %v255
  %273 = vst.msk [vmem:[#allocation2 + $0x20] sm:$0xff] %vm268, %v256
  %274 = vst.msk [vmem:[#allocation2 + $0x28] sm:$0xff] %vm268, %v257
  %275 = vst.msk [vmem:[#allocation2 + $0x30] sm:$0xff] %vm268, %v258
  %276 = vst.msk [vmem:[#allocation2 + $0x38] sm:$0xff] %vm268, %v259
  %277 = vst.msk [vmem:[#allocation2 + $0x40] sm:$0xff] %vm268, %v260
  %278 = vst.msk [vmem:[#allocation2 + $0x48] sm:$0xff] %vm268, %v261
  %279 = vst.msk [vmem:[#allocation2 + $0x50] sm:$0xff] %vm268, %v262
  %280 = vst.msk [vmem:[#allocation2 + $0x58] sm:$0xff] %vm268, %v263
  %281 = vst.msk [vmem:[#allocation2 + $0x60] sm:$0xff] %vm268, %v264
  %282 = vst.msk [vmem:[#allocation2 + $0x68] sm:$0xff] %vm268, %v265
  %283 = vst.msk [vmem:[#allocation2 + $0x70] sm:$0xff] %vm268, %v266
  %284 = vst.msk [vmem:[#allocation2 + $0x78] sm:$0xff] %vm268, %v267
  // Predicated region
  $region18: #{image_captioning_forward.4} parent=0 // pred_check
    %p285 = pneg %p15
  $region19: #{image_captioning_forward.4} parent=0 // pred_check_branch
    %287 = sbr.rel (%p285) target = $region21
  $region20: #{image_captioning_forward.4} parent=0 // pred_region
    %v288 = vld [vmem:[#allocation2] sm:$0xff]
    %v289 = vld [vmem:[#allocation2 + $0x8] sm:$0xff]
    %v290 = vld [vmem:[#allocation2 + $0x10] sm:$0xff]
    %v291 = vld [vmem:[#allocation2 + $0x18] sm:$0xff]
    %v292 = vld [vmem:[#allocation2 + $0x20] sm:$0xff]
    %v293 = vld [vmem:[#allocation2 + $0x28] sm:$0xff]
    %v294 = vld [vmem:[#allocation2 + $0x30] sm:$0xff]
    %v295 = vld [vmem:[#allocation2 + $0x38] sm:$0xff]
    %v296 = vld [vmem:[#allocation2 + $0x40] sm:$0xff]
    %v297 = vld [vmem:[#allocation2 + $0x48] sm:$0xff]
    %v298 = vld [vmem:[#allocation2 + $0x50] sm:$0xff]
    %v299 = vld [vmem:[#allocation2 + $0x58] sm:$0xff]
    %v300 = vld [vmem:[#allocation2 + $0x60] sm:$0xff]
    %v301 = vld [vmem:[#allocation2 + $0x68] sm:$0xff]
    %v302 = vld [vmem:[#allocation2 + $0x70] sm:$0xff]
    %v303 = vld [vmem:[#allocation2 + $0x78] sm:$0xff]
    %v304 = vld [vmem:[%s2] sm:$0x1]
    %v306 = vlaneseq
    %v307 = vshrl.u32 %v306, 7
    %v308 = vsub.s32 0, %v307
    %v309 = vrot.slane %v304, %v308
    %v311 = vadd.f32 %v288, %v309
    %v312 = vadd.f32 %v289, %v309
    %v313 = vadd.f32 %v290, %v309
    %v314 = vadd.f32 %v291, %v309
    %v315 = vadd.f32 %v292, %v309
    %v316 = vadd.f32 %v293, %v309
    %v317 = vadd.f32 %v294, %v309
    %v318 = vadd.f32 %v295, %v309
    %v319 = vadd.f32 %v296, %v309
    %v320 = vadd.f32 %v297, %v309
    %v321 = vadd.f32 %v298, %v309
    %v322 = vadd.f32 %v299, %v309
    %v323 = vadd.f32 %v300, %v309
    %v324 = vadd.f32 %v301, %v309
    %v325 = vadd.f32 %v302, %v309
    %v326 = vadd.f32 %v303, %v309
    %v327 = vmax.f32 %v311, 0.0
    %v328 = vmax.f32 %v312, 0.0
    %v329 = vmax.f32 %v313, 0.0
    %v330 = vmax.f32 %v314, 0.0
    %v331 = vmax.f32 %v315, 0.0
    %v332 = vmax.f32 %v316, 0.0
    %v333 = vmax.f32 %v317, 0.0
    %v334 = vmax.f32 %v318, 0.0
    %v335 = vmax.f32 %v319, 0.0
    %v336 = vmax.f32 %v320, 0.0
    %v337 = vmax.f32 %v321, 0.0
    %v338 = vmax.f32 %v322, 0.0
    %v339 = vmax.f32 %v323, 0.0
    %v340 = vmax.f32 %v324, 0.0
    %v341 = vmax.f32 %v325, 0.0
    %v342 = vmax.f32 %v326, 0.0
    %343 = vst.msk [vmem:[%s3] sm:$0xff] %vm268, %v327
    %344 = vst.msk [vmem:[%s3 + $0x8] sm:$0xff] %vm268, %v328
    %345 = vst.msk [vmem:[%s3 + $0x10] sm:$0xff] %vm268, %v329
    %346 = vst.msk [vmem:[%s3 + $0x18] sm:$0xff] %vm268, %v330
    %347 = vst.msk [vmem:[%s3 + $0x20] sm:$0xff] %vm268, %v331
    %348 = vst.msk [vmem:[%s3 + $0x28] sm:$0xff] %vm268, %v332
    %349 = vst.msk [vmem:[%s3 + $0x30] sm:$0xff] %vm268, %v333
    %350 = vst.msk [vmem:[%s3 + $0x38] sm:$0xff] %vm268, %v334
    %351 = vst.msk [vmem:[%s3 + $0x40] sm:$0xff] %vm268, %v335
    %352 = vst.msk [vmem:[%s3 + $0x48] sm:$0xff] %vm268, %v336
    %353 = vst.msk [vmem:[%s3 + $0x50] sm:$0xff] %vm268, %v337
    %354 = vst.msk [vmem:[%s3 + $0x58] sm:$0xff] %vm268, %v338
    %355 = vst.msk [vmem:[%s3 + $0x60] sm:$0xff] %vm268, %v339
    %356 = vst.msk [vmem:[%s3 + $0x68] sm:$0xff] %vm268, %v340
    %357 = vst.msk [vmem:[%s3 + $0x70] sm:$0xff] %vm268, %v341
    %358 = vst.msk [vmem:[%s3 + $0x78] sm:$0xff] %vm268, %v342
  $region21: #{image_captioning_forward.4} parent=0 // pred_fallthru
    _
  // Predicated region
  $region22: #{image_captioning_forward.4} parent=0 // pred_check
    _
  $region23: #{image_captioning_forward.4} parent=0 // pred_check_branch
    %360 = sbr.rel (0) target = $region25
  $region24: #{image_captioning_forward.4} parent=0 // pred_region
    _
  $region25: #{image_captioning_forward.4} parent=0 // pred_fallthru
    _
  // Predicated region
  $region26: #{image_captioning_forward.4} parent=0 // pred_check
    _
  $region27: #{image_captioning_forward.4} parent=0 // pred_check_branch
    %362 = sbr.rel (0) target = $region29
  $region28: #{image_captioning_forward.4} parent=0 // pred_region
    _
  $region29: #{image_captioning_forward.4} parent=0 // pred_fallthru
    _

// kernel: image_captioning_forward.5
$region0: #{image_captioning_forward.5}
  #allocation0 [shape = 'u32[]', space=smem, size = 0x4, offset = 0x4, fixed_abs, tag = 'smem constant byte address 0x4 - core index']
  #allocation1 [shape = 'u32[144,128]{1,0:T(1,128)}', space=vmem, size = 0x12000, scoped, tag = 'internal scratch']
  #allocation2 [shape = 'f32[32,32]{1,0:T(8,128)}', space=vmem, size = 0x4000, scoped, tag = 'scratch operand']
  %s0 = inlined_call_operand.vmem [shape: bf16[32,144], index: 0, kind: input, shape index: {}]
  %s1 = inlined_call_operand.vmem [shape: bf16[144,32], index: 1, kind: input, shape index: {}]
  %s2 = inlined_call_operand.vmem [shape: f32[1,32], index: 2, kind: input, shape index: {}]
  %s3 = inlined_call_operand.vmem [shape: f32[32,32], index: 3, kind: output, shape index: {}]
  %s4 = sld [smem:[#allocation0]]
  $region30: #{image_captioning_forward.5} parent=0
    _
  %s6 = ssub.s32 1, %s4
  %s7 = scalar_select 0, %s6, %s4
  // Predicated region
  $region2: #{image_captioning_forward.5} parent=0 // pred_check
    _
  $region3: #{image_captioning_forward.5} parent=0 // pred_check_branch
    %9 = sbr.rel (0) target = $region5
  $region4: #{image_captioning_forward.5} parent=0 // pred_region
    _
  $region5: #{image_captioning_forward.5} parent=0 // pred_fallthru
    _
  // Predicated region
  $region6: #{image_captioning_forward.5} parent=0 // pred_check
    _
  $region7: #{image_captioning_forward.5} parent=0 // pred_check_branch
    %11 = sbr.rel (0) target = $region9
  $region8: #{image_captioning_forward.5} parent=0 // pred_region
    _
  $region9: #{image_captioning_forward.5} parent=0 // pred_fallthru
    _
  // Predicated region
  $region10: #{image_captioning_forward.5} parent=0 // pred_check
    _
  $region11: #{image_captioning_forward.5} parent=0 // pred_check_branch
    %13 = sbr.rel (0) target = $region13
  $region12: #{image_captioning_forward.5} parent=0 // pred_region
    _
  $region13: #{image_captioning_forward.5} parent=0 // pred_fallthru
    _
  %p15 = scmp.eq.s32.totalorder 0, 0
  // Predicated region
  $region14: #{image_captioning_forward.5} parent=0 // pred_check
    %p16 = pneg %p15
  $region15: #{image_captioning_forward.5} parent=0 // pred_check_branch
    %18 = sbr.rel (%p16) target = $region17
  $region16: #{image_captioning_forward.5} parent=0 // pred_region
    %vm19 = vcmask 261120
    %20 = vst.msk [vmem:[#allocation2] sm:$0xff] %vm19, 0.0
    %21 = vst.msk [vmem:[#allocation2 + $0x8] sm:$0xff] %vm19, 0.0
    %22 = vst.msk [vmem:[#allocation2 + $0x10] sm:$0xff] %vm19, 0.0
    %23 = vst.msk [vmem:[#allocation2 + $0x18] sm:$0xff] %vm19, 0.0
  $region17: #{image_captioning_forward.5} parent=0 // pred_fallthru
    _
  %v24 = vld [vmem:[#allocation2] sm:$0xff]
  %v25 = vld [vmem:[#allocation2 + $0x8] sm:$0xff]
  %v26 = vld [vmem:[#allocation2 + $0x10] sm:$0xff]
  %v27 = vld [vmem:[#allocation2 + $0x18] sm:$0xff]
  %v28 = vld [vmem:[%s0] sm:$0xff]
  %v29 = vld [vmem:[%s0 + $0x8] sm:$0xff]
  %v30 = vld [vmem:[%s0 + $0x10] sm:$0xff]
  %v31 = vld [vmem:[%s0 + $0x18] sm:$0xff]
  %v32 = vld [vmem:[%s1] sm:$0xf]
  %v33 = vld [vmem:[%s1 + $0x4] sm:$0xf]
  %v34 = vld [vmem:[%s1 + $0x8] sm:$0xf]
  %v35 = vld [vmem:[%s1 + $0xc] sm:$0xf]
  %v36 = vld [vmem:[%s1 + $0x10] sm:$0xf]
  %v37 = vld [vmem:[%s1 + $0x14] sm:$0xf]
  %v38 = vld [vmem:[%s1 + $0x18] sm:$0xf]
  %v39 = vld [vmem:[%s1 + $0x1c] sm:$0xf]
  %v40 = vld [vmem:[%s1 + $0x20] sm:$0xf]
  %v41 = vld [vmem:[%s1 + $0x24] sm:$0xf]
  %v42 = vld [vmem:[%s1 + $0x28] sm:$0xf]
  %v43 = vld [vmem:[%s1 + $0x2c] sm:$0xf]
  %v44 = vld [vmem:[%s1 + $0x30] sm:$0xf]
  %v45 = vld [vmem:[%s1 + $0x34] sm:$0xf]
  %v46 = vld [vmem:[%s1 + $0x38] sm:$0xf]
  %v47 = vld [vmem:[%s1 + $0x3c] sm:$0xf]
  %v48 = vld [vmem:[%s1 + $0x40] sm:$0xf]
  %v49 = vld [vmem:[%s1 + $0x44] sm:$0xf]
  %v54 = vunpack.c.l.b16 %v28
  %v55 = vunpack.c.h.b16 %v28
  %v56 = vunpack.c.l.b16 %v29
  %v57 = vunpack.c.h.b16 %v29
  %v58 = vunpack.c.l.b16 %v30
  %v59 = vunpack.c.h.b16 %v30
  %v60 = vunpack.c.l.b16 %v31
  %v61 = vunpack.c.h.b16 %v31
  %v62 = vpack.c.b16 %v56, %v54
  %v63 = vpack.c.b16 %v57, %v55
  %v64 = vpack.c.b16 %v60, %v58
  %v65 = vpack.c.b16 %v61, %v59
  %v86 = vunpack.c.l.b16 %v32
  %v87 = vunpack.c.l.b16 %v33
  %v88 = vunpack.c.l.b16 %v34
  %v89 = vunpack.c.l.b16 %v35
  %v90 = vunpack.c.l.b16 %v36
  %v91 = vunpack.c.l.b16 %v37
  %v92 = vunpack.c.l.b16 %v38
  %v93 = vunpack.c.l.b16 %v39
  %v94 = vunpack.c.l.b16 %v40
  %v95 = vunpack.c.l.b16 %v41
  %v96 = vunpack.c.l.b16 %v42
  %v97 = vunpack.c.l.b16 %v43
  %v98 = vunpack.c.l.b16 %v44
  %v99 = vunpack.c.l.b16 %v45
  %v100 = vunpack.c.l.b16 %v46
  %v101 = vunpack.c.l.b16 %v47
  %v102 = vunpack.c.l.b16 %v48
  %v103 = vunpack.c.l.b16 %v49
  %v104 = vpack.c.b16 %v87, %v86
  %v105 = vpack.c.b16 %v89, %v88
  %v106 = vpack.c.b16 %v91, %v90
  %v107 = vpack.c.b16 %v93, %v92
  %v108 = vpack.c.b16 %v95, %v94
  %v109 = vpack.c.b16 %v97, %v96
  %v110 = vpack.c.b16 %v99, %v98
  %v111 = vpack.c.b16 %v101, %v100
  %v112 = vpack.c.b16 %v103, %v102
  %vm122 = vcmask 130048
  %v124 = vsel %vm122, %v63, 0
  %v127 = vsel %vm122, %v65, 0
  %129 = vmatprep.subr.bf16.mxu0 0
  %130 = vmatpush1.bf16.msra.mxu0 %v104
  %131 = vmatprep.subr.bf16.mxu0 0
  %132 = vmatpush1.bf16.msra.mxu0 %v105
  %133 = vmatprep.subr.bf16.mxu0 0
  %134 = vmatpush1.bf16.msra.mxu0 %v106
  %135 = vmatprep.subr.bf16.mxu0 0
  %136 = vmatpush1.bf16.msra.mxu0 %v107
  %137 = vmatprep.subr.bf16.mxu0 0
  %138 = vmatpush1.bf16.msra.mxu0 %v108
  %139 = vmatprep.subr.bf16.mxu0 0
  %140 = vmatpush1.bf16.msra.mxu0 %v109
  %141 = vmatprep.subr.bf16.mxu0 0
  %142 = vmatpush1.bf16.msra.mxu0 %v110
  %143 = vmatprep.subr.bf16.mxu0 0
  %144 = vmatpush1.bf16.msra.mxu0 %v111
  %145 = vmatprep.subr.bf16.mxu0 0
  %146 = vmatpush1.bf16.msra.mxu0 %v112
  %147 = vmatprep.subr.bf16.mxu0 0
  %148 = vmatpush1.bf16.msra.mxu0 0
  %149 = vmatprep.subr.bf16.mxu0 0
  %150 = vmatpush1.bf16.msra.mxu0 0
  %151 = vmatprep.subr.bf16.mxu0 0
  %152 = vmatpush1.bf16.msra.mxu0 0
  %153 = vmatprep.subr.bf16.mxu0 0
  %154 = vmatpush1.bf16.msra.mxu0 0
  %155 = vmatprep.subr.bf16.mxu0 0
  %156 = vmatpush1.bf16.msra.mxu0 0
  %157 = vmatprep.subr.bf16.mxu0 0
  %158 = vmatpush1.bf16.msra.mxu0 0
  %159 = vmatprep.subr.bf16.mxu0 0
  %160 = vmatpush1.bf16.msra.mxu0 0
  %161 = vmatprep.mubr.bf16.mxu0 %v124
  %162 = vmatmul.mubr.bf16.gmra.mrb[0].mxu0 %v62
  %v163 = vpop.f32.mrb[0].mxu0
  %v164 = vadd.f32 0.0, %v163
  %v165 = vpop.f32.mrb[0].mxu0
  %v166 = vpop.f32.mrb[0].mxu0
  %v167 = vadd.f32 0.0, %v166
  %v168 = vpop.f32.mrb[0].mxu0
  %169 = vmatprep.mubr.bf16.mxu0 %v127
  %170 = vmatmul.mubr.bf16.gmra.mrb[0].mxu0 %v64
  %v171 = vpop.f32.mrb[0].mxu0
  %v172 = vadd.f32 0.0, %v171
  %v173 = vpop.f32.mrb[0].mxu0
  %v174 = vpop.f32.mrb[0].mxu0
  %v175 = vadd.f32 0.0, %v174
  %v176 = vpop.f32.mrb[0].mxu0
  %177 = vdwg.mxu0
  %v178 = vadd.f32 %v24, %v164
  %v179 = vadd.f32 %v25, %v167
  %v180 = vadd.f32 %v26, %v172
  %v181 = vadd.f32 %v27, %v175
  %vm182 = vcmask 261120
  %183 = vst.msk [vmem:[#allocation2] sm:$0xff] %vm182, %v178
  %184 = vst.msk [vmem:[#allocation2 + $0x8] sm:$0xff] %vm182, %v179
  %185 = vst.msk [vmem:[#allocation2 + $0x10] sm:$0xff] %vm182, %v180
  %186 = vst.msk [vmem:[#allocation2 + $0x18] sm:$0xff] %vm182, %v181
  // Predicated region
  $region18: #{image_captioning_forward.5} parent=0 // pred_check
    %p187 = pneg %p15
  $region19: #{image_captioning_forward.5} parent=0 // pred_check_branch
    %189 = sbr.rel (%p187) target = $region21
  $region20: #{image_captioning_forward.5} parent=0 // pred_region
    %v190 = vld [vmem:[#allocation2] sm:$0xff]
    %v191 = vld [vmem:[#allocation2 + $0x8] sm:$0xff]
    %v192 = vld [vmem:[#allocation2 + $0x10] sm:$0xff]
    %v193 = vld [vmem:[#allocation2 + $0x18] sm:$0xff]
    %v194 = vld [vmem:[%s2] sm:$0x1]
    %v196 = vlaneseq
    %v197 = vshrl.u32 %v196, 7
    %v198 = vsub.s32 0, %v197
    %v199 = vrot.slane %v194, %v198
    %v201 = vadd.f32 %v190, %v199
    %v202 = vadd.f32 %v191, %v199
    %v203 = vadd.f32 %v192, %v199
    %v204 = vadd.f32 %v193, %v199
    %v205 = vmax.f32 %v201, 0.0
    %v206 = vmax.f32 %v202, 0.0
    %v207 = vmax.f32 %v203, 0.0
    %v208 = vmax.f32 %v204, 0.0
    %209 = vst.msk [vmem:[%s3] sm:$0xff] %vm182, %v205
    %210 = vst.msk [vmem:[%s3 + $0x8] sm:$0xff] %vm182, %v206
    %211 = vst.msk [vmem:[%s3 + $0x10] sm:$0xff] %vm182, %v207
    %212 = vst.msk [vmem:[%s3 + $0x18] sm:$0xff] %vm182, %v208
  $region21: #{image_captioning_forward.5} parent=0 // pred_fallthru
    _
  // Predicated region
  $region22: #{image_captioning_forward.5} parent=0 // pred_check
    _
  $region23: #{image_captioning_forward.5} parent=0 // pred_check_branch
    %214 = sbr.rel (0) target = $region25
  $region24: #{image_captioning_forward.5} parent=0 // pred_region
    _
  $region25: #{image_captioning_forward.5} parent=0 // pred_fallthru
    _
  // Predicated region
  $region26: #{image_captioning_forward.5} parent=0 // pred_check
    _
  $region27: #{image_captioning_forward.5} parent=0 // pred_check_branch
    %216 = sbr.rel (0) target = $region29
  $region28: #{image_captioning_forward.5} parent=0 // pred_region
    _
  $region29: #{image_captioning_forward.5} parent=0 // pred_fallthru
    _

// kernel: image_captioning_forward.7
$region0: #{image_captioning_forward.7}
  #allocation0 [shape = 'u32[]', space=smem, size = 0x4, offset = 0x4, fixed_abs, tag = 'smem constant byte address 0x4 - core index']
  #allocation1 [shape = 'u32[144,128]{1,0:T(1,128)}', space=vmem, size = 0x12000, scoped, tag = 'internal scratch']
  #allocation2 [shape = 'f32[16,128]{1,0:T(8,128)}', space=vmem, size = 0x2000, scoped, tag = 'scratch operand']
  %s0 = inlined_call_operand.vmem [shape: bf16[16,32], index: 0, kind: input, shape index: {}]
  %s1 = inlined_call_operand.vmem [shape: bf16[32,128], index: 1, kind: input, shape index: {}]
  %s2 = inlined_call_operand.vmem [shape: f32[1,128], index: 2, kind: input, shape index: {}]
  %s3 = inlined_call_operand.hbm [shape: f32[16,128], index: 3, kind: output, shape index: {}]
  %s4 = sld [smem:[#allocation0]]
  $region30: #{image_captioning_forward.7} parent=0
    _
  %s6 = ssub.s32 1, %s4
  %s7 = scalar_select 0, %s6, %s4
  $region1: #{image_captioning_forward.7} parent=0
    #allocation3 [shape = 'u8[8192]{0}', space=vmem, size = 0x2000, scoped, tag = 'output window, operand 0, single buffered']
    #allocation4 [shape = 's32[1]{0}', space=sflag, size = 0x4, scoped, tag = 'scoped memory for image_captioning_forward.7']
    %8 = vsyncpa [#allocation4], 0
    // Predicated region
    $region2: #{image_captioning_forward.7} parent=1 // pred_check
      _
    $region3: #{image_captioning_forward.7} parent=1 // pred_check_branch
      %10 = sbr.rel (0) target = $region5
    $region4: #{image_captioning_forward.7} parent=1 // pred_region
      _
    $region5: #{image_captioning_forward.7} parent=1 // pred_fallthru
      _
    // Predicated region
    $region6: #{image_captioning_forward.7} parent=1 // pred_check
      _
    $region7: #{image_captioning_forward.7} parent=1 // pred_check_branch
      %12 = sbr.rel (0) target = $region9
    $region8: #{image_captioning_forward.7} parent=1 // pred_region
      _
    $region9: #{image_captioning_forward.7} parent=1 // pred_fallthru
      _
    // Predicated region
    $region10: #{image_captioning_forward.7} parent=1 // pred_check
      _
    $region11: #{image_captioning_forward.7} parent=1 // pred_check_branch
      %14 = sbr.rel (0) target = $region13
    $region12: #{image_captioning_forward.7} parent=1 // pred_region
      _
    $region13: #{image_captioning_forward.7} parent=1 // pred_fallthru
      _
    %p16 = scmp.eq.s32.totalorder 0, 0
    // Predicated region
    $region14: #{image_captioning_forward.7} parent=1 // pred_check
      %p17 = pneg %p16
    $region15: #{image_captioning_forward.7} parent=1 // pred_check_branch
      %19 = sbr.rel (%p17) target = $region17
    $region16: #{image_captioning_forward.7} parent=1 // pred_region
      %20 = vst [vmem:[#allocation2] sm:$0xff] 0.0
      %21 = vst [vmem:[#allocation2 + $0x8] sm:$0xff] 0.0
    $region17: #{image_captioning_forward.7} parent=1 // pred_fallthru
      _
    %v22 = vld [vmem:[#allocation2] sm:$0xff]
    %v23 = vld [vmem:[#allocation2 + $0x8] sm:$0xff]
    %v24 = vld [vmem:[%s0] sm:$0xf]
    %v25 = vld [vmem:[%s0 + $0x4] sm:$0xf]
    %v26 = vld [vmem:[%s1] sm:$0xf]
    %v27 = vld [vmem:[%s1 + $0x4] sm:$0xf]
    %v28 = vld [vmem:[%s1 + $0x8] sm:$0xf]
    %v29 = vld [vmem:[%s1 + $0xc] sm:$0xf]
    %v32 = vunpack.c.l.b16 %v24
    %v33 = vunpack.c.l.b16 %v25
    %v34 = vpack.c.b16 %v33, %v32
    %v39 = vunpack.c.l.b16 %v26
    %v40 = vunpack.c.l.b16 %v27
    %v41 = vunpack.c.l.b16 %v28
    %v42 = vunpack.c.l.b16 %v29
    %v43 = vpack.c.b16 %v40, %v39
    %v44 = vpack.c.b16 %v42, %v41
    %vm47 = vcmask 261120
    %v49 = vsel %vm47, %v34, 0
    %51 = vmatprep.subr.bf16.mxu0 0
    %52 = vmatpush1.bf16.msra.mxu0 %v43
    %53 = vmatprep.subr.bf16.mxu0 0
    %54 = vmatpush1.bf16.msra.mxu0 %v44
    %55 = vmatprep.subr.bf16.mxu0 0
    %56 = vmatpush1.bf16.msra.mxu0 0
    %57 = vmatprep.subr.bf16.mxu0 0
    %58 = vmatpush1.bf16.msra.mxu0 0
    %59 = vmatprep.subr.bf16.mxu0 0
    %60 = vmatpush1.bf16.msra.mxu0 0
    %61 = vmatprep.subr.bf16.mxu0 0
    %62 = vmatpush1.bf16.msra.mxu0 0
    %63 = vmatprep.subr.bf16.mxu0 0
    %64 = vmatpush1.bf16.msra.mxu0 0
    %65 = vmatprep.subr.bf16.mxu0 0
    %66 = vmatpush1.bf16.msra.mxu0 0
    %67 = vmatprep.subr.bf16.mxu0 0
    %68 = vmatpush1.bf16.msra.mxu0 0
    %69 = vmatprep.subr.bf16.mxu0 0
    %70 = vmatpush1.bf16.msra.mxu0 0
    %71 = vmatprep.subr.bf16.mxu0 0
    %72 = vmatpush1.bf16.msra.mxu0 0
    %73 = vmatprep.subr.bf16.mxu0 0
    %74 = vmatpush1.bf16.msra.mxu0 0
    %75 = vmatprep.subr.bf16.mxu0 0
    %76 = vmatpush1.bf16.msra.mxu0 0
    %77 = vmatprep.subr.bf16.mxu0 0
    %78 = vmatpush1.bf16.msra.mxu0 0
    %79 = vmatprep.subr.bf16.mxu0 0
    %80 = vmatpush1.bf16.msra.mxu0 0
    %81 = vmatprep.subr.bf16.mxu0 0
    %82 = vmatpush1.bf16.msra.mxu0 0
    %83 = vmatprep.mubr.bf16.mxu0 0
    %84 = vmatmul.mubr.bf16.gmra.mrb[0].mxu0 %v49
    %v85 = vpop.f32.mrb[0].mxu0
    %v86 = vadd.f32 0.0, %v85
    %v87 = vpop.f32.mrb[0].mxu0
    %v88 = vpop.f32.mrb[0].mxu0
    %v89 = vadd.f32 0.0, %v88
    %v90 = vpop.f32.mrb[0].mxu0
    %91 = vdwg.mxu0
    %v92 = vadd.f32 %v22, %v86
    %v93 = vadd.f32 %v23, %v89
    %94 = vst [vmem:[#allocation2] sm:$0xff] %v92
    %95 = vst [vmem:[#allocation2 + $0x8] sm:$0xff] %v93
    // Predicated region
    $region18: #{image_captioning_forward.7} parent=1 // pred_check
      %p96 = pneg %p16
    $region19: #{image_captioning_forward.7} parent=1 // pred_check_branch
      %98 = sbr.rel (%p96) target = $region21
    $region20: #{image_captioning_forward.7} parent=1 // pred_region
      %v99 = vld [vmem:[#allocation2] sm:$0xff]
      %v100 = vld [vmem:[#allocation2 + $0x8] sm:$0xff]
      %v101 = vld [vmem:[%s2] sm:$0x1]
      %v103 = vlaneseq
      %v104 = vshrl.u32 %v103, 7
      %v105 = vsub.s32 0, %v104
      %v106 = vrot.slane %v101, %v105
      %v108 = vadd.f32 %v99, %v106
      %v109 = vadd.f32 %v100, %v106
      %110 = vst [vmem:[#allocation3] sm:$0xff] %v108
      %111 = vst [vmem:[#allocation3 + $0x8] sm:$0xff] %v109
    $region21: #{image_captioning_forward.7} parent=1 // pred_fallthru
      _
    // Predicated region
    $region22: #{image_captioning_forward.7} parent=1 // pred_check
      _
    $region23: #{image_captioning_forward.7} parent=1 // pred_check_branch
      %113 = sbr.rel (0) target = $region25
    $region24: #{image_captioning_forward.7} parent=1 // pred_region
      %s115 = ssub.s32 256, 256
      %116 = vsyncadd [#allocation4], %s115
      %s117 = sshll.u32 [#allocation3], 4
      %s118 = int_to_ptr.vmem [resolvable:$true] %s117
      %123 = dma.vmem_to_hbm [thread:$0]  %s118, 256, %s3, [#allocation4], 128, 128, 8
    $region25: #{image_captioning_forward.7} parent=1 // pred_fallthru
      _
    // Predicated region
    $region26: #{image_captioning_forward.7} parent=1 // pred_check
      _
    $region27: #{image_captioning_forward.7} parent=1 // pred_check_branch
      %125 = sbr.rel (0) target = $region29
    $region28: #{image_captioning_forward.7} parent=1 // pred_region
      %126 = dma.done [#allocation4], 256
    $region29: #{image_captioning_forward.7} parent=1 // pred_fallthru
      _
    %127 = vsyncpa [#allocation4], 1

// kernel: image_captioning_forward.6
$region0: #{image_captioning_forward.6}
  #allocation0 [shape = 'u32[]', space=smem, size = 0x4, offset = 0x4, fixed_abs, tag = 'smem constant byte address 0x4 - core index']
  #allocation1 [shape = 'u32[144,128]{1,0:T(1,128)}', space=vmem, size = 0x12000, scoped, tag = 'internal scratch']
  #allocation2 [shape = 'f32[8,32]{1,0:T(8,128)}', space=vmem, size = 0x1000, scoped, tag = 'scratch operand']
  %s0 = inlined_call_operand.vmem [shape: f32[2,8,32], index: 0, kind: input, shape index: {}]
  %s1 = inlined_call_operand.vmem [shape: f32[8,32], index: 1, kind: input, shape index: {}]
  %s2 = inlined_call_operand.vmem [shape: f32[2,16,32], index: 2, kind: input, shape index: {}]
  %s3 = inlined_call_operand.vmem [shape: f32[32,96], index: 3, kind: input, shape index: {}]
  %s4 = inlined_call_operand.vmem [shape: f32[1,96], index: 4, kind: input, shape index: {}]
  %s5 = inlined_call_operand.vmem [shape: f32[32,32], index: 5, kind: input, shape index: {}]
  %s6 = inlined_call_operand.vmem [shape: f32[1,32], index: 6, kind: input, shape index: {}]
  %s7 = inlined_call_operand.vmem [shape: f32[32,32], index: 7, kind: input, shape index: {}]
  %s8 = inlined_call_operand.vmem [shape: f32[1,32], index: 8, kind: input, shape index: {}]
  %s9 = inlined_call_operand.vmem [shape: f32[32,64], index: 9, kind: input, shape index: {}]
  %s10 = inlined_call_operand.vmem [shape: f32[1,64], index: 10, kind: input, shape index: {}]
  %s11 = inlined_call_operand.vmem [shape: f32[32,32], index: 11, kind: input, shape index: {}]
  %s12 = inlined_call_operand.vmem [shape: f32[1,32], index: 12, kind: input, shape index: {}]
  %s13 = inlined_call_operand.vmem [shape: f32[3,32], index: 13, kind: input, shape index: {}]
  %s14 = inlined_call_operand.vmem [shape: f32[3,32], index: 14, kind: input, shape index: {}]
  %s15 = inlined_call_operand.vmem [shape: f32[32,64], index: 15, kind: input, shape index: {}]
  %s16 = inlined_call_operand.vmem [shape: f32[1,64], index: 16, kind: input, shape index: {}]
  %s17 = inlined_call_operand.vmem [shape: f32[64,32], index: 17, kind: input, shape index: {}]
  %s18 = inlined_call_operand.vmem [shape: f32[1,32], index: 18, kind: input, shape index: {}]
  %s19 = inlined_call_operand.vmem [shape: f32[2,8,32], index: 19, kind: output, shape index: {}]
  %s20 = sld [smem:[#allocation0]]
  $region109: #{image_captioning_forward.6} parent=0
    _
  %s22 = ssub.s32 1, %s20
  %s23 = scalar_select 0, %s22, %s20
  loop: start=0, step=1, limit=4
  $region2: #{image_captioning_forward.6} parent=0 // loop_pre_header
    _
  $region3: #{image_captioning_forward.6} parent=0 // loop_header
    %s25 = sphi 0, %s29
    %p26 = scmp.ge.s32.totalorder %s25, 4
    %s35 = sphi 0, %s37
    %s38 = sphi 0, %s35
    %s39 = sphi 0, %s38
    %s55 = sphi 0, %s39
    %s59 = sphi 0, %s59
    %s61 = sphi 0, %s59
    %s62 = sphi 0, %s61
    %s76 = sphi 0, %s62
    %s82 = sphi 0, %s84
    %s85 = sphi 0, %s82
    %s86 = sphi 0, %s85
    %s102 = sphi 0, %s86
    %s106 = sphi 0, %s106
    %s108 = sphi 0, %s106
    %s109 = sphi 0, %s108
    %s123 = sphi 0, %s109
    %s127 = sphi 0, %s127
    %s129 = sphi 0, %s127
    %s130 = sphi 0, %s129
    %s144 = sphi 0, %s130
    %s148 = sphi 0, %s148
    %s150 = sphi 0, %s148
    %s151 = sphi 0, %s150
    %s165 = sphi 0, %s151
    %s169 = sphi 0, %s169
    %s171 = sphi 0, %s169
    %s172 = sphi 0, %s171
    %s186 = sphi 0, %s172
    %s190 = sphi 0, %s190
    %s192 = sphi 0, %s190
    %s193 = sphi 0, %s192
    %s207 = sphi 0, %s193
    %s211 = sphi 0, %s211
    %s213 = sphi 0, %s211
    %s214 = sphi 0, %s213
    %s228 = sphi 0, %s214
    %s232 = sphi 0, %s232
    %s234 = sphi 0, %s232
    %s235 = sphi 0, %s234
    %s249 = sphi 0, %s235
    %s253 = sphi 0, %s253
    %s255 = sphi 0, %s253
    %s256 = sphi 0, %s255
    %s270 = sphi 0, %s256
    %s274 = sphi 0, %s274
    %s276 = sphi 0, %s274
    %s277 = sphi 0, %s276
    %s291 = sphi 0, %s277
    %s295 = sphi 0, %s295
    %s297 = sphi 0, %s295
    %s298 = sphi 0, %s297
    %s312 = sphi 0, %s298
    %s316 = sphi 0, %s316
    %s318 = sphi 0, %s316
    %s319 = sphi 0, %s318
    %s333 = sphi 0, %s319
    %s337 = sphi 0, %s337
    %s339 = sphi 0, %s337
    %s340 = sphi 0, %s339
    %s354 = sphi 0, %s340
    %s358 = sphi 0, %s358
    %s360 = sphi 0, %s358
    %s361 = sphi 0, %s360
    %s375 = sphi 0, %s361
    %s379 = sphi 0, %s379
    %s381 = sphi 0, %s379
    %s382 = sphi 0, %s381
    %s396 = sphi 0, %s382
    %s400 = sphi 0, %s400
    %s402 = sphi 0, %s400
    %s403 = sphi 0, %s402
    %s417 = sphi 0, %s403
    %s421 = sphi 0, %s421
    %s423 = sphi 0, %s421
    %s424 = sphi 0, %s423
    %s438 = sphi 0, %s424
    %s444 = sphi 0, %s446
    %s447 = sphi 0, %s444
    %s448 = sphi 0, %s447
    %s464 = sphi 0, %s448
  $region4: #{image_captioning_forward.6} parent=0 // loop_header_branch
    %28 = sbr.rel (%p26) target = $region8
  $region5: #{image_captioning_forward.6} parent=0 // loop_body
    %s30 = ssub.s32 %s25, 1
    %s31 = ssub.s32 %s25, 2
    %s32 = sadd.s32 %s25, 1
    %s33 = ssub.s32 %s25, %s32
    %p34 = scmp.eq.s32.totalorder %s33, 0
    %s36 = sadd.s32 %s35, 1
    %s37 = scalar_select %p34, %s35, %s36
    %p40 = pneg %p34
    %p41 = scmp.eq.s32.totalorder %s25, 1
    %p42 = por %p40, %p41
    %p43 = scmp.ne.s32.totalorder %s35, %s38
    %p44 = scmp.eq.s32.totalorder %s25, 0
    %p45 = por %p43, %p44
    %p46 = scmp.ne.s32.totalorder %s35, %s38
    %p47 = scmp.eq.s32.totalorder %s30, 1
    %p48 = por %p46, %p47
    %p49 = scmp.ne.s32.totalorder %s38, %s39
    %p50 = scmp.eq.s32.totalorder %s30, 0
    %p51 = por %p49, %p50
    %p52 = scmp.ne.s32.totalorder %s38, %s39
    %p53 = scmp.eq.s32.totalorder %s31, 1
    %p54 = por %p52, %p53
    %p56 = scmp.ne.s32.totalorder %s39, %s55
    %p57 = scmp.eq.s32.totalorder %s31, 0
    %p58 = por %p56, %p57
    %s60 = sadd.s32 %s59, 1
    %p63 = scmp.eq.s32.totalorder %s25, 1
    %p64 = scmp.ne.s32.totalorder %s59, %s61
    %p65 = scmp.eq.s32.totalorder %s25, 0
    %p66 = por %p64, %p65
    %p67 = scmp.ne.s32.totalorder %s59, %s61
    %p68 = scmp.eq.s32.totalorder %s30, 1
    %p69 = por %p67, %p68
    %p70 = scmp.ne.s32.totalorder %s61, %s62
    %p71 = scmp.eq.s32.totalorder %s30, 0
    %p72 = por %p70, %p71
    %p73 = scmp.ne.s32.totalorder %s61, %s62
    %p74 = scmp.eq.s32.totalorder %s31, 1
    %p75 = por %p73, %p74
    %p77 = scmp.ne.s32.totalorder %s62, %s76
    %p78 = scmp.eq.s32.totalorder %s31, 0
    %p79 = por %p77, %p78
    %s80 = ssub.s32 %s25, %s32
    %p81 = scmp.eq.s32.totalorder %s80, 0
    %s83 = sadd.s32 %s82, 1
    %s84 = scalar_select %p81, %s82, %s83
    %p87 = pneg %p81
    %p88 = scmp.eq.s32.totalorder %s25, 1
    %p89 = por %p87, %p88
    %p90 = scmp.ne.s32.totalorder %s82, %s85
    %p91 = scmp.eq.s32.totalorder %s25, 0
    %p92 = por %p90, %p91
    %p93 = scmp.ne.s32.totalorder %s82, %s85
    %p94 = scmp.eq.s32.totalorder %s30, 1
    %p95 = por %p93, %p94
    %p96 = scmp.ne.s32.totalorder %s85, %s86
    %p97 = scmp.eq.s32.totalorder %s30, 0
    %p98 = por %p96, %p97
    %p99 = scmp.ne.s32.totalorder %s85, %s86
    %p100 = scmp.eq.s32.totalorder %s31, 1
    %p101 = por %p99, %p100
    %p103 = scmp.ne.s32.totalorder %s86, %s102
    %p104 = scmp.eq.s32.totalorder %s31, 0
    %p105 = por %p103, %p104
    %s107 = sadd.s32 %s106, 1
    %p110 = scmp.eq.s32.totalorder %s25, 1
    %p111 = scmp.ne.s32.totalorder %s106, %s108
    %p112 = scmp.eq.s32.totalorder %s25, 0
    %p113 = por %p111, %p112
    %p114 = scmp.ne.s32.totalorder %s106, %s108
    %p115 = scmp.eq.s32.totalorder %s30, 1
    %p116 = por %p114, %p115
    %p117 = scmp.ne.s32.totalorder %s108, %s109
    %p118 = scmp.eq.s32.totalorder %s30, 0
    %p119 = por %p117, %p118
    %p120 = scmp.ne.s32.totalorder %s108, %s109
    %p121 = scmp.eq.s32.totalorder %s31, 1
    %p122 = por %p120, %p121
    %p124 = scmp.ne.s32.totalorder %s109, %s123
    %p125 = scmp.eq.s32.totalorder %s31, 0
    %p126 = por %p124, %p125
    %s128 = sadd.s32 %s127, 1
    %p131 = scmp.eq.s32.totalorder %s25, 1
    %p132 = scmp.ne.s32.totalorder %s127, %s129
    %p133 = scmp.eq.s32.totalorder %s25, 0
    %p134 = por %p132, %p133
    %p135 = scmp.ne.s32.totalorder %s127, %s129
    %p136 = scmp.eq.s32.totalorder %s30, 1
    %p137 = por %p135, %p136
    %p138 = scmp.ne.s32.totalorder %s129, %s130
    %p139 = scmp.eq.s32.totalorder %s30, 0
    %p140 = por %p138, %p139
    %p141 = scmp.ne.s32.totalorder %s129, %s130
    %p142 = scmp.eq.s32.totalorder %s31, 1
    %p143 = por %p141, %p142
    %p145 = scmp.ne.s32.totalorder %s130, %s144
    %p146 = scmp.eq.s32.totalorder %s31, 0
    %p147 = por %p145, %p146
    %s149 = sadd.s32 %s148, 1
    %p152 = scmp.eq.s32.totalorder %s25, 1
    %p153 = scmp.ne.s32.totalorder %s148, %s150
    %p154 = scmp.eq.s32.totalorder %s25, 0
    %p155 = por %p153, %p154
    %p156 = scmp.ne.s32.totalorder %s148, %s150
    %p157 = scmp.eq.s32.totalorder %s30, 1
    %p158 = por %p156, %p157
    %p159 = scmp.ne.s32.totalorder %s150, %s151
    %p160 = scmp.eq.s32.totalorder %s30, 0
    %p161 = por %p159, %p160
    %p162 = scmp.ne.s32.totalorder %s150, %s151
    %p163 = scmp.eq.s32.totalorder %s31, 1
    %p164 = por %p162, %p163
    %p166 = scmp.ne.s32.totalorder %s151, %s165
    %p167 = scmp.eq.s32.totalorder %s31, 0
    %p168 = por %p166, %p167
    %s170 = sadd.s32 %s169, 1
    %p173 = scmp.eq.s32.totalorder %s25, 1
    %p174 = scmp.ne.s32.totalorder %s169, %s171
    %p175 = scmp.eq.s32.totalorder %s25, 0
    %p176 = por %p174, %p175
    %p177 = scmp.ne.s32.totalorder %s169, %s171
    %p178 = scmp.eq.s32.totalorder %s30, 1
    %p179 = por %p177, %p178
    %p180 = scmp.ne.s32.totalorder %s171, %s172
    %p181 = scmp.eq.s32.totalorder %s30, 0
    %p182 = por %p180, %p181
    %p183 = scmp.ne.s32.totalorder %s171, %s172
    %p184 = scmp.eq.s32.totalorder %s31, 1
    %p185 = por %p183, %p184
    %p187 = scmp.ne.s32.totalorder %s172, %s186
    %p188 = scmp.eq.s32.totalorder %s31, 0
    %p189 = por %p187, %p188
    %s191 = sadd.s32 %s190, 1
    %p194 = scmp.eq.s32.totalorder %s25, 1
    %p195 = scmp.ne.s32.totalorder %s190, %s192
    %p196 = scmp.eq.s32.totalorder %s25, 0
    %p197 = por %p195, %p196
    %p198 = scmp.ne.s32.totalorder %s190, %s192
    %p199 = scmp.eq.s32.totalorder %s30, 1
    %p200 = por %p198, %p199
    %p201 = scmp.ne.s32.totalorder %s192, %s193
    %p202 = scmp.eq.s32.totalorder %s30, 0
    %p203 = por %p201, %p202
    %p204 = scmp.ne.s32.totalorder %s192, %s193
    %p205 = scmp.eq.s32.totalorder %s31, 1
    %p206 = por %p204, %p205
    %p208 = scmp.ne.s32.totalorder %s193, %s207
    %p209 = scmp.eq.s32.totalorder %s31, 0
    %p210 = por %p208, %p209
    %s212 = sadd.s32 %s211, 1
    %p215 = scmp.eq.s32.totalorder %s25, 1
    %p216 = scmp.ne.s32.totalorder %s211, %s213
    %p217 = scmp.eq.s32.totalorder %s25, 0
    %p218 = por %p216, %p217
    %p219 = scmp.ne.s32.totalorder %s211, %s213
    %p220 = scmp.eq.s32.totalorder %s30, 1
    %p221 = por %p219, %p220
    %p222 = scmp.ne.s32.totalorder %s213, %s214
    %p223 = scmp.eq.s32.totalorder %s30, 0
    %p224 = por %p222, %p223
    %p225 = scmp.ne.s32.totalorder %s213, %s214
    %p226 = scmp.eq.s32.totalorder %s31, 1
    %p227 = por %p225, %p226
    %p229 = scmp.ne.s32.totalorder %s214, %s228
    %p230 = scmp.eq.s32.totalorder %s31, 0
    %p231 = por %p229, %p230
    %s233 = sadd.s32 %s232, 1
    %p236 = scmp.eq.s32.totalorder %s25, 1
    %p237 = scmp.ne.s32.totalorder %s232, %s234
    %p238 = scmp.eq.s32.totalorder %s25, 0
    %p239 = por %p237, %p238
    %p240 = scmp.ne.s32.totalorder %s232, %s234
    %p241 = scmp.eq.s32.totalorder %s30, 1
    %p242 = por %p240, %p241
    %p243 = scmp.ne.s32.totalorder %s234, %s235
    %p244 = scmp.eq.s32.totalorder %s30, 0
    %p245 = por %p243, %p244
    %p246 = scmp.ne.s32.totalorder %s234, %s235
    %p247 = scmp.eq.s32.totalorder %s31, 1
    %p248 = por %p246, %p247
    %p250 = scmp.ne.s32.totalorder %s235, %s249
    %p251 = scmp.eq.s32.totalorder %s31, 0
    %p252 = por %p250, %p251
    %s254 = sadd.s32 %s253, 1
    %p257 = scmp.eq.s32.totalorder %s25, 1
    %p258 = scmp.ne.s32.totalorder %s253, %s255
    %p259 = scmp.eq.s32.totalorder %s25, 0
    %p260 = por %p258, %p259
    %p261 = scmp.ne.s32.totalorder %s253, %s255
    %p262 = scmp.eq.s32.totalorder %s30, 1
    %p263 = por %p261, %p262
    %p264 = scmp.ne.s32.totalorder %s255, %s256
    %p265 = scmp.eq.s32.totalorder %s30, 0
    %p266 = por %p264, %p265
    %p267 = scmp.ne.s32.totalorder %s255, %s256
    %p268 = scmp.eq.s32.totalorder %s31, 1
    %p269 = por %p267, %p268
    %p271 = scmp.ne.s32.totalorder %s256, %s270
    %p272 = scmp.eq.s32.totalorder %s31, 0
    %p273 = por %p271, %p272
    %s275 = sadd.s32 %s274, 1
    %p278 = scmp.eq.s32.totalorder %s25, 1
    %p279 = scmp.ne.s32.totalorder %s274, %s276
    %p280 = scmp.eq.s32.totalorder %s25, 0
    %p281 = por %p279, %p280
    %p282 = scmp.ne.s32.totalorder %s274, %s276
    %p283 = scmp.eq.s32.totalorder %s30, 1
    %p284 = por %p282, %p283
    %p285 = scmp.ne.s32.totalorder %s276, %s277
    %p286 = scmp.eq.s32.totalorder %s30, 0
    %p287 = por %p285, %p286
    %p288 = scmp.ne.s32.totalorder %s276, %s277
    %p289 = scmp.eq.s32.totalorder %s31, 1
    %p290 = por %p288, %p289
    %p292 = scmp.ne.s32.totalorder %s277, %s291
    %p293 = scmp.eq.s32.totalorder %s31, 0
    %p294 = por %p292, %p293
    %s296 = sadd.s32 %s295, 1
    %p299 = scmp.eq.s32.totalorder %s25, 1
    %p300 = scmp.ne.s32.totalorder %s295, %s297
    %p301 = scmp.eq.s32.totalorder %s25, 0
    %p302 = por %p300, %p301
    %p303 = scmp.ne.s32.totalorder %s295, %s297
    %p304 = scmp.eq.s32.totalorder %s30, 1
    %p305 = por %p303, %p304
    %p306 = scmp.ne.s32.totalorder %s297, %s298
    %p307 = scmp.eq.s32.totalorder %s30, 0
    %p308 = por %p306, %p307
    %p309 = scmp.ne.s32.totalorder %s297, %s298
    %p310 = scmp.eq.s32.totalorder %s31, 1
    %p311 = por %p309, %p310
    %p313 = scmp.ne.s32.totalorder %s298, %s312
    %p314 = scmp.eq.s32.totalorder %s31, 0
    %p315 = por %p313, %p314
    %s317 = sadd.s32 %s316, 1
    %p320 = scmp.eq.s32.totalorder %s25, 1
    %p321 = scmp.ne.s32.totalorder %s316, %s318
    %p322 = scmp.eq.s32.totalorder %s25, 0
    %p323 = por %p321, %p322
    %p324 = scmp.ne.s32.totalorder %s316, %s318
    %p325 = scmp.eq.s32.totalorder %s30, 1
    %p326 = por %p324, %p325
    %p327 = scmp.ne.s32.totalorder %s318, %s319
    %p328 = scmp.eq.s32.totalorder %s30, 0
    %p329 = por %p327, %p328
    %p330 = scmp.ne.s32.totalorder %s318, %s319
    %p331 = scmp.eq.s32.totalorder %s31, 1
    %p332 = por %p330, %p331
    %p334 = scmp.ne.s32.totalorder %s319, %s333
    %p335 = scmp.eq.s32.totalorder %s31, 0
    %p336 = por %p334, %p335
    %s338 = sadd.s32 %s337, 1
    %p341 = scmp.eq.s32.totalorder %s25, 1
    %p342 = scmp.ne.s32.totalorder %s337, %s339
    %p343 = scmp.eq.s32.totalorder %s25, 0
    %p344 = por %p342, %p343
    %p345 = scmp.ne.s32.totalorder %s337, %s339
    %p346 = scmp.eq.s32.totalorder %s30, 1
    %p347 = por %p345, %p346
    %p348 = scmp.ne.s32.totalorder %s339, %s340
    %p349 = scmp.eq.s32.totalorder %s30, 0
    %p350 = por %p348, %p349
    %p351 = scmp.ne.s32.totalorder %s339, %s340
    %p352 = scmp.eq.s32.totalorder %s31, 1
    %p353 = por %p351, %p352
    %p355 = scmp.ne.s32.totalorder %s340, %s354
    %p356 = scmp.eq.s32.totalorder %s31, 0
    %p357 = por %p355, %p356
    %s359 = sadd.s32 %s358, 1
    %p362 = scmp.eq.s32.totalorder %s25, 1
    %p363 = scmp.ne.s32.totalorder %s358, %s360
    %p364 = scmp.eq.s32.totalorder %s25, 0
    %p365 = por %p363, %p364
    %p366 = scmp.ne.s32.totalorder %s358, %s360
    %p367 = scmp.eq.s32.totalorder %s30, 1
    %p368 = por %p366, %p367
    %p369 = scmp.ne.s32.totalorder %s360, %s361
    %p370 = scmp.eq.s32.totalorder %s30, 0
    %p371 = por %p369, %p370
    %p372 = scmp.ne.s32.totalorder %s360, %s361
    %p373 = scmp.eq.s32.totalorder %s31, 1
    %p374 = por %p372, %p373
    %p376 = scmp.ne.s32.totalorder %s361, %s375
    %p377 = scmp.eq.s32.totalorder %s31, 0
    %p378 = por %p376, %p377
    %s380 = sadd.s32 %s379, 1
    %p383 = scmp.eq.s32.totalorder %s25, 1
    %p384 = scmp.ne.s32.totalorder %s379, %s381
    %p385 = scmp.eq.s32.totalorder %s25, 0
    %p386 = por %p384, %p385
    %p387 = scmp.ne.s32.totalorder %s379, %s381
    %p388 = scmp.eq.s32.totalorder %s30, 1
    %p389 = por %p387, %p388
    %p390 = scmp.ne.s32.totalorder %s381, %s382
    %p391 = scmp.eq.s32.totalorder %s30, 0
    %p392 = por %p390, %p391
    %p393 = scmp.ne.s32.totalorder %s381, %s382
    %p394 = scmp.eq.s32.totalorder %s31, 1
    %p395 = por %p393, %p394
    %p397 = scmp.ne.s32.totalorder %s382, %s396
    %p398 = scmp.eq.s32.totalorder %s31, 0
    %p399 = por %p397, %p398
    %s401 = sadd.s32 %s400, 1
    %p404 = scmp.eq.s32.totalorder %s25, 1
    %p405 = scmp.ne.s32.totalorder %s400, %s402
    %p406 = scmp.eq.s32.totalorder %s25, 0
    %p407 = por %p405, %p406
    %p408 = scmp.ne.s32.totalorder %s400, %s402
    %p409 = scmp.eq.s32.totalorder %s30, 1
    %p410 = por %p408, %p409
    %p411 = scmp.ne.s32.totalorder %s402, %s403
    %p412 = scmp.eq.s32.totalorder %s30, 0
    %p413 = por %p411, %p412
    %p414 = scmp.ne.s32.totalorder %s402, %s403
    %p415 = scmp.eq.s32.totalorder %s31, 1
    %p416 = por %p414, %p415
    %p418 = scmp.ne.s32.totalorder %s403, %s417
    %p419 = scmp.eq.s32.totalorder %s31, 0
    %p420 = por %p418, %p419
    %s422 = sadd.s32 %s421, 1
    %p425 = scmp.eq.s32.totalorder %s25, 1
    %p426 = scmp.ne.s32.totalorder %s421, %s423
    %p427 = scmp.eq.s32.totalorder %s25, 0
    %p428 = por %p426, %p427
    %p429 = scmp.ne.s32.totalorder %s421, %s423
    %p430 = scmp.eq.s32.totalorder %s30, 1
    %p431 = por %p429, %p430
    %p432 = scmp.ne.s32.totalorder %s423, %s424
    %p433 = scmp.eq.s32.totalorder %s30, 0
    %p434 = por %p432, %p433
    %p435 = scmp.ne.s32.totalorder %s423, %s424
    %p436 = scmp.eq.s32.totalorder %s31, 1
    %p437 = por %p435, %p436
    %p439 = scmp.ne.s32.totalorder %s424, %s438
    %p440 = scmp.eq.s32.totalorder %s31, 0
    %p441 = por %p439, %p440
    %s442 = ssub.s32 %s25, %s32
    %p443 = scmp.eq.s32.totalorder %s442, 0
    %s445 = sadd.s32 %s444, 1
    %s446 = scalar_select %p443, %s444, %s445
    %p449 = pneg %p443
    %p450 = scmp.eq.s32.totalorder %s25, 1
    %p451 = por %p449, %p450
    %p452 = scmp.ne.s32.totalorder %s444, %s447
    %p453 = scmp.eq.s32.totalorder %s25, 0
    %p454 = por %p452, %p453
    %p455 = scmp.ne.s32.totalorder %s444, %s447
    %p456 = scmp.eq.s32.totalorder %s30, 1
    %p457 = por %p455, %p456
    %p458 = scmp.ne.s32.totalorder %s447, %s448
    %p459 = scmp.eq.s32.totalorder %s30, 0
    %p460 = por %p458, %p459
    %p461 = scmp.ne.s32.totalorder %s447, %s448
    %p462 = scmp.eq.s32.totalorder %s31, 1
    %p463 = por %p461, %p462
    %p465 = scmp.ne.s32.totalorder %s448, %s464
    %p466 = scmp.eq.s32.totalorder %s31, 0
    %p467 = por %p465, %p466
    %p468 = scmp.le.s32.totalorder 1, %s25
    %p469 = scmp.lt.s32.totalorder %s25, 3
    %p470 = pnand %p468, %p469
    %p471 = pneg %p470
    // Predicated region
    $region9: #{image_captioning_forward.6} parent=5 // pred_check
      _
    $region10: #{image_captioning_forward.6} parent=5 // pred_check_branch
      %473 = sbr.rel (%p470) target = $region12
    $region11: #{image_captioning_forward.6} parent=5 // pred_region
      %s474 = ssub.s32 %s25, 1
      // Predicated region
      $region13: #{image_captioning_forward.6} parent=11 // pred_check
        %p475 = pneg %p72
      $region14: #{image_captioning_forward.6} parent=11 // pred_check_branch
        %477 = sbr.rel (%p475) target = $region16
      $region15: #{image_captioning_forward.6} parent=11 // pred_region
        _
      $region16: #{image_captioning_forward.6} parent=11 // pred_fallthru
        _
      // Predicated region
      $region17: #{image_captioning_forward.6} parent=11 // pred_check
        %p478 = pneg %p119
      $region18: #{image_captioning_forward.6} parent=11 // pred_check_branch
        %480 = sbr.rel (%p478) target = $region20
      $region19: #{image_captioning_forward.6} parent=11 // pred_region
        _
      $region20: #{image_captioning_forward.6} parent=11 // pred_fallthru
        _
      // Predicated region
      $region21: #{image_captioning_forward.6} parent=11 // pred_check
        %p481 = pneg %p140
      $region22: #{image_captioning_forward.6} parent=11 // pred_check_branch
        %483 = sbr.rel (%p481) target = $region24
      $region23: #{image_captioning_forward.6} parent=11 // pred_region
        _
      $region24: #{image_captioning_forward.6} parent=11 // pred_fallthru
        _
      // Predicated region
      $region25: #{image_captioning_forward.6} parent=11 // pred_check
        %p484 = pneg %p161
      $region26: #{image_captioning_forward.6} parent=11 // pred_check_branch
        %486 = sbr.rel (%p484) target = $region28
      $region27: #{image_captioning_forward.6} parent=11 // pred_region
        _
      $region28: #{image_captioning_forward.6} parent=11 // pred_fallthru
        _
      // Predicated region
      $region29: #{image_captioning_forward.6} parent=11 // pred_check
        %p487 = pneg %p182
      $region30: #{image_captioning_forward.6} parent=11 // pred_check_branch
        %489 = sbr.rel (%p487) target = $region32
      $region31: #{image_captioning_forward.6} parent=11 // pred_region
        _
      $region32: #{image_captioning_forward.6} parent=11 // pred_fallthru
        _
      // Predicated region
      $region33: #{image_captioning_forward.6} parent=11 // pred_check
        %p490 = pneg %p203
      $region34: #{image_captioning_forward.6} parent=11 // pred_check_branch
        %492 = sbr.rel (%p490) target = $region36
      $region35: #{image_captioning_forward.6} parent=11 // pred_region
        _
      $region36: #{image_captioning_forward.6} parent=11 // pred_fallthru
        _
      // Predicated region
      $region37: #{image_captioning_forward.6} parent=11 // pred_check
        %p493 = pneg %p224
      $region38: #{image_captioning_forward.6} parent=11 // pred_check_branch
        %495 = sbr.rel (%p493) target = $region40
      $region39: #{image_captioning_forward.6} parent=11 // pred_region
        _
      $region40: #{image_captioning_forward.6} parent=11 // pred_fallthru
        _
      // Predicated region
      $region41: #{image_captioning_forward.6} parent=11 // pred_check
        %p496 = pneg %p245
      $region42: #{image_captioning_forward.6} parent=11 // pred_check_branch
        %498 = sbr.rel (%p496) target = $region44
      $region43: #{image_captioning_forward.6} parent=11 // pred_region
        _
      $region44: #{image_captioning_forward.6} parent=11 // pred_fallthru
        _
      // Predicated region
      $region45: #{image_captioning_forward.6} parent=11 // pred_check
        %p499 = pneg %p266
      $region46: #{image_captioning_forward.6} parent=11 // pred_check_branch
        %501 = sbr.rel (%p499) target = $region48
      $region47: #{image_captioning_forward.6} parent=11 // pred_region
        _
      $region48: #{image_captioning_forward.6} parent=11 // pred_fallthru
        _
      // Predicated region
      $region49: #{image_captioning_forward.6} parent=11 // pred_check
        %p502 = pneg %p287
      $region50: #{image_captioning_forward.6} parent=11 // pred_check_branch
        %504 = sbr.rel (%p502) target = $region52
      $region51: #{image_captioning_forward.6} parent=11 // pred_region
        _
      $region52: #{image_captioning_forward.6} parent=11 // pred_fallthru
        _
      // Predicated region
      $region53: #{image_captioning_forward.6} parent=11 // pred_check
        %p505 = pneg %p308
      $region54: #{image_captioning_forward.6} parent=11 // pred_check_branch
        %507 = sbr.rel (%p505) target = $region56
      $region55: #{image_captioning_forward.6} parent=11 // pred_region
        _
      $region56: #{image_captioning_forward.6} parent=11 // pred_fallthru
        _
      // Predicated region
      $region57: #{image_captioning_forward.6} parent=11 // pred_check
        %p508 = pneg %p329
      $region58: #{image_captioning_forward.6} parent=11 // pred_check_branch
        %510 = sbr.rel (%p508) target = $region60
      $region59: #{image_captioning_forward.6} parent=11 // pred_region
        _
      $region60: #{image_captioning_forward.6} parent=11 // pred_fallthru
        _
      // Predicated region
      $region61: #{image_captioning_forward.6} parent=11 // pred_check
        %p511 = pneg %p350
      $region62: #{image_captioning_forward.6} parent=11 // pred_check_branch
        %513 = sbr.rel (%p511) target = $region64
      $region63: #{image_captioning_forward.6} parent=11 // pred_region
        _
      $region64: #{image_captioning_forward.6} parent=11 // pred_fallthru
        _
      // Predicated region
      $region65: #{image_captioning_forward.6} parent=11 // pred_check
        %p514 = pneg %p371
      $region66: #{image_captioning_forward.6} parent=11 // pred_check_branch
        %516 = sbr.rel (%p514) target = $region68
      $region67: #{image_captioning_forward.6} parent=11 // pred_region
        _
      $region68: #{image_captioning_forward.6} parent=11 // pred_fallthru
        _
      // Predicated region
      $region69: #{image_captioning_forward.6} parent=11 // pred_check
        %p517 = pneg %p392
      $region70: #{image_captioning_forward.6} parent=11 // pred_check_branch
        %519 = sbr.rel (%p517) target = $region72
      $region71: #{image_captioning_forward.6} parent=11 // pred_region
        _
      $region72: #{image_captioning_forward.6} parent=11 // pred_fallthru
        _
      // Predicated region
      $region73: #{image_captioning_forward.6} parent=11 // pred_check
        %p520 = pneg %p413
      $region74: #{image_captioning_forward.6} parent=11 // pred_check_branch
        %522 = sbr.rel (%p520) target = $region76
      $region75: #{image_captioning_forward.6} parent=11 // pred_region
        _
      $region76: #{image_captioning_forward.6} parent=11 // pred_fallthru
        _
      // Predicated region
      $region77: #{image_captioning_forward.6} parent=11 // pred_check
        %p523 = pneg %p434
      $region78: #{image_captioning_forward.6} parent=11 // pred_check_branch
        %525 = sbr.rel (%p523) target = $region80
      $region79: #{image_captioning_forward.6} parent=11 // pred_region
        _
      $region80: #{image_captioning_forward.6} parent=11 // pred_fallthru
        _
    $region12: #{image_captioning_forward.6} parent=5 // pred_fallthru
      _
    %p526 = scmp.lt.s32.totalorder %s25, 2
    // Predicated region
    $region81: #{image_captioning_forward.6} parent=5 // pred_check
      %p527 = pneg %p526
    $region82: #{image_captioning_forward.6} parent=5 // pred_check_branch
      %529 = sbr.rel (%p527) target = $region84
    $region83: #{image_captioning_forward.6} parent=5 // pred_region
      // Predicated region
      $region85: #{image_captioning_forward.6} parent=83 // pred_check
        %p530 = pneg %p45
      $region86: #{image_captioning_forward.6} parent=83 // pred_check_branch
        %532 = sbr.rel (%p530) target = $region88
      $region87: #{image_captioning_forward.6} parent=83 // pred_region
        %p533 = scmp.lt.s32.totalorder %s25, 1
        %s534 = scalar_select %p533, %s25, 1
        %s535 = smul.addr %s534, 8
        %s536 = scalar_lea.vmem %s0, %s535
      $region88: #{image_captioning_forward.6} parent=83 // pred_fallthru
        _
      // Predicated region
      $region89: #{image_captioning_forward.6} parent=83 // pred_check
        %p537 = pneg %p92
      $region90: #{image_captioning_forward.6} parent=83 // pred_check_branch
        %539 = sbr.rel (%p537) target = $region92
      $region91: #{image_captioning_forward.6} parent=83 // pred_region
        %p540 = scmp.lt.s32.totalorder %s25, 1
        %s541 = scalar_select %p540, %s25, 1
        %s542 = smul.addr %s541, 2
        %s543 = smul.addr %s542, 8
        %s544 = scalar_lea.vmem %s2, %s543
      $region92: #{image_captioning_forward.6} parent=83 // pred_fallthru
        _
    $region84: #{image_captioning_forward.6} parent=5 // pred_fallthru
      _
    %p545 = scmp.le.s32.totalorder 1, %s25
    %p546 = scmp.lt.s32.totalorder %s25, 3
    %p547 = pnand %p545, %p546
    %p548 = pneg %p547
    // Predicated region
    $region93: #{image_captioning_forward.6} parent=5 // pred_check
      _
    $region94: #{image_captioning_forward.6} parent=5 // pred_check_branch
      %550 = sbr.rel (%p547) target = $region96
    $region95: #{image_captioning_forward.6} parent=5 // pred_region
      %s551 = ssub.s32 %s25, 1
      %p552 = scmp.lt.s32.totalorder %s30, 1
      %s553 = scalar_select %p552, %s30, 1
      %s554 = smul.addr %s553, 8
      %s555 = scalar_lea.vmem %s0, %s554
      %p556 = pneg %p51
      %p557 = pneg %p48
      %p558 = pneg %p72
      %p559 = pneg %p69
      %p560 = scmp.lt.s32.totalorder %s30, 1
      %s561 = scalar_select %p560, %s30, 1
      %s562 = smul.addr %s561, 2
      %s563 = smul.addr %s562, 8
      %s564 = scalar_lea.vmem %s2, %s563
      %p565 = pneg %p98
      %p566 = pneg %p95
      %p567 = pneg %p119
      %p568 = pneg %p116
      %p569 = pneg %p140
      %p570 = pneg %p137
      %p571 = pneg %p161
      %p572 = pneg %p158
      %p573 = pneg %p182
      %p574 = pneg %p179
      %p575 = pneg %p203
      %p576 = pneg %p200
      %p577 = pneg %p224
      %p578 = pneg %p221
      %p579 = pneg %p245
      %p580 = pneg %p242
      %p581 = pneg %p266
      %p582 = pneg %p263
      %p583 = pneg %p287
      %p584 = pneg %p284
      %p585 = pneg %p308
      %p586 = pneg %p305
      %p587 = pneg %p329
      %p588 = pneg %p326
      %p589 = pneg %p350
      %p590 = pneg %p347
      %p591 = pneg %p371
      %p592 = pneg %p368
      %p593 = pneg %p392
      %p594 = pneg %p389
      %p595 = pneg %p413
      %p596 = pneg %p410
      %p597 = pneg %p434
      %p598 = pneg %p431
      %p599 = pneg %p460
      %p600 = pneg %p457
      %p601 = scmp.lt.s32.totalorder %s30, 1
      %s602 = scalar_select %p601, %s30, 1
      %s603 = smul.addr %s602, 8
      %s604 = scalar_lea.vmem %s19, %s603
      %p605 = scmp.lt.s32.totalorder %s30, 1
      %s606 = scalar_select %p605, %s30, 1
      %s607 = smul.addr %s606, 8
      %s608 = scalar_lea.vmem %s0, %s607
      %p609 = scmp.lt.s32.totalorder %s30, 1
      %s610 = scalar_select %p609, %s30, 1
      %s611 = smul.addr %s610, 2
      %s612 = smul.addr %s611, 8
      %s613 = scalar_lea.vmem %s2, %s612
      %p614 = scmp.lt.s32.totalorder %s30, 1
      %s615 = scalar_select %p614, %s30, 1
      %s616 = smul.addr %s615, 8
      %s617 = scalar_lea.vmem %s19, %s616
      %v618 = vld [vmem:[%s608] sm:$0xff]
      %v619 = vmul.f32 %v618, 5.656854
      %v620 = vld [vmem:[%s1] sm:$0xff]
      %v621 = vadd.f32 %v619, %v620
      %v622 = vld [vmem:[%s613] sm:$0xff]
      %v623 = vld [vmem:[%s613 + $0x8] sm:$0xff]
      %v624 = vld [vmem:[%s13] sm:$0x7]
      %v625 = vld [vmem:[%s14] sm:$0x7]
      %v626 = vld [vmem:[%s3] sm:$0xff]
      %v627 = vld [vmem:[%s3 + $0x8] sm:$0xff]
      %v628 = vld [vmem:[%s3 + $0x10] sm:$0xff]
      %v629 = vld [vmem:[%s3 + $0x18] sm:$0xff]
      %v630 = vld [vmem:[%s4] sm:$0x1]
      %v632 = vlaneseq
      %v633 = vshrl.u32 %v632, 7
      %v634 = vsub.s32 0, %v633
      %v635 = vrot.slane %v630, %v634
      %vm637 = vcmask 261120
      %v639 = vsel %vm637, %v621, 0
      %641 = vmatprep.subr.mxu0 0.0
      %642 = vmatpush1.msra.mxu0 %v626
      %643 = vmatprep.subr.mxu0 0.0
      %644 = vmatpush1.msra.mxu0 %v627
      %645 = vmatprep.subr.mxu0 0.0
      %646 = vmatpush1.msra.mxu0 %v628
      %647 = vmatprep.subr.mxu0 0.0
      %648 = vmatpush1.msra.mxu0 %v629
      %649 = vmatprep.subr.mxu0 0.0
      %650 = vmatpush1.msra.mxu0 0.0
      %651 = vmatprep.subr.mxu0 0.0
      %652 = vmatpush1.msra.mxu0 0.0
      %653 = vmatprep.subr.mxu0 0.0
      %654 = vmatpush1.msra.mxu0 0.0
      %655 = vmatprep.subr.mxu0 0.0
      %656 = vmatpush1.msra.mxu0 0.0
      %657 = vmatprep.subr.mxu0 0.0
      %658 = vmatpush1.msra.mxu0 0.0
      %659 = vmatprep.subr.mxu0 0.0
      %660 = vmatpush1.msra.mxu0 0.0
      %661 = vmatprep.subr.mxu0 0.0
      %662 = vmatpush1.msra.mxu0 0.0
      %663 = vmatprep.subr.mxu0 0.0
      %664 = vmatpush1.msra.mxu0 0.0
      %665 = vmatprep.subr.mxu0 0.0
      %666 = vmatpush1.msra.mxu0 0.0
      %667 = vmatprep.subr.mxu0 0.0
      %668 = vmatpush1.msra.mxu0 0.0
      %669 = vmatprep.subr.mxu0 0.0
      %670 = vmatpush1.msra.mxu0 0.0
      %671 = vmatprep.subr.mxu0 0.0
      %672 = vmatpush1.msra.mxu0 0.0
      %673 = vmatprep.subr.mxu0 0.0
      %674 = vmatpush1.msra.mxu0 0.0
      %675 = vmatprep.subr.mxu0 0.0
      %676 = vmatpush1.msra.mxu0 0.0
      %677 = vmatprep.subr.mxu0 0.0
      %678 = vmatpush1.msra.mxu0 0.0
      %679 = vmatprep.subr.mxu0 0.0
      %680 = vmatpush1.msra.mxu0 0.0
      %681 = vmatprep.subr.mxu0 0.0
      %682 = vmatpush1.msra.mxu0 0.0
      %683 = vmatprep.subr.mxu0 0.0
      %684 = vmatpush1.msra.mxu0 0.0
      %685 = vmatprep.subr.mxu0 0.0
      %686 = vmatpush1.msra.mxu0 0.0
      %687 = vmatprep.subr.mxu0 0.0
      %688 = vmatpush1.msra.mxu0 0.0
      %689 = vmatprep.subr.mxu0 0.0
      %690 = vmatpush1.msra.mxu0 0.0
      %691 = vmatprep.subr.mxu0 0.0
      %692 = vmatpush1.msra.mxu0 0.0
      %693 = vmatprep.subr.mxu0 0.0
      %694 = vmatpush1.msra.mxu0 0.0
      %695 = vmatprep.subr.mxu0 0.0
      %696 = vmatpush1.msra.mxu0 0.0
      %697 = vmatprep.subr.mxu0 0.0
      %698 = vmatpush1.msra.mxu0 0.0
      %699 = vmatprep.subr.mxu0 0.0
      %700 = vmatpush1.msra.mxu0 0.0
      %701 = vmatprep.subr.mxu0 0.0
      %702 = vmatpush1.msra.mxu0 0.0
      %703 = vmatprep.subr.mxu0 0.0
      %704 = vmatpush1.msra.mxu0 0.0
      %705 = vmatprep.mubr.f32.mxu0 0.0
      %706 = vmatmul.mubr.f32.gmra.mrb[0].mxu0 %v639
      %v707 = vpop.f32.mrb[0].mxu0
      %v708 = vadd.f32 %v635, %v707
      %v709 = vpop.f32.mrb[0].mxu0
      %710 = vdwg.mxu0
      %712 = vrot.lane.b32.xlu0 %v708, 96
      %v713 = vpop.permute.xlu0 %712
      %vm714 = vcmask 64512
      %v715 = vsel %vm714, %v708, 0
      %v717 = vsel %vm714, %v713, 0
      %719 = vmatprep.subr.mxu0 0.0
      %720 = vmatpush1.xpose.msra.mxu0 %v717
      %721 = vmatprep.subr.mxu0 0.0
      %722 = vmatpush1.xpose.msra.mxu0 0.0
      %723 = vmatprep.subr.mxu0 0.0
      %724 = vmatpush1.xpose.msra.mxu0 0.0
      %725 = vmatprep.subr.mxu0 0.0
      %726 = vmatpush1.xpose.msra.mxu0 0.0
      %727 = vmatprep.subr.mxu0 0.0
      %728 = vmatpush1.xpose.msra.mxu0 0.0
      %729 = vmatprep.subr.mxu0 0.0
      %730 = vmatpush1.xpose.msra.mxu0 0.0
      %731 = vmatprep.subr.mxu0 0.0
      %732 = vmatpush1.xpose.msra.mxu0 0.0
      %733 = vmatprep.subr.mxu0 0.0
      %734 = vmatpush1.xpose.msra.mxu0 0.0
      %735 = vmatprep.subr.mxu0 0.0
      %736 = vmatpush1.xpose.msra.mxu0 0.0
      %737 = vmatprep.subr.mxu0 0.0
      %738 = vmatpush1.xpose.msra.mxu0 0.0
      %739 = vmatprep.subr.mxu0 0.0
      %740 = vmatpush1.xpose.msra.mxu0 0.0
      %741 = vmatprep.subr.mxu0 0.0
      %742 = vmatpush1.xpose.msra.mxu0 0.0
      %743 = vmatprep.subr.mxu0 0.0
      %744 = vmatpush1.xpose.msra.mxu0 0.0
      %745 = vmatprep.subr.mxu0 0.0
      %746 = vmatpush1.xpose.msra.mxu0 0.0
      %747 = vmatprep.subr.mxu0 0.0
      %748 = vmatpush1.xpose.msra.mxu0 0.0
      %749 = vmatprep.subr.mxu0 0.0
      %750 = vmatpush1.xpose.msra.mxu0 0.0
      %751 = vmatprep.subr.mxu0 0.0
      %752 = vmatpush1.xpose.msra.mxu0 0.0
      %753 = vmatprep.subr.mxu0 0.0
      %754 = vmatpush1.xpose.msra.mxu0 0.0
      %755 = vmatprep.subr.mxu0 0.0
      %756 = vmatpush1.xpose.msra.mxu0 0.0
      %757 = vmatprep.subr.mxu0 0.0
      %758 = vmatpush1.xpose.msra.mxu0 0.0
      %759 = vmatprep.subr.mxu0 0.0
      %760 = vmatpush1.xpose.msra.mxu0 0.0
      %761 = vmatprep.subr.mxu0 0.0
      %762 = vmatpush1.xpose.msra.mxu0 0.0
      %763 = vmatprep.subr.mxu0 0.0
      %764 = vmatpush1.xpose.msra.mxu0 0.0
      %765 = vmatprep.subr.mxu0 0.0
      %766 = vmatpush1.xpose.msra.mxu0 0.0
      %767 = vmatprep.subr.mxu0 0.0
      %768 = vmatpush1.xpose.msra.mxu0 0.0
      %769 = vmatprep.subr.mxu0 0.0
      %770 = vmatpush1.xpose.msra.mxu0 0.0
      %771 = vmatprep.subr.mxu0 0.0
      %772 = vmatpush1.xpose.msra.mxu0 0.0
      %773 = vmatprep.subr.mxu0 0.0
      %774 = vmatpush1.xpose.msra.mxu0 0.0
      %775 = vmatprep.subr.mxu0 0.0
      %776 = vmatpush1.xpose.msra.mxu0 0.0
      %777 = vmatprep.subr.mxu0 0.0
      %778 = vmatpush1.xpose.msra.mxu0 0.0
      %779 = vmatprep.subr.mxu0 0.0
      %780 = vmatpush1.xpose.msra.mxu0 0.0
      %781 = vmatprep.subr.mxu0 0.0
      %782 = vmatpush1.xpose.msra.mxu0 0.0
      %783 = vmatprep.mubr.f32.mxu0 0.0
      %784 = vmatmul.mubr.f32.gmra.mrb[0].mxu0 %v715
      %v785 = vpop.f32.mrb[0].mxu0
      %v786 = vadd.f32 0.0, %v785
      %v787 = vpop.f32.mrb[0].mxu0
      %788 = vdwg.mxu0
      %v789 = vmul.f32 %v786, 0.35355338
      %v790 = vlaneseq
      %v791 = vshrl.u32 %v790, 7
      %v792 = vlaneseq
      %v793 = vand.u32 %v792, 127
      %vm794 = vcmp.gt.s32.totalorder %v793, %v791
      %v795 = vsel %vm794, -1e+30, %v789
      %v796 = vsel %vm714, %v795, -inf
      %797 = vmax.xlane.f32.xlu0 %v796
      %v798 = vpop.xlane.xlu0 %797
      %v799 = vsub.f32 %v795, %v798
      %v800 = vmul.f32 %v799, 1.442695
      %v801 = vpow.pop %v800
      %v802 = vsel %vm714, %v801, 0.0
      %803 = vadd.xlane.f32.xlu0 %v802
      %v804 = vpop.xlane.xlu0 %803
      %805 = vrot.lane.b32.xlu0 %v708, 64
      %v806 = vpop.permute.xlu0 %805
      %v809 = vsel %vm714, %v801, 0
      %811 = vmatprep.subr.mxu0 0.0
      %812 = vmatpush1.msra.mxu0 %v806
      %813 = vmatprep.subr.mxu0 0.0
      %814 = vmatpush1.msra.mxu0 0.0
      %815 = vmatprep.subr.mxu0 0.0
      %816 = vmatpush1.msra.mxu0 0.0
      %817 = vmatprep.subr.mxu0 0.0
      %818 = vmatpush1.msra.mxu0 0.0
      %819 = vmatprep.subr.mxu0 0.0
      %820 = vmatpush1.msra.mxu0 0.0
      %821 = vmatprep.subr.mxu0 0.0
      %822 = vmatpush1.msra.mxu0 0.0
      %823 = vmatprep.subr.mxu0 0.0
      %824 = vmatpush1.msra.mxu0 0.0
      %825 = vmatprep.subr.mxu0 0.0
      %826 = vmatpush1.msra.mxu0 0.0
      %827 = vmatprep.subr.mxu0 0.0
      %828 = vmatpush1.msra.mxu0 0.0
      %829 = vmatprep.subr.mxu0 0.0
      %830 = vmatpush1.msra.mxu0 0.0
      %831 = vmatprep.subr.mxu0 0.0
      %832 = vmatpush1.msra.mxu0 0.0
      %833 = vmatprep.subr.mxu0 0.0
      %834 = vmatpush1.msra.mxu0 0.0
      %835 = vmatprep.subr.mxu0 0.0
      %836 = vmatpush1.msra.mxu0 0.0
      %837 = vmatprep.subr.mxu0 0.0
      %838 = vmatpush1.msra.mxu0 0.0
      %839 = vmatprep.subr.mxu0 0.0
      %840 = vmatpush1.msra.mxu0 0.0
      %841 = vmatprep.subr.mxu0 0.0
      %842 = vmatpush1.msra.mxu0 0.0
      %843 = vmatprep.subr.mxu0 0.0
      %844 = vmatpush1.msra.mxu0 0.0
      %845 = vmatprep.subr.mxu0 0.0
      %846 = vmatpush1.msra.mxu0 0.0
      %847 = vmatprep.subr.mxu0 0.0
      %848 = vmatpush1.msra.mxu0 0.0
      %849 = vmatprep.subr.mxu0 0.0
      %850 = vmatpush1.msra.mxu0 0.0
      %851 = vmatprep.subr.mxu0 0.0
      %852 = vmatpush1.msra.mxu0 0.0
      %853 = vmatprep.subr.mxu0 0.0
      %854 = vmatpush1.msra.mxu0 0.0
      %855 = vmatprep.subr.mxu0 0.0
      %856 = vmatpush1.msra.mxu0 0.0
      %857 = vmatprep.subr.mxu0 0.0
      %858 = vmatpush1.msra.mxu0 0.0
      %859 = vmatprep.subr.mxu0 0.0
      %860 = vmatpush1.msra.mxu0 0.0
      %861 = vmatprep.subr.mxu0 0.0
      %862 = vmatpush1.msra.mxu0 0.0
      %863 = vmatprep.subr.mxu0 0.0
      %864 = vmatpush1.msra.mxu0 0.0
      %865 = vmatprep.subr.mxu0 0.0
      %866 = vmatpush1.msra.mxu0 0.0
      %867 = vmatprep.subr.mxu0 0.0
      %868 = vmatpush1.msra.mxu0 0.0
      %869 = vmatprep.subr.mxu0 0.0
      %870 = vmatpush1.msra.mxu0 0.0
      %871 = vmatprep.subr.mxu0 0.0
      %872 = vmatpush1.msra.mxu0 0.0
      %873 = vmatprep.subr.mxu0 0.0
      %874 = vmatpush1.msra.mxu0 0.0
      %875 = vmatprep.mubr.f32.mxu0 0.0
      %876 = vmatmul.mubr.f32.gmra.mrb[0].mxu0 %v809
      %v877 = vpop.f32.mrb[0].mxu0
      %v878 = vadd.f32 0.0, %v877
      %v879 = vpop.f32.mrb[0].mxu0
      %880 = vdwg.mxu0
      %v881 = vrcp.pop %v804
      %v882 = vmul.f32 %v878, %v881
      %883 = vst.msk [vmem:[#allocation2] sm:$0xff] %vm714, %v882
      %884 = vrot.lane.b32.xlu0 %v708, 120
      %v885 = vpop.permute.xlu0 %884
      %886 = vrot.lane.b32.xlu0 %v708, 88
      %v887 = vpop.permute.xlu0 %886
      %v888 = vsel %vm714, %v885, 0
      %v890 = vsel %vm714, %v887, 0
      %892 = vmatprep.subr.mxu0 0.0
      %893 = vmatpush1.xpose.msra.mxu0 %v890
      %894 = vmatprep.subr.mxu0 0.0
      %895 = vmatpush1.xpose.msra.mxu0 0.0
      %896 = vmatprep.subr.mxu0 0.0
      %897 = vmatpush1.xpose.msra.mxu0 0.0
      %898 = vmatprep.subr.mxu0 0.0
      %899 = vmatpush1.xpose.msra.mxu0 0.0
      %900 = vmatprep.subr.mxu0 0.0
      %901 = vmatpush1.xpose.msra.mxu0 0.0
      %902 = vmatprep.subr.mxu0 0.0
      %903 = vmatpush1.xpose.msra.mxu0 0.0
      %904 = vmatprep.subr.mxu0 0.0
      %905 = vmatpush1.xpose.msra.mxu0 0.0
      %906 = vmatprep.subr.mxu0 0.0
      %907 = vmatpush1.xpose.msra.mxu0 0.0
      %908 = vmatprep.subr.mxu0 0.0
      %909 = vmatpush1.xpose.msra.mxu0 0.0
      %910 = vmatprep.subr.mxu0 0.0
      %911 = vmatpush1.xpose.msra.mxu0 0.0
      %912 = vmatprep.subr.mxu0 0.0
      %913 = vmatpush1.xpose.msra.mxu0 0.0
      %914 = vmatprep.subr.mxu0 0.0
      %915 = vmatpush1.xpose.msra.mxu0 0.0
      %916 = vmatprep.subr.mxu0 0.0
      %917 = vmatpush1.xpose.msra.mxu0 0.0
      %918 = vmatprep.subr.mxu0 0.0
      %919 = vmatpush1.xpose.msra.mxu0 0.0
      %920 = vmatprep.subr.mxu0 0.0
      %921 = vmatpush1.xpose.msra.mxu0 0.0
      %922 = vmatprep.subr.mxu0 0.0
      %923 = vmatpush1.xpose.msra.mxu0 0.0
      %924 = vmatprep.subr.mxu0 0.0
      %925 = vmatpush1.xpose.msra.mxu0 0.0
      %926 = vmatprep.subr.mxu0 0.0
      %927 = vmatpush1.xpose.msra.mxu0 0.0
      %928 = vmatprep.subr.mxu0 0.0
      %929 = vmatpush1.xpose.msra.mxu0 0.0
      %930 = vmatprep.subr.mxu0 0.0
      %931 = vmatpush1.xpose.msra.mxu0 0.0
      %932 = vmatprep.subr.mxu0 0.0
      %933 = vmatpush1.xpose.msra.mxu0 0.0
      %934 = vmatprep.subr.mxu0 0.0
      %935 = vmatpush1.xpose.msra.mxu0 0.0
      %936 = vmatprep.subr.mxu0 0.0
      %937 = vmatpush1.xpose.msra.mxu0 0.0
      %938 = vmatprep.subr.mxu0 0.0
      %939 = vmatpush1.xpose.msra.mxu0 0.0
      %940 = vmatprep.subr.mxu0 0.0
      %941 = vmatpush1.xpose.msra.mxu0 0.0
      %942 = vmatprep.subr.mxu0 0.0
      %943 = vmatpush1.xpose.msra.mxu0 0.0
      %944 = vmatprep.subr.mxu0 0.0
      %945 = vmatpush1.xpose.msra.mxu0 0.0
      %946 = vmatprep.subr.mxu0 0.0
      %947 = vmatpush1.xpose.msra.mxu0 0.0
      %948 = vmatprep.subr.mxu0 0.0
      %949 = vmatpush1.xpose.msra.mxu0 0.0
      %950 = vmatprep.subr.mxu0 0.0
      %951 = vmatpush1.xpose.msra.mxu0 0.0
      %952 = vmatprep.subr.mxu0 0.0
      %953 = vmatpush1.xpose.msra.mxu0 0.0
      %954 = vmatprep.subr.mxu0 0.0
      %955 = vmatpush1.xpose.msra.mxu0 0.0
      %956 = vmatprep.mubr.f32.mxu0 0.0
      %957 = vmatmul.mubr.f32.gmra.mrb[0].mxu0 %v888
      %v958 = vpop.f32.mrb[0].mxu0
      %v959 = vadd.f32 0.0, %v958
      %v960 = vpop.f32.mrb[0].mxu0
      %961 = vdwg.mxu0
      %v962 = vmul.f32 %v959, 0.35355338
      %v963 = vsel %vm794, -1e+30, %v962
      %v964 = vsel %vm714, %v963, -inf
      %965 = vmax.xlane.f32.xlu0 %v964
      %v966 = vpop.xlane.xlu0 %965
      %v967 = vsub.f32 %v963, %v966
      %v968 = vmul.f32 %v967, 1.442695
      %v969 = vpow.pop %v968
      %v970 = vsel %vm714, %v969, 0.0
      %971 = vadd.xlane.f32.xlu0 %v970
      %v972 = vpop.xlane.xlu0 %971
      %973 = vrot.lane.b32.xlu0 %v708, 56
      %v974 = vpop.permute.xlu0 %973
      %v977 = vsel %vm714, %v969, 0
      %979 = vmatprep.subr.mxu0 0.0
      %980 = vmatpush1.msra.mxu0 %v974
      %981 = vmatprep.subr.mxu0 0.0
      %982 = vmatpush1.msra.mxu0 0.0
      %983 = vmatprep.subr.mxu0 0.0
      %984 = vmatpush1.msra.mxu0 0.0
      %985 = vmatprep.subr.mxu0 0.0
      %986 = vmatpush1.msra.mxu0 0.0
      %987 = vmatprep.subr.mxu0 0.0
      %988 = vmatpush1.msra.mxu0 0.0
      %989 = vmatprep.subr.mxu0 0.0
      %990 = vmatpush1.msra.mxu0 0.0
      %991 = vmatprep.subr.mxu0 0.0
      %992 = vmatpush1.msra.mxu0 0.0
      %993 = vmatprep.subr.mxu0 0.0
      %994 = vmatpush1.msra.mxu0 0.0
      %995 = vmatprep.subr.mxu0 0.0
      %996 = vmatpush1.msra.mxu0 0.0
      %997 = vmatprep.subr.mxu0 0.0
      %998 = vmatpush1.msra.mxu0 0.0
      %999 = vmatprep.subr.mxu0 0.0
      %1000 = vmatpush1.msra.mxu0 0.0
      %1001 = vmatprep.subr.mxu0 0.0
      %1002 = vmatpush1.msra.mxu0 0.0
      %1003 = vmatprep.subr.mxu0 0.0
      %1004 = vmatpush1.msra.mxu0 0.0
      %1005 = vmatprep.subr.mxu0 0.0
      %1006 = vmatpush1.msra.mxu0 0.0
      %1007 = vmatprep.subr.mxu0 0.0
      %1008 = vmatpush1.msra.mxu0 0.0
      %1009 = vmatprep.subr.mxu0 0.0
      %1010 = vmatpush1.msra.mxu0 0.0
      %1011 = vmatprep.subr.mxu0 0.0
      %1012 = vmatpush1.msra.mxu0 0.0
      %1013 = vmatprep.subr.mxu0 0.0
      %1014 = vmatpush1.msra.mxu0 0.0
      %1015 = vmatprep.subr.mxu0 0.0
      %1016 = vmatpush1.msra.mxu0 0.0
      %1017 = vmatprep.subr.mxu0 0.0
      %1018 = vmatpush1.msra.mxu0 0.0
      %1019 = vmatprep.subr.mxu0 0.0
      %1020 = vmatpush1.msra.mxu0 0.0
      %1021 = vmatprep.subr.mxu0 0.0
      %1022 = vmatpush1.msra.mxu0 0.0
      %1023 = vmatprep.subr.mxu0 0.0
      %1024 = vmatpush1.msra.mxu0 0.0
      %1025 = vmatprep.subr.mxu0 0.0
      %1026 = vmatpush1.msra.mxu0 0.0
      %1027 = vmatprep.subr.mxu0 0.0
      %1028 = vmatpush1.msra.mxu0 0.0
      %1029 = vmatprep.subr.mxu0 0.0
      %1030 = vmatpush1.msra.mxu0 0.0
      %1031 = vmatprep.subr.mxu0 0.0
      %1032 = vmatpush1.msra.mxu0 0.0
      %1033 = vmatprep.subr.mxu0 0.0
      %1034 = vmatpush1.msra.mxu0 0.0
      %1035 = vmatprep.subr.mxu0 0.0
      %1036 = vmatpush1.msra.mxu0 0.0
      %1037 = vmatprep.subr.mxu0 0.0
      %1038 = vmatpush1.msra.mxu0 0.0
      %1039 = vmatprep.subr.mxu0 0.0
      %1040 = vmatpush1.msra.mxu0 0.0
      %1041 = vmatprep.subr.mxu0 0.0
      %1042 = vmatpush1.msra.mxu0 0.0
      %1043 = vmatprep.mubr.f32.mxu0 0.0
      %1044 = vmatmul.mubr.f32.gmra.mrb[0].mxu0 %v977
      %v1045 = vpop.f32.mrb[0].mxu0
      %v1046 = vadd.f32 0.0, %v1045
      %v1047 = vpop.f32.mrb[0].mxu0
      %1048 = vdwg.mxu0
      %v1049 = vrcp.pop %v972
      %v1050 = vmul.f32 %v1046, %v1049
      %1052 = vrot.lane.b32.xlu0 %v1050, 8
      %v1053 = vpop.permute.xlu0 %1052
      %vm1055 = vcmask 130112
      %1056 = vst.msk [vmem:[#allocation2] sm:$0xff] %vm1055, %v1053
      %1057 = vrot.lane.b32.xlu0 %v708, 112
      %v1058 = vpop.permute.xlu0 %1057
      %1059 = vrot.lane.b32.xlu0 %v708, 80
      %v1060 = vpop.permute.xlu0 %1059
      %v1061 = vsel %vm714, %v1058, 0
      %v1063 = vsel %vm714, %v1060, 0
      %1065 = vmatprep.subr.mxu0 0.0
      %1066 = vmatpush1.xpose.msra.mxu0 %v1063
      %1067 = vmatprep.subr.mxu0 0.0
      %1068 = vmatpush1.xpose.msra.mxu0 0.0
      %1069 = vmatprep.subr.mxu0 0.0
      %1070 = vmatpush1.xpose.msra.mxu0 0.0
      %1071 = vmatprep.subr.mxu0 0.0
      %1072 = vmatpush1.xpose.msra.mxu0 0.0
      %1073 = vmatprep.subr.mxu0 0.0
      %1074 = vmatpush1.xpose.msra.mxu0 0.0
      %1075 = vmatprep.subr.mxu0 0.0
      %1076 = vmatpush1.xpose.msra.mxu0 0.0
      %1077 = vmatprep.subr.mxu0 0.0
      %1078 = vmatpush1.xpose.msra.mxu0 0.0
      %1079 = vmatprep.subr.mxu0 0.0
      %1080 = vmatpush1.xpose.msra.mxu0 0.0
      %1081 = vmatprep.subr.mxu0 0.0
      %1082 = vmatpush1.xpose.msra.mxu0 0.0
      %1083 = vmatprep.subr.mxu0 0.0
      %1084 = vmatpush1.xpose.msra.mxu0 0.0
      %1085 = vmatprep.subr.mxu0 0.0
      %1086 = vmatpush1.xpose.msra.mxu0 0.0
      %1087 = vmatprep.subr.mxu0 0.0
      %1088 = vmatpush1.xpose.msra.mxu0 0.0
      %1089 = vmatprep.subr.mxu0 0.0
      %1090 = vmatpush1.xpose.msra.mxu0 0.0
      %1091 = vmatprep.subr.mxu0 0.0
      %1092 = vmatpush1.xpose.msra.mxu0 0.0
      %1093 = vmatprep.subr.mxu0 0.0
      %1094 = vmatpush1.xpose.msra.mxu0 0.0
      %1095 = vmatprep.subr.mxu0 0.0
      %1096 = vmatpush1.xpose.msra.mxu0 0.0
      %1097 = vmatprep.subr.mxu0 0.0
      %1098 = vmatpush1.xpose.msra.mxu0 0.0
      %1099 = vmatprep.subr.mxu0 0.0
      %1100 = vmatpush1.xpose.msra.mxu0 0.0
      %1101 = vmatprep.subr.mxu0 0.0
      %1102 = vmatpush1.xpose.msra.mxu0 0.0
      %1103 = vmatprep.subr.mxu0 0.0
      %1104 = vmatpush1.xpose.msra.mxu0 0.0
      %1105 = vmatprep.subr.mxu0 0.0
      %1106 = vmatpush1.xpose.msra.mxu0 0.0
      %1107 = vmatprep.subr.mxu0 0.0
      %1108 = vmatpush1.xpose.msra.mxu0 0.0
      %1109 = vmatprep.subr.mxu0 0.0
      %1110 = vmatpush1.xpose.msra.mxu0 0.0
      %1111 = vmatprep.subr.mxu0 0.0
      %1112 = vmatpush1.xpose.msra.mxu0 0.0
      %1113 = vmatprep.subr.mxu0 0.0
      %1114 = vmatpush1.xpose.msra.mxu0 0.0
      %1115 = vmatprep.subr.mxu0 0.0
      %1116 = vmatpush1.xpose.msra.mxu0 0.0
      %1117 = vmatprep.subr.mxu0 0.0
      %1118 = vmatpush1.xpose.msra.mxu0 0.0
      %1119 = vmatprep.subr.mxu0 0.0
      %1120 = vmatpush1.xpose.msra.mxu0 0.0
      %1121 = vmatprep.subr.mxu0 0.0
      %1122 = vmatpush1.xpose.msra.mxu0 0.0
      %1123 = vmatprep.subr.mxu0 0.0
      %1124 = vmatpush1.xpose.msra.mxu0 0.0
      %1125 = vmatprep.subr.mxu0 0.0
      %1126 = vmatpush1.xpose.msra.mxu0 0.0
      %1127 = vmatprep.subr.mxu0 0.0
      %1128 = vmatpush1.xpose.msra.mxu0 0.0
      %1129 = vmatprep.mubr.f32.mxu0 0.0
      %1130 = vmatmul.mubr.f32.gmra.mrb[0].mxu0 %v1061
      %v1131 = vpop.f32.mrb[0].mxu0
      %v1132 = vadd.f32 0.0, %v1131
      %v1133 = vpop.f32.mrb[0].mxu0
      %1134 = vdwg.mxu0
      %v1135 = vmul.f32 %v1132, 0.35355338
      %v1136 = vsel %vm794, -1e+30, %v1135
      %v1137 = vsel %vm714, %v1136, -inf
      %1138 = vmax.xlane.f32.xlu0 %v1137
      %v1139 = vpop.xlane.xlu0 %1138
      %v1140 = vsub.f32 %v1136, %v1139
      %v1141 = vmul.f32 %v1140, 1.442695
      %v1142 = vpow.pop %v1141
      %v1143 = vsel %vm714, %v1142, 0.0
      %1144 = vadd.xlane.f32.xlu0 %v1143
      %v1145 = vpop.xlane.xlu0 %1144
      %1146 = vrot.lane.b32.xlu0 %v708, 48
      %v1147 = vpop.permute.xlu0 %1146
      %v1150 = vsel %vm714, %v1142, 0
      %1152 = vmatprep.subr.mxu0 0.0
      %1153 = vmatpush1.msra.mxu0 %v1147
      %1154 = vmatprep.subr.mxu0 0.0
      %1155 = vmatpush1.msra.mxu0 0.0
      %1156 = vmatprep.subr.mxu0 0.0
      %1157 = vmatpush1.msra.mxu0 0.0
      %1158 = vmatprep.subr.mxu0 0.0
      %1159 = vmatpush1.msra.mxu0 0.0
      %1160 = vmatprep.subr.mxu0 0.0
      %1161 = vmatpush1.msra.mxu0 0.0
      %1162 = vmatprep.subr.mxu0 0.0
      %1163 = vmatpush1.msra.mxu0 0.0
      %1164 = vmatprep.subr.mxu0 0.0
      %1165 = vmatpush1.msra.mxu0 0.0
      %1166 = vmatprep.subr.mxu0 0.0
      %1167 = vmatpush1.msra.mxu0 0.0
      %1168 = vmatprep.subr.mxu0 0.0
      %1169 = vmatpush1.msra.mxu0 0.0
      %1170 = vmatprep.subr.mxu0 0.0
      %1171 = vmatpush1.msra.mxu0 0.0
      %1172 = vmatprep.subr.mxu0 0.0
      %1173 = vmatpush1.msra.mxu0 0.0
      %1174 = vmatprep.subr.mxu0 0.0
      %1175 = vmatpush1.msra.mxu0 0.0
      %1176 = vmatprep.subr.mxu0 0.0
      %1177 = vmatpush1.msra.mxu0 0.0
      %1178 = vmatprep.subr.mxu0 0.0
      %1179 = vmatpush1.msra.mxu0 0.0
      %1180 = vmatprep.subr.mxu0 0.0
      %1181 = vmatpush1.msra.mxu0 0.0
      %1182 = vmatprep.subr.mxu0 0.0
      %1183 = vmatpush1.msra.mxu0 0.0
      %1184 = vmatprep.subr.mxu0 0.0
      %1185 = vmatpush1.msra.mxu0 0.0
      %1186 = vmatprep.subr.mxu0 0.0
      %1187 = vmatpush1.msra.mxu0 0.0
      %1188 = vmatprep.subr.mxu0 0.0
      %1189 = vmatpush1.msra.mxu0 0.0
      %1190 = vmatprep.subr.mxu0 0.0
      %1191 = vmatpush1.msra.mxu0 0.0
      %1192 = vmatprep.subr.mxu0 0.0
      %1193 = vmatpush1.msra.mxu0 0.0
      %1194 = vmatprep.subr.mxu0 0.0
      %1195 = vmatpush1.msra.mxu0 0.0
      %1196 = vmatprep.subr.mxu0 0.0
      %1197 = vmatpush1.msra.mxu0 0.0
      %1198 = vmatprep.subr.mxu0 0.0
      %1199 = vmatpush1.msra.mxu0 0.0
      %1200 = vmatprep.subr.mxu0 0.0
      %1201 = vmatpush1.msra.mxu0 0.0
      %1202 = vmatprep.subr.mxu0 0.0
      %1203 = vmatpush1.msra.mxu0 0.0
      %1204 = vmatprep.subr.mxu0 0.0
      %1205 = vmatpush1.msra.mxu0 0.0
      %1206 = vmatprep.subr.mxu0 0.0
      %1207 = vmatpush1.msra.mxu0 0.0
      %1208 = vmatprep.subr.mxu0 0.0
      %1209 = vmatpush1.msra.mxu0 0.0
      %1210 = vmatprep.subr.mxu0 0.0
      %1211 = vmatpush1.msra.mxu0 0.0
      %1212 = vmatprep.subr.mxu0 0.0
      %1213 = vmatpush1.msra.mxu0 0.0
      %1214 = vmatprep.subr.mxu0 0.0
      %1215 = vmatpush1.msra.mxu0 0.0
      %1216 = vmatprep.mubr.f32.mxu0 0.0
      %1217 = vmatmul.mubr.f32.gmra.mrb[0].mxu0 %v1150
      %v1218 = vpop.f32.mrb[0].mxu0
      %v1219 = vadd.f32 0.0, %v1218
      %v1220 = vpop.f32.mrb[0].mxu0
      %1221 = vdwg.mxu0
      %v1222 = vrcp.pop %v1145
      %v1223 = vmul.f32 %v1219, %v1222
      %1225 = vrot.lane.b32.xlu0 %v1223, 16
      %v1226 = vpop.permute.xlu0 %1225
      %vm1228 = vcmask 195712
      %1229 = vst.msk [vmem:[#allocation2] sm:$0xff] %vm1228, %v1226
      %1230 = vrot.lane.b32.xlu0 %v708, 104
      %v1231 = vpop.permute.xlu0 %1230
      %1232 = vrot.lane.b32.xlu0 %v708, 72
      %v1233 = vpop.permute.xlu0 %1232
      %v1234 = vsel %vm714, %v1231, 0
      %v1236 = vsel %vm714, %v1233, 0
      %1238 = vmatprep.subr.mxu0 0.0
      %1239 = vmatpush1.xpose.msra.mxu0 %v1236
      %1240 = vmatprep.subr.mxu0 0.0
      %1241 = vmatpush1.xpose.msra.mxu0 0.0
      %1242 = vmatprep.subr.mxu0 0.0
      %1243 = vmatpush1.xpose.msra.mxu0 0.0
      %1244 = vmatprep.subr.mxu0 0.0
      %1245 = vmatpush1.xpose.msra.mxu0 0.0
      %1246 = vmatprep.subr.mxu0 0.0
      %1247 = vmatpush1.xpose.msra.mxu0 0.0
      %1248 = vmatprep.subr.mxu0 0.0
      %1249 = vmatpush1.xpose.msra.mxu0 0.0
      %1250 = vmatprep.subr.mxu0 0.0
      %1251 = vmatpush1.xpose.msra.mxu0 0.0
      %1252 = vmatprep.subr.mxu0 0.0
      %1253 = vmatpush1.xpose.msra.mxu0 0.0
      %1254 = vmatprep.subr.mxu0 0.0
      %1255 = vmatpush1.xpose.msra.mxu0 0.0
      %1256 = vmatprep.subr.mxu0 0.0
      %1257 = vmatpush1.xpose.msra.mxu0 0.0
      %1258 = vmatprep.subr.mxu0 0.0
      %1259 = vmatpush1.xpose.msra.mxu0 0.0
      %1260 = vmatprep.subr.mxu0 0.0
      %1261 = vmatpush1.xpose.msra.mxu0 0.0
      %1262 = vmatprep.subr.mxu0 0.0
      %1263 = vmatpush1.xpose.msra.mxu0 0.0
      %1264 = vmatprep.subr.mxu0 0.0
      %1265 = vmatpush1.xpose.msra.mxu0 0.0
      %1266 = vmatprep.subr.mxu0 0.0
      %1267 = vmatpush1.xpose.msra.mxu0 0.0
      %1268 = vmatprep.subr.mxu0 0.0
      %1269 = vmatpush1.xpose.msra.mxu0 0.0
      %1270 = vmatprep.subr.mxu0 0.0
      %1271 = vmatpush1.xpose.msra.mxu0 0.0
      %1272 = vmatprep.subr.mxu0 0.0
      %1273 = vmatpush1.xpose.msra.mxu0 0.0
      %1274 = vmatprep.subr.mxu0 0.0
      %1275 = vmatpush1.xpose.msra.mxu0 0.0
      %1276 = vmatprep.subr.mxu0 0.0
      %1277 = vmatpush1.xpose.msra.mxu0 0.0
      %1278 = vmatprep.subr.mxu0 0.0
      %1279 = vmatpush1.xpose.msra.mxu0 0.0
      %1280 = vmatprep.subr.mxu0 0.0
      %1281 = vmatpush1.xpose.msra.mxu0 0.0
      %1282 = vmatprep.subr.mxu0 0.0
      %1283 = vmatpush1.xpose.msra.mxu0 0.0
      %1284 = vmatprep.subr.mxu0 0.0
      %1285 = vmatpush1.xpose.msra.mxu0 0.0
      %1286 = vmatprep.subr.mxu0 0.0
      %1287 = vmatpush1.xpose.msra.mxu0 0.0
      %1288 = vmatprep.subr.mxu0 0.0
      %1289 = vmatpush1.xpose.msra.mxu0 0.0
      %1290 = vmatprep.subr.mxu0 0.0
      %1291 = vmatpush1.xpose.msra.mxu0 0.0
      %1292 = vmatprep.subr.mxu0 0.0
      %1293 = vmatpush1.xpose.msra.mxu0 0.0
      %1294 = vmatprep.subr.mxu0 0.0
      %1295 = vmatpush1.xpose.msra.mxu0 0.0
      %1296 = vmatprep.subr.mxu0 0.0
      %1297 = vmatpush1.xpose.msra.mxu0 0.0
      %1298 = vmatprep.subr.mxu0 0.0
      %1299 = vmatpush1.xpose.msra.mxu0 0.0
      %1300 = vmatprep.subr.mxu0 0.0
      %1301 = vmatpush1.xpose.msra.mxu0 0.0
      %1302 = vmatprep.mubr.f32.mxu0 0.0
      %1303 = vmatmul.mubr.f32.gmra.mrb[0].mxu0 %v1234
      %v1304 = vpop.f32.mrb[0].mxu0
      %v1305 = vadd.f32 0.0, %v1304
      %v1306 = vpop.f32.mrb[0].mxu0
      %1307 = vdwg.mxu0
      %v1308 = vmul.f32 %v1305, 0.35355338
      %v1309 = vsel %vm794, -1e+30, %v1308
      %v1310 = vsel %vm714, %v1309, -inf
      %1311 = vmax.xlane.f32.xlu0 %v1310
      %v1312 = vpop.xlane.xlu0 %1311
      %v1313 = vsub.f32 %v1309, %v1312
      %v1314 = vmul.f32 %v1313, 1.442695
      %v1315 = vpow.pop %v1314
      %v1316 = vsel %vm714, %v1315, 0.0
      %1317 = vadd.xlane.f32.xlu0 %v1316
      %v1318 = vpop.xlane.xlu0 %1317
      %1319 = vrot.lane.b32.xlu0 %v708, 40
      %v1320 = vpop.permute.xlu0 %1319
      %v1323 = vsel %vm714, %v1315, 0
      %1325 = vmatprep.subr.mxu0 0.0
      %1326 = vmatpush1.msra.mxu0 %v1320
      %1327 = vmatprep.subr.mxu0 0.0
      %1328 = vmatpush1.msra.mxu0 0.0
      %1329 = vmatprep.subr.mxu0 0.0
      %1330 = vmatpush1.msra.mxu0 0.0
      %1331 = vmatprep.subr.mxu0 0.0
      %1332 = vmatpush1.msra.mxu0 0.0
      %1333 = vmatprep.subr.mxu0 0.0
      %1334 = vmatpush1.msra.mxu0 0.0
      %1335 = vmatprep.subr.mxu0 0.0
      %1336 = vmatpush1.msra.mxu0 0.0
      %1337 = vmatprep.subr.mxu0 0.0
      %1338 = vmatpush1.msra.mxu0 0.0
      %1339 = vmatprep.subr.mxu0 0.0
      %1340 = vmatpush1.msra.mxu0 0.0
      %1341 = vmatprep.subr.mxu0 0.0
      %1342 = vmatpush1.msra.mxu0 0.0
      %1343 = vmatprep.subr.mxu0 0.0
      %1344 = vmatpush1.msra.mxu0 0.0
      %1345 = vmatprep.subr.mxu0 0.0
      %1346 = vmatpush1.msra.mxu0 0.0
      %1347 = vmatprep.subr.mxu0 0.0
      %1348 = vmatpush1.msra.mxu0 0.0
      %1349 = vmatprep.subr.mxu0 0.0
      %1350 = vmatpush1.msra.mxu0 0.0
      %1351 = vmatprep.subr.mxu0 0.0
      %1352 = vmatpush1.msra.mxu0 0.0
      %1353 = vmatprep.subr.mxu0 0.0
      %1354 = vmatpush1.msra.mxu0 0.0
      %1355 = vmatprep.subr.mxu0 0.0
      %1356 = vmatpush1.msra.mxu0 0.0
      %1357 = vmatprep.subr.mxu0 0.0
      %1358 = vmatpush1.msra.mxu0 0.0
      %1359 = vmatprep.subr.mxu0 0.0
      %1360 = vmatpush1.msra.mxu0 0.0
      %1361 = vmatprep.subr.mxu0 0.0
      %1362 = vmatpush1.msra.mxu0 0.0
      %1363 = vmatprep.subr.mxu0 0.0
      %1364 = vmatpush1.msra.mxu0 0.0
      %1365 = vmatprep.subr.mxu0 0.0
      %1366 = vmatpush1.msra.mxu0 0.0
      %1367 = vmatprep.subr.mxu0 0.0
      %1368 = vmatpush1.msra.mxu0 0.0
      %1369 = vmatprep.subr.mxu0 0.0
      %1370 = vmatpush1.msra.mxu0 0.0
      %1371 = vmatprep.subr.mxu0 0.0
      %1372 = vmatpush1.msra.mxu0 0.0
      %1373 = vmatprep.subr.mxu0 0.0
      %1374 = vmatpush1.msra.mxu0 0.0
      %1375 = vmatprep.subr.mxu0 0.0
      %1376 = vmatpush1.msra.mxu0 0.0
      %1377 = vmatprep.subr.mxu0 0.0
      %1378 = vmatpush1.msra.mxu0 0.0
      %1379 = vmatprep.subr.mxu0 0.0
      %1380 = vmatpush1.msra.mxu0 0.0
      %1381 = vmatprep.subr.mxu0 0.0
      %1382 = vmatpush1.msra.mxu0 0.0
      %1383 = vmatprep.subr.mxu0 0.0
      %1384 = vmatpush1.msra.mxu0 0.0
      %1385 = vmatprep.subr.mxu0 0.0
      %1386 = vmatpush1.msra.mxu0 0.0
      %1387 = vmatprep.subr.mxu0 0.0
      %1388 = vmatpush1.msra.mxu0 0.0
      %1389 = vmatprep.mubr.f32.mxu0 0.0
      %1390 = vmatmul.mubr.f32.gmra.mrb[0].mxu0 %v1323
      %v1391 = vpop.f32.mrb[0].mxu0
      %v1392 = vadd.f32 0.0, %v1391
      %v1393 = vpop.f32.mrb[0].mxu0
      %1394 = vdwg.mxu0
      %v1395 = vrcp.pop %v1318
      %v1396 = vmul.f32 %v1392, %v1395
      %1398 = vrot.lane.b32.xlu0 %v1396, 24
      %v1399 = vpop.permute.xlu0 %1398
      %vm1401 = vcmask 261312
      %1402 = vst.msk [vmem:[#allocation2] sm:$0xff] %vm1401, %v1399
      %v1403 = vld [vmem:[#allocation2] sm:$0xff]
      %v1404 = vld [vmem:[%s5] sm:$0xff]
      %v1405 = vld [vmem:[%s5 + $0x8] sm:$0xff]
      %v1406 = vld [vmem:[%s5 + $0x10] sm:$0xff]
      %v1407 = vld [vmem:[%s5 + $0x18] sm:$0xff]
      %v1408 = vld [vmem:[%s6] sm:$0x1]
      %v1410 = vlaneseq
      %v1411 = vshrl.u32 %v1410, 7
      %v1412 = vsub.s32 0, %v1411
      %v1413 = vrot.slane %v1408, %v1412
      %v1416 = vsel %vm637, %v1403, 0
      %1418 = vmatprep.subr.mxu0 0.0
      %1419 = vmatpush1.msra.mxu0 %v1404
      %1420 = vmatprep.subr.mxu0 0.0
      %1421 = vmatpush1.msra.mxu0 %v1405
      %1422 = vmatprep.subr.mxu0 0.0
      %1423 = vmatpush1.msra.mxu0 %v1406
      %1424 = vmatprep.subr.mxu0 0.0
      %1425 = vmatpush1.msra.mxu0 %v1407
      %1426 = vmatprep.subr.mxu0 0.0
      %1427 = vmatpush1.msra.mxu0 0.0
      %1428 = vmatprep.subr.mxu0 0.0
      %1429 = vmatpush1.msra.mxu0 0.0
      %1430 = vmatprep.subr.mxu0 0.0
      %1431 = vmatpush1.msra.mxu0 0.0
      %1432 = vmatprep.subr.mxu0 0.0
      %1433 = vmatpush1.msra.mxu0 0.0
      %1434 = vmatprep.subr.mxu0 0.0
      %1435 = vmatpush1.msra.mxu0 0.0
      %1436 = vmatprep.subr.mxu0 0.0
      %1437 = vmatpush1.msra.mxu0 0.0
      %1438 = vmatprep.subr.mxu0 0.0
      %1439 = vmatpush1.msra.mxu0 0.0
      %1440 = vmatprep.subr.mxu0 0.0
      %1441 = vmatpush1.msra.mxu0 0.0
      %1442 = vmatprep.subr.mxu0 0.0
      %1443 = vmatpush1.msra.mxu0 0.0
      %1444 = vmatprep.subr.mxu0 0.0
      %1445 = vmatpush1.msra.mxu0 0.0
      %1446 = vmatprep.subr.mxu0 0.0
      %1447 = vmatpush1.msra.mxu0 0.0
      %1448 = vmatprep.subr.mxu0 0.0
      %1449 = vmatpush1.msra.mxu0 0.0
      %1450 = vmatprep.subr.mxu0 0.0
      %1451 = vmatpush1.msra.mxu0 0.0
      %1452 = vmatprep.subr.mxu0 0.0
      %1453 = vmatpush1.msra.mxu0 0.0
      %1454 = vmatprep.subr.mxu0 0.0
      %1455 = vmatpush1.msra.mxu0 0.0
      %1456 = vmatprep.subr.mxu0 0.0
      %1457 = vmatpush1.msra.mxu0 0.0
      %1458 = vmatprep.subr.mxu0 0.0
      %1459 = vmatpush1.msra.mxu0 0.0
      %1460 = vmatprep.subr.mxu0 0.0
      %1461 = vmatpush1.msra.mxu0 0.0
      %1462 = vmatprep.subr.mxu0 0.0
      %1463 = vmatpush1.msra.mxu0 0.0
      %1464 = vmatprep.subr.mxu0 0.0
      %1465 = vmatpush1.msra.mxu0 0.0
      %1466 = vmatprep.subr.mxu0 0.0
      %1467 = vmatpush1.msra.mxu0 0.0
      %1468 = vmatprep.subr.mxu0 0.0
      %1469 = vmatpush1.msra.mxu0 0.0
      %1470 = vmatprep.subr.mxu0 0.0
      %1471 = vmatpush1.msra.mxu0 0.0
      %1472 = vmatprep.subr.mxu0 0.0
      %1473 = vmatpush1.msra.mxu0 0.0
      %1474 = vmatprep.subr.mxu0 0.0
      %1475 = vmatpush1.msra.mxu0 0.0
      %1476 = vmatprep.subr.mxu0 0.0
      %1477 = vmatpush1.msra.mxu0 0.0
      %1478 = vmatprep.subr.mxu0 0.0
      %1479 = vmatpush1.msra.mxu0 0.0
      %1480 = vmatprep.subr.mxu0 0.0
      %1481 = vmatpush1.msra.mxu0 0.0
      %1482 = vmatprep.mubr.f32.mxu0 0.0
      %1483 = vmatmul.mubr.f32.gmra.mrb[0].mxu0 %v1416
      %v1484 = vpop.f32.mrb[0].mxu0
      %v1485 = vadd.f32 %v1413, %v1484
      %v1486 = vpop.f32.mrb[0].mxu0
      %1487 = vdwg.mxu0
      %v1488 = vadd.f32 %v621, %v1485
      %v1489 = vsel %vm637, %v1488, 0.0
      %1490 = vadd.xlane.f32.xlu0 %v1489
      %v1491 = vpop.xlane.xlu0 %1490
      %v1492 = vrcp.pop 32.0
      %v1493 = vmul.f32 %v1491, %v1492
      %v1494 = vsub.f32 %v1488, %v1493
      %v1495 = vmul.f32 %v1494, %v1494
      %v1496 = vsel %vm637, %v1495, 0.0
      %1497 = vadd.xlane.f32.xlu0 %v1496
      %v1498 = vpop.xlane.xlu0 %1497
      %v1499 = vmul.f32 %v1498, %v1492
      %v1500 = vadd.f32 %v1499, 1e-05
      %v1501 = vrsqrt.pop %v1500
      %v1502 = vmul.f32 %v1494, %v1501
      %v1503 = vlaneseq
      %v1504 = vshrl.u32 %v1503, 7
      %v1505 = vsub.s32 0, %v1504
      %v1506 = vrot.slane %v624, %v1505
      %v1507 = vmul.f32 %v1502, %v1506
      %v1508 = vlaneseq
      %v1509 = vshrl.u32 %v1508, 7
      %v1510 = vsub.s32 0, %v1509
      %v1511 = vrot.slane %v625, %v1510
      %v1512 = vadd.f32 %v1507, %v1511
      %v1513 = vld [vmem:[%s7] sm:$0xff]
      %v1514 = vld [vmem:[%s7 + $0x8] sm:$0xff]
      %v1515 = vld [vmem:[%s7 + $0x10] sm:$0xff]
      %v1516 = vld [vmem:[%s7 + $0x18] sm:$0xff]
      %v1517 = vld [vmem:[%s8] sm:$0x1]
      %v1519 = vlaneseq
      %v1520 = vshrl.u32 %v1519, 7
      %v1521 = vsub.s32 0, %v1520
      %v1522 = vrot.slane %v1517, %v1521
      %v1525 = vsel %vm637, %v1512, 0
      %1527 = vmatprep.subr.mxu0 0.0
      %1528 = vmatpush1.msra.mxu0 %v1513
      %1529 = vmatprep.subr.mxu0 0.0
      %1530 = vmatpush1.msra.mxu0 %v1514
      %1531 = vmatprep.subr.mxu0 0.0
      %1532 = vmatpush1.msra.mxu0 %v1515
      %1533 = vmatprep.subr.mxu0 0.0
      %1534 = vmatpush1.msra.mxu0 %v1516
      %1535 = vmatprep.subr.mxu0 0.0
      %1536 = vmatpush1.msra.mxu0 0.0
      %1537 = vmatprep.subr.mxu0 0.0
      %1538 = vmatpush1.msra.mxu0 0.0
      %1539 = vmatprep.subr.mxu0 0.0
      %1540 = vmatpush1.msra.mxu0 0.0
      %1541 = vmatprep.subr.mxu0 0.0
      %1542 = vmatpush1.msra.mxu0 0.0
      %1543 = vmatprep.subr.mxu0 0.0
      %1544 = vmatpush1.msra.mxu0 0.0
      %1545 = vmatprep.subr.mxu0 0.0
      %1546 = vmatpush1.msra.mxu0 0.0
      %1547 = vmatprep.subr.mxu0 0.0
      %1548 = vmatpush1.msra.mxu0 0.0
      %1549 = vmatprep.subr.mxu0 0.0
      %1550 = vmatpush1.msra.mxu0 0.0
      %1551 = vmatprep.subr.mxu0 0.0
      %1552 = vmatpush1.msra.mxu0 0.0
      %1553 = vmatprep.subr.mxu0 0.0
      %1554 = vmatpush1.msra.mxu0 0.0
      %1555 = vmatprep.subr.mxu0 0.0
      %1556 = vmatpush1.msra.mxu0 0.0
      %1557 = vmatprep.subr.mxu0 0.0
      %1558 = vmatpush1.msra.mxu0 0.0
      %1559 = vmatprep.subr.mxu0 0.0
      %1560 = vmatpush1.msra.mxu0 0.0
      %1561 = vmatprep.subr.mxu0 0.0
      %1562 = vmatpush1.msra.mxu0 0.0
      %1563 = vmatprep.subr.mxu0 0.0
      %1564 = vmatpush1.msra.mxu0 0.0
      %1565 = vmatprep.subr.mxu0 0.0
      %1566 = vmatpush1.msra.mxu0 0.0
      %1567 = vmatprep.subr.mxu0 0.0
      %1568 = vmatpush1.msra.mxu0 0.0
      %1569 = vmatprep.subr.mxu0 0.0
      %1570 = vmatpush1.msra.mxu0 0.0
      %1571 = vmatprep.subr.mxu0 0.0
      %1572 = vmatpush1.msra.mxu0 0.0
      %1573 = vmatprep.subr.mxu0 0.0
      %1574 = vmatpush1.msra.mxu0 0.0
      %1575 = vmatprep.subr.mxu0 0.0
      %1576 = vmatpush1.msra.mxu0 0.0
      %1577 = vmatprep.subr.mxu0 0.0
      %1578 = vmatpush1.msra.mxu0 0.0
      %1579 = vmatprep.subr.mxu0 0.0
      %1580 = vmatpush1.msra.mxu0 0.0
      %1581 = vmatprep.subr.mxu0 0.0
      %1582 = vmatpush1.msra.mxu0 0.0
      %1583 = vmatprep.subr.mxu0 0.0
      %1584 = vmatpush1.msra.mxu0 0.0
      %1585 = vmatprep.subr.mxu0 0.0
      %1586 = vmatpush1.msra.mxu0 0.0
      %1587 = vmatprep.subr.mxu0 0.0
      %1588 = vmatpush1.msra.mxu0 0.0
      %1589 = vmatprep.subr.mxu0 0.0
      %1590 = vmatpush1.msra.mxu0 0.0
      %1591 = vmatprep.mubr.f32.mxu0 0.0
      %1592 = vmatmul.mubr.f32.gmra.mrb[0].mxu0 %v1525
      %v1593 = vpop.f32.mrb[0].mxu0
      %v1594 = vadd.f32 %v1522, %v1593
      %v1595 = vpop.f32.mrb[0].mxu0
      %1596 = vdwg.mxu0
      %v1597 = vld [vmem:[%s9] sm:$0xff]
      %v1598 = vld [vmem:[%s9 + $0x8] sm:$0xff]
      %v1599 = vld [vmem:[%s9 + $0x10] sm:$0xff]
      %v1600 = vld [vmem:[%s9 + $0x18] sm:$0xff]
      %v1601 = vld [vmem:[%s10] sm:$0x1]
      %v1603 = vlaneseq
      %v1604 = vshrl.u32 %v1603, 7
      %v1605 = vsub.s32 0, %v1604
      %v1606 = vrot.slane %v1601, %v1605
      %v1609 = vsel %vm637, %v622, 0
      %v1612 = vsel %vm637, %v623, 0
      %1614 = vmatprep.subr.mxu0 0.0
      %1615 = vmatpush1.msra.mxu0 %v1597
      %1616 = vmatprep.subr.mxu0 0.0
      %1617 = vmatpush1.msra.mxu0 %v1598
      %1618 = vmatprep.subr.mxu0 0.0
      %1619 = vmatpush1.msra.mxu0 %v1599
      %1620 = vmatprep.subr.mxu0 0.0
      %1621 = vmatpush1.msra.mxu0 %v1600
      %1622 = vmatprep.subr.mxu0 0.0
      %1623 = vmatpush1.msra.mxu0 0.0
      %1624 = vmatprep.subr.mxu0 0.0
      %1625 = vmatpush1.msra.mxu0 0.0
      %1626 = vmatprep.subr.mxu0 0.0
      %1627 = vmatpush1.msra.mxu0 0.0
      %1628 = vmatprep.subr.mxu0 0.0
      %1629 = vmatpush1.msra.mxu0 0.0
      %1630 = vmatprep.subr.mxu0 0.0
      %1631 = vmatpush1.msra.mxu0 0.0
      %1632 = vmatprep.subr.mxu0 0.0
      %1633 = vmatpush1.msra.mxu0 0.0
      %1634 = vmatprep.subr.mxu0 0.0
      %1635 = vmatpush1.msra.mxu0 0.0
      %1636 = vmatprep.subr.mxu0 0.0
      %1637 = vmatpush1.msra.mxu0 0.0
      %1638 = vmatprep.subr.mxu0 0.0
      %1639 = vmatpush1.msra.mxu0 0.0
      %1640 = vmatprep.subr.mxu0 0.0
      %1641 = vmatpush1.msra.mxu0 0.0
      %1642 = vmatprep.subr.mxu0 0.0
      %1643 = vmatpush1.msra.mxu0 0.0
      %1644 = vmatprep.subr.mxu0 0.0
      %1645 = vmatpush1.msra.mxu0 0.0
      %1646 = vmatprep.subr.mxu0 0.0
      %1647 = vmatpush1.msra.mxu0 0.0
      %1648 = vmatprep.subr.mxu0 0.0
      %1649 = vmatpush1.msra.mxu0 0.0
      %1650 = vmatprep.subr.mxu0 0.0
      %1651 = vmatpush1.msra.mxu0 0.0
      %1652 = vmatprep.subr.mxu0 0.0
      %1653 = vmatpush1.msra.mxu0 0.0
      %1654 = vmatprep.subr.mxu0 0.0
      %1655 = vmatpush1.msra.mxu0 0.0
      %1656 = vmatprep.subr.mxu0 0.0
      %1657 = vmatpush1.msra.mxu0 0.0
      %1658 = vmatprep.subr.mxu0 0.0
      %1659 = vmatpush1.msra.mxu0 0.0
      %1660 = vmatprep.subr.mxu0 0.0
      %1661 = vmatpush1.msra.mxu0 0.0
      %1662 = vmatprep.subr.mxu0 0.0
      %1663 = vmatpush1.msra.mxu0 0.0
      %1664 = vmatprep.subr.mxu0 0.0
      %1665 = vmatpush1.msra.mxu0 0.0
      %1666 = vmatprep.subr.mxu0 0.0
      %1667 = vmatpush1.msra.mxu0 0.0
      %1668 = vmatprep.subr.mxu0 0.0
      %1669 = vmatpush1.msra.mxu0 0.0
      %1670 = vmatprep.subr.mxu0 0.0
      %1671 = vmatpush1.msra.mxu0 0.0
      %1672 = vmatprep.subr.mxu0 0.0
      %1673 = vmatpush1.msra.mxu0 0.0
      %1674 = vmatprep.subr.mxu0 0.0
      %1675 = vmatpush1.msra.mxu0 0.0
      %1676 = vmatprep.subr.mxu0 0.0
      %1677 = vmatpush1.msra.mxu0 0.0
      %1678 = vmatprep.mubr.f32.mxu0 0.0
      %1679 = vmatmul.mubr.f32.gmra.mrb[0].mxu0 %v1609
      %v1680 = vpop.f32.mrb[0].mxu0
      %v1681 = vadd.f32 %v1606, %v1680
      %v1682 = vpop.f32.mrb[0].mxu0
      %1683 = vmatprep.mubr.f32.mxu0 0.0
      %1684 = vmatmul.mubr.f32.gmra.mrb[0].mxu0 %v1612
      %v1685 = vpop.f32.mrb[0].mxu0
      %v1686 = vadd.f32 %v1606, %v1685
      %v1687 = vpop.f32.mrb[0].mxu0
      %1688 = vdwg.mxu0
      %v1690 = vsel %vm714, %v1594, 0
      %v1693 = vsel %vm714, %v1681, 0
      %v1696 = vsel %vm714, %v1686, 0
      %1698 = vmatprep.subr.mxu0 0.0
      %1699 = vmatpush1.xpose.msra.mxu0 %v1693
      %1700 = vmatprep.subr.mxu0 0.0
      %1701 = vmatpush1.xpose.msra.mxu0 %v1696
      %1702 = vmatprep.subr.mxu0 0.0
      %1703 = vmatpush1.xpose.msra.mxu0 0.0
      %1704 = vmatprep.subr.mxu0 0.0
      %1705 = vmatpush1.xpose.msra.mxu0 0.0
      %1706 = vmatprep.subr.mxu0 0.0
      %1707 = vmatpush1.xpose.msra.mxu0 0.0
      %1708 = vmatprep.subr.mxu0 0.0
      %1709 = vmatpush1.xpose.msra.mxu0 0.0
      %1710 = vmatprep.subr.mxu0 0.0
      %1711 = vmatpush1.xpose.msra.mxu0 0.0
      %1712 = vmatprep.subr.mxu0 0.0
      %1713 = vmatpush1.xpose.msra.mxu0 0.0
      %1714 = vmatprep.subr.mxu0 0.0
      %1715 = vmatpush1.xpose.msra.mxu0 0.0
      %1716 = vmatprep.subr.mxu0 0.0
      %1717 = vmatpush1.xpose.msra.mxu0 0.0
      %1718 = vmatprep.subr.mxu0 0.0
      %1719 = vmatpush1.xpose.msra.mxu0 0.0
      %1720 = vmatprep.subr.mxu0 0.0
      %1721 = vmatpush1.xpose.msra.mxu0 0.0
      %1722 = vmatprep.subr.mxu0 0.0
      %1723 = vmatpush1.xpose.msra.mxu0 0.0
      %1724 = vmatprep.subr.mxu0 0.0
      %1725 = vmatpush1.xpose.msra.mxu0 0.0
      %1726 = vmatprep.subr.mxu0 0.0
      %1727 = vmatpush1.xpose.msra.mxu0 0.0
      %1728 = vmatprep.subr.mxu0 0.0
      %1729 = vmatpush1.xpose.msra.mxu0 0.0
      %1730 = vmatprep.subr.mxu0 0.0
      %1731 = vmatpush1.xpose.msra.mxu0 0.0
      %1732 = vmatprep.subr.mxu0 0.0
      %1733 = vmatpush1.xpose.msra.mxu0 0.0
      %1734 = vmatprep.subr.mxu0 0.0
      %1735 = vmatpush1.xpose.msra.mxu0 0.0
      %1736 = vmatprep.subr.mxu0 0.0
      %1737 = vmatpush1.xpose.msra.mxu0 0.0
      %1738 = vmatprep.subr.mxu0 0.0
      %1739 = vmatpush1.xpose.msra.mxu0 0.0
      %1740 = vmatprep.subr.mxu0 0.0
      %1741 = vmatpush1.xpose.msra.mxu0 0.0
      %1742 = vmatprep.subr.mxu0 0.0
      %1743 = vmatpush1.xpose.msra.mxu0 0.0
      %1744 = vmatprep.subr.mxu0 0.0
      %1745 = vmatpush1.xpose.msra.mxu0 0.0
      %1746 = vmatprep.subr.mxu0 0.0
      %1747 = vmatpush1.xpose.msra.mxu0 0.0
      %1748 = vmatprep.subr.mxu0 0.0
      %1749 = vmatpush1.xpose.msra.mxu0 0.0
      %1750 = vmatprep.subr.mxu0 0.0
      %1751 = vmatpush1.xpose.msra.mxu0 0.0
      %1752 = vmatprep.subr.mxu0 0.0
      %1753 = vmatpush1.xpose.msra.mxu0 0.0
      %1754 = vmatprep.subr.mxu0 0.0
      %1755 = vmatpush1.xpose.msra.mxu0 0.0
      %1756 = vmatprep.subr.mxu0 0.0
      %1757 = vmatpush1.xpose.msra.mxu0 0.0
      %1758 = vmatprep.subr.mxu0 0.0
      %1759 = vmatpush1.xpose.msra.mxu0 0.0
      %1760 = vmatprep.subr.mxu0 0.0
      %1761 = vmatpush1.xpose.msra.mxu0 0.0
      %1762 = vmatprep.mubr.f32.mxu0 0.0
      %1763 = vmatmul.mubr.f32.gmra.mrb[0].mxu0 %v1690
      %v1764 = vpop.f32.mrb[0].mxu0
      %v1765 = vadd.f32 0.0, %v1764
      %v1766 = vpop.f32.mrb[0].mxu0
      %1767 = vdwg.mxu0
      %v1768 = vmul.f32 %v1765, 0.35355338
      %vm1769 = vcmask 130048
      %v1770 = vsel %vm1769, %v1768, -inf
      %1771 = vmax.xlane.f32.xlu0 %v1770
      %v1772 = vpop.xlane.xlu0 %1771
      %v1773 = vsub.f32 %v1768, %v1772
      %v1774 = vmul.f32 %v1773, 1.442695
      %v1775 = vpow.pop %v1774
      %v1776 = vsel %vm1769, %v1775, 0.0
      %1777 = vadd.xlane.f32.xlu0 %v1776
      %v1778 = vpop.xlane.xlu0 %1777
      %1779 = vrot.lane.b32.xlu0 %v1681, 96
      %v1780 = vpop.permute.xlu0 %1779
      %1781 = vrot.lane.b32.xlu0 %v1686, 96
      %v1782 = vpop.permute.xlu0 %1781
      %v1786 = vsel %vm1769, %v1775, 0
      %1788 = vmatprep.subr.mxu0 0.0
      %1789 = vmatpush1.msra.mxu0 %v1780
      %1790 = vmatprep.subr.mxu0 0.0
      %1791 = vmatpush1.msra.mxu0 %v1782
      %1792 = vmatprep.subr.mxu0 0.0
      %1793 = vmatpush1.msra.mxu0 0.0
      %1794 = vmatprep.subr.mxu0 0.0
      %1795 = vmatpush1.msra.mxu0 0.0
      %1796 = vmatprep.subr.mxu0 0.0
      %1797 = vmatpush1.msra.mxu0 0.0
      %1798 = vmatprep.subr.mxu0 0.0
      %1799 = vmatpush1.msra.mxu0 0.0
      %1800 = vmatprep.subr.mxu0 0.0
      %1801 = vmatpush1.msra.mxu0 0.0
      %1802 = vmatprep.subr.mxu0 0.0
      %1803 = vmatpush1.msra.mxu0 0.0
      %1804 = vmatprep.subr.mxu0 0.0
      %1805 = vmatpush1.msra.mxu0 0.0
      %1806 = vmatprep.subr.mxu0 0.0
      %1807 = vmatpush1.msra.mxu0 0.0
      %1808 = vmatprep.subr.mxu0 0.0
      %1809 = vmatpush1.msra.mxu0 0.0
      %1810 = vmatprep.subr.mxu0 0.0
      %1811 = vmatpush1.msra.mxu0 0.0
      %1812 = vmatprep.subr.mxu0 0.0
      %1813 = vmatpush1.msra.mxu0 0.0
      %1814 = vmatprep.subr.mxu0 0.0
      %1815 = vmatpush1.msra.mxu0 0.0
      %1816 = vmatprep.subr.mxu0 0.0
      %1817 = vmatpush1.msra.mxu0 0.0
      %1818 = vmatprep.subr.mxu0 0.0
      %1819 = vmatpush1.msra.mxu0 0.0
      %1820 = vmatprep.subr.mxu0 0.0
      %1821 = vmatpush1.msra.mxu0 0.0
      %1822 = vmatprep.subr.mxu0 0.0
      %1823 = vmatpush1.msra.mxu0 0.0
      %1824 = vmatprep.subr.mxu0 0.0
      %1825 = vmatpush1.msra.mxu0 0.0
      %1826 = vmatprep.subr.mxu0 0.0
      %1827 = vmatpush1.msra.mxu0 0.0
      %1828 = vmatprep.subr.mxu0 0.0
      %1829 = vmatpush1.msra.mxu0 0.0
      %1830 = vmatprep.subr.mxu0 0.0
      %1831 = vmatpush1.msra.mxu0 0.0
      %1832 = vmatprep.subr.mxu0 0.0
      %1833 = vmatpush1.msra.mxu0 0.0
      %1834 = vmatprep.subr.mxu0 0.0
      %1835 = vmatpush1.msra.mxu0 0.0
      %1836 = vmatprep.subr.mxu0 0.0
      %1837 = vmatpush1.msra.mxu0 0.0
      %1838 = vmatprep.subr.mxu0 0.0
      %1839 = vmatpush1.msra.mxu0 0.0
      %1840 = vmatprep.subr.mxu0 0.0
      %1841 = vmatpush1.msra.mxu0 0.0
      %1842 = vmatprep.subr.mxu0 0.0
      %1843 = vmatpush1.msra.mxu0 0.0
      %1844 = vmatprep.subr.mxu0 0.0
      %1845 = vmatpush1.msra.mxu0 0.0
      %1846 = vmatprep.subr.mxu0 0.0
      %1847 = vmatpush1.msra.mxu0 0.0
      %1848 = vmatprep.subr.mxu0 0.0
      %1849 = vmatpush1.msra.mxu0 0.0
      %1850 = vmatprep.subr.mxu0 0.0
      %1851 = vmatpush1.msra.mxu0 0.0
      %1852 = vmatprep.mubr.f32.mxu0 0.0
      %1853 = vmatmul.mubr.f32.gmra.mrb[0].mxu0 %v1786
      %v1854 = vpop.f32.mrb[0].mxu0
      %v1855 = vadd.f32 0.0, %v1854
      %v1856 = vpop.f32.mrb[0].mxu0
      %1857 = vdwg.mxu0
      %v1858 = vrcp.pop %v1778
      %v1859 = vmul.f32 %v1855, %v1858
      %1860 = vst.msk [vmem:[#allocation2] sm:$0xff] %vm714, %v1859
      %1861 = vrot.lane.b32.xlu0 %v1594, 120
      %v1862 = vpop.permute.xlu0 %1861
      %1863 = vrot.lane.b32.xlu0 %v1681, 120
      %v1864 = vpop.permute.xlu0 %1863
      %1865 = vrot.lane.b32.xlu0 %v1686, 120
      %v1866 = vpop.permute.xlu0 %1865
      %v1867 = vsel %vm714, %v1862, 0
      %v1869 = vsel %vm714, %v1864, 0
      %v1871 = vsel %vm714, %v1866, 0
      %1873 = vmatprep.subr.mxu0 0.0
      %1874 = vmatpush1.xpose.msra.mxu0 %v1869
      %1875 = vmatprep.subr.mxu0 0.0
      %1876 = vmatpush1.xpose.msra.mxu0 %v1871
      %1877 = vmatprep.subr.mxu0 0.0
      %1878 = vmatpush1.xpose.msra.mxu0 0.0
      %1879 = vmatprep.subr.mxu0 0.0
      %1880 = vmatpush1.xpose.msra.mxu0 0.0
      %1881 = vmatprep.subr.mxu0 0.0
      %1882 = vmatpush1.xpose.msra.mxu0 0.0
      %1883 = vmatprep.subr.mxu0 0.0
      %1884 = vmatpush1.xpose.msra.mxu0 0.0
      %1885 = vmatprep.subr.mxu0 0.0
      %1886 = vmatpush1.xpose.msra.mxu0 0.0
      %1887 = vmatprep.subr.mxu0 0.0
      %1888 = vmatpush1.xpose.msra.mxu0 0.0
      %1889 = vmatprep.subr.mxu0 0.0
      %1890 = vmatpush1.xpose.msra.mxu0 0.0
      %1891 = vmatprep.subr.mxu0 0.0
      %1892 = vmatpush1.xpose.msra.mxu0 0.0
      %1893 = vmatprep.subr.mxu0 0.0
      %1894 = vmatpush1.xpose.msra.mxu0 0.0
      %1895 = vmatprep.subr.mxu0 0.0
      %1896 = vmatpush1.xpose.msra.mxu0 0.0
      %1897 = vmatprep.subr.mxu0 0.0
      %1898 = vmatpush1.xpose.msra.mxu0 0.0
      %1899 = vmatprep.subr.mxu0 0.0
      %1900 = vmatpush1.xpose.msra.mxu0 0.0
      %1901 = vmatprep.subr.mxu0 0.0
      %1902 = vmatpush1.xpose.msra.mxu0 0.0
      %1903 = vmatprep.subr.mxu0 0.0
      %1904 = vmatpush1.xpose.msra.mxu0 0.0
      %1905 = vmatprep.subr.mxu0 0.0
      %1906 = vmatpush1.xpose.msra.mxu0 0.0
      %1907 = vmatprep.subr.mxu0 0.0
      %1908 = vmatpush1.xpose.msra.mxu0 0.0
      %1909 = vmatprep.subr.mxu0 0.0
      %1910 = vmatpush1.xpose.msra.mxu0 0.0
      %1911 = vmatprep.subr.mxu0 0.0
      %1912 = vmatpush1.xpose.msra.mxu0 0.0
      %1913 = vmatprep.subr.mxu0 0.0
      %1914 = vmatpush1.xpose.msra.mxu0 0.0
      %1915 = vmatprep.subr.mxu0 0.0
      %1916 = vmatpush1.xpose.msra.mxu0 0.0
      %1917 = vmatprep.subr.mxu0 0.0
      %1918 = vmatpush1.xpose.msra.mxu0 0.0
      %1919 = vmatprep.subr.mxu0 0.0
      %1920 = vmatpush1.xpose.msra.mxu0 0.0
      %1921 = vmatprep.subr.mxu0 0.0
      %1922 = vmatpush1.xpose.msra.mxu0 0.0
      %1923 = vmatprep.subr.mxu0 0.0
      %1924 = vmatpush1.xpose.msra.mxu0 0.0
      %1925 = vmatprep.subr.mxu0 0.0
      %1926 = vmatpush1.xpose.msra.mxu0 0.0
      %1927 = vmatprep.subr.mxu0 0.0
      %1928 = vmatpush1.xpose.msra.mxu0 0.0
      %1929 = vmatprep.subr.mxu0 0.0
      %1930 = vmatpush1.xpose.msra.mxu0 0.0
      %1931 = vmatprep.subr.mxu0 0.0
      %1932 = vmatpush1.xpose.msra.mxu0 0.0
      %1933 = vmatprep.subr.mxu0 0.0
      %1934 = vmatpush1.xpose.msra.mxu0 0.0
      %1935 = vmatprep.subr.mxu0 0.0
      %1936 = vmatpush1.xpose.msra.mxu0 0.0
      %1937 = vmatprep.mubr.f32.mxu0 0.0
      %1938 = vmatmul.mubr.f32.gmra.mrb[0].mxu0 %v1867
      %v1939 = vpop.f32.mrb[0].mxu0
      %v1940 = vadd.f32 0.0, %v1939
      %v1941 = vpop.f32.mrb[0].mxu0
      %1942 = vdwg.mxu0
      %v1943 = vmul.f32 %v1940, 0.35355338
      %v1944 = vsel %vm1769, %v1943, -inf
      %1945 = vmax.xlane.f32.xlu0 %v1944
      %v1946 = vpop.xlane.xlu0 %1945
      %v1947 = vsub.f32 %v1943, %v1946
      %v1948 = vmul.f32 %v1947, 1.442695
      %v1949 = vpow.pop %v1948
      %v1950 = vsel %vm1769, %v1949, 0.0
      %1951 = vadd.xlane.f32.xlu0 %v1950
      %v1952 = vpop.xlane.xlu0 %1951
      %1953 = vrot.lane.b32.xlu0 %v1681, 88
      %v1954 = vpop.permute.xlu0 %1953
      %1955 = vrot.lane.b32.xlu0 %v1686, 88
      %v1956 = vpop.permute.xlu0 %1955
      %v1960 = vsel %vm1769, %v1949, 0
      %1962 = vmatprep.subr.mxu0 0.0
      %1963 = vmatpush1.msra.mxu0 %v1954
      %1964 = vmatprep.subr.mxu0 0.0
      %1965 = vmatpush1.msra.mxu0 %v1956
      %1966 = vmatprep.subr.mxu0 0.0
      %1967 = vmatpush1.msra.mxu0 0.0
      %1968 = vmatprep.subr.mxu0 0.0
      %1969 = vmatpush1.msra.mxu0 0.0
      %1970 = vmatprep.subr.mxu0 0.0
      %1971 = vmatpush1.msra.mxu0 0.0
      %1972 = vmatprep.subr.mxu0 0.0
      %1973 = vmatpush1.msra.mxu0 0.0
      %1974 = vmatprep.subr.mxu0 0.0
      %1975 = vmatpush1.msra.mxu0 0.0
      %1976 = vmatprep.subr.mxu0 0.0
      %1977 = vmatpush1.msra.mxu0 0.0
      %1978 = vmatprep.subr.mxu0 0.0
      %1979 = vmatpush1.msra.mxu0 0.0
      %1980 = vmatprep.subr.mxu0 0.0
      %1981 = vmatpush1.msra.mxu0 0.0
      %1982 = vmatprep.subr.mxu0 0.0
      %1983 = vmatpush1.msra.mxu0 0.0
      %1984 = vmatprep.subr.mxu0 0.0
      %1985 = vmatpush1.msra.mxu0 0.0
      %1986 = vmatprep.subr.mxu0 0.0
      %1987 = vmatpush1.msra.mxu0 0.0
      %1988 = vmatprep.subr.mxu0 0.0
      %1989 = vmatpush1.msra.mxu0 0.0
      %1990 = vmatprep.subr.mxu0 0.0
      %1991 = vmatpush1.msra.mxu0 0.0
      %1992 = vmatprep.subr.mxu0 0.0
      %1993 = vmatpush1.msra.mxu0 0.0
      %1994 = vmatprep.subr.mxu0 0.0
      %1995 = vmatpush1.msra.mxu0 0.0
      %1996 = vmatprep.subr.mxu0 0.0
      %1997 = vmatpush1.msra.mxu0 0.0
      %1998 = vmatprep.subr.mxu0 0.0
      %1999 = vmatpush1.msra.mxu0 0.0
      %2000 = vmatprep.subr.mxu0 0.0
      %2001 = vmatpush1.msra.mxu0 0.0
      %2002 = vmatprep.subr.mxu0 0.0
      %2003 = vmatpush1.msra.mxu0 0.0
      %2004 = vmatprep.subr.mxu0 0.0
      %2005 = vmatpush1.msra.mxu0 0.0
      %2006 = vmatprep.subr.mxu0 0.0
      %2007 = vmatpush1.msra.mxu0 0.0
      %2008 = vmatprep.subr.mxu0 0.0
      %2009 = vmatpush1.msra.mxu0 0.0
      %2010 = vmatprep.subr.mxu0 0.0
      %2011 = vmatpush1.msra.mxu0 0.0
      %2012 = vmatprep.subr.mxu0 0.0
      %2013 = vmatpush1.msra.mxu0 0.0
      %2014 = vmatprep.subr.mxu0 0.0
      %2015 = vmatpush1.msra.mxu0 0.0
      %2016 = vmatprep.subr.mxu0 0.0
      %2017 = vmatpush1.msra.mxu0 0.0
      %2018 = vmatprep.subr.mxu0 0.0
      %2019 = vmatpush1.msra.mxu0 0.0
      %2020 = vmatprep.subr.mxu0 0.0
      %2021 = vmatpush1.msra.mxu0 0.0
      %2022 = vmatprep.subr.mxu0 0.0
      %2023 = vmatpush1.msra.mxu0 0.0
      %2024 = vmatprep.subr.mxu0 0.0
      %2025 = vmatpush1.msra.mxu0 0.0
      %2026 = vmatprep.mubr.f32.mxu0 0.0
      %2027 = vmatmul.mubr.f32.gmra.mrb[0].mxu0 %v1960
      %v2028 = vpop.f32.mrb[0].mxu0
      %v2029 = vadd.f32 0.0, %v2028
      %v2030 = vpop.f32.mrb[0].mxu0
      %2031 = vdwg.mxu0
      %v2032 = vrcp.pop %v1952
      %v2033 = vmul.f32 %v2029, %v2032
      %2035 = vrot.lane.b32.xlu0 %v2033, 8
      %v2036 = vpop.permute.xlu0 %2035
      %2038 = vst.msk [vmem:[#allocation2] sm:$0xff] %vm1055, %v2036
      %2039 = vrot.lane.b32.xlu0 %v1594, 112
      %v2040 = vpop.permute.xlu0 %2039
      %2041 = vrot.lane.b32.xlu0 %v1681, 112
      %v2042 = vpop.permute.xlu0 %2041
      %2043 = vrot.lane.b32.xlu0 %v1686, 112
      %v2044 = vpop.permute.xlu0 %2043
      %v2045 = vsel %vm714, %v2040, 0
      %v2047 = vsel %vm714, %v2042, 0
      %v2049 = vsel %vm714, %v2044, 0
      %2051 = vmatprep.subr.mxu0 0.0
      %2052 = vmatpush1.xpose.msra.mxu0 %v2047
      %2053 = vmatprep.subr.mxu0 0.0
      %2054 = vmatpush1.xpose.msra.mxu0 %v2049
      %2055 = vmatprep.subr.mxu0 0.0
      %2056 = vmatpush1.xpose.msra.mxu0 0.0
      %2057 = vmatprep.subr.mxu0 0.0
      %2058 = vmatpush1.xpose.msra.mxu0 0.0
      %2059 = vmatprep.subr.mxu0 0.0
      %2060 = vmatpush1.xpose.msra.mxu0 0.0
      %2061 = vmatprep.subr.mxu0 0.0
      %2062 = vmatpush1.xpose.msra.mxu0 0.0
      %2063 = vmatprep.subr.mxu0 0.0
      %2064 = vmatpush1.xpose.msra.mxu0 0.0
      %2065 = vmatprep.subr.mxu0 0.0
      %2066 = vmatpush1.xpose.msra.mxu0 0.0
      %2067 = vmatprep.subr.mxu0 0.0
      %2068 = vmatpush1.xpose.msra.mxu0 0.0
      %2069 = vmatprep.subr.mxu0 0.0
      %2070 = vmatpush1.xpose.msra.mxu0 0.0
      %2071 = vmatprep.subr.mxu0 0.0
      %2072 = vmatpush1.xpose.msra.mxu0 0.0
      %2073 = vmatprep.subr.mxu0 0.0
      %2074 = vmatpush1.xpose.msra.mxu0 0.0
      %2075 = vmatprep.subr.mxu0 0.0
      %2076 = vmatpush1.xpose.msra.mxu0 0.0
      %2077 = vmatprep.subr.mxu0 0.0
      %2078 = vmatpush1.xpose.msra.mxu0 0.0
      %2079 = vmatprep.subr.mxu0 0.0
      %2080 = vmatpush1.xpose.msra.mxu0 0.0
      %2081 = vmatprep.subr.mxu0 0.0
      %2082 = vmatpush1.xpose.msra.mxu0 0.0
      %2083 = vmatprep.subr.mxu0 0.0
      %2084 = vmatpush1.xpose.msra.mxu0 0.0
      %2085 = vmatprep.subr.mxu0 0.0
      %2086 = vmatpush1.xpose.msra.mxu0 0.0
      %2087 = vmatprep.subr.mxu0 0.0
      %2088 = vmatpush1.xpose.msra.mxu0 0.0
      %2089 = vmatprep.subr.mxu0 0.0
      %2090 = vmatpush1.xpose.msra.mxu0 0.0
      %2091 = vmatprep.subr.mxu0 0.0
      %2092 = vmatpush1.xpose.msra.mxu0 0.0
      %2093 = vmatprep.subr.mxu0 0.0
      %2094 = vmatpush1.xpose.msra.mxu0 0.0
      %2095 = vmatprep.subr.mxu0 0.0
      %2096 = vmatpush1.xpose.msra.mxu0 0.0
      %2097 = vmatprep.subr.mxu0 0.0
      %2098 = vmatpush1.xpose.msra.mxu0 0.0
      %2099 = vmatprep.subr.mxu0 0.0
      %2100 = vmatpush1.xpose.msra.mxu0 0.0
      %2101 = vmatprep.subr.mxu0 0.0
      %2102 = vmatpush1.xpose.msra.mxu0 0.0
      %2103 = vmatprep.subr.mxu0 0.0
      %2104 = vmatpush1.xpose.msra.mxu0 0.0
      %2105 = vmatprep.subr.mxu0 0.0
      %2106 = vmatpush1.xpose.msra.mxu0 0.0
      %2107 = vmatprep.subr.mxu0 0.0
      %2108 = vmatpush1.xpose.msra.mxu0 0.0
      %2109 = vmatprep.subr.mxu0 0.0
      %2110 = vmatpush1.xpose.msra.mxu0 0.0
      %2111 = vmatprep.subr.mxu0 0.0
      %2112 = vmatpush1.xpose.msra.mxu0 0.0
      %2113 = vmatprep.subr.mxu0 0.0
      %2114 = vmatpush1.xpose.msra.mxu0 0.0
      %2115 = vmatprep.mubr.f32.mxu0 0.0
      %2116 = vmatmul.mubr.f32.gmra.mrb[0].mxu0 %v2045
      %v2117 = vpop.f32.mrb[0].mxu0
      %v2118 = vadd.f32 0.0, %v2117
      %v2119 = vpop.f32.mrb[0].mxu0
      %2120 = vdwg.mxu0
      %v2121 = vmul.f32 %v2118, 0.35355338
      %v2122 = vsel %vm1769, %v2121, -inf
      %2123 = vmax.xlane.f32.xlu0 %v2122
      %v2124 = vpop.xlane.xlu0 %2123
      %v2125 = vsub.f32 %v2121, %v2124
      %v2126 = vmul.f32 %v2125, 1.442695
      %v2127 = vpow.pop %v2126
      %v2128 = vsel %vm1769, %v2127, 0.0
      %2129 = vadd.xlane.f32.xlu0 %v2128
      %v2130 = vpop.xlane.xlu0 %2129
      %2131 = vrot.lane.b32.xlu0 %v1681, 80
      %v2132 = vpop.permute.xlu0 %2131
      %2133 = vrot.lane.b32.xlu0 %v1686, 80
      %v2134 = vpop.permute.xlu0 %2133
      %v2138 = vsel %vm1769, %v2127, 0
      %2140 = vmatprep.subr.mxu0 0.0
      %2141 = vmatpush1.msra.mxu0 %v2132
      %2142 = vmatprep.subr.mxu0 0.0
      %2143 = vmatpush1.msra.mxu0 %v2134
      %2144 = vmatprep.subr.mxu0 0.0
      %2145 = vmatpush1.msra.mxu0 0.0
      %2146 = vmatprep.subr.mxu0 0.0
      %2147 = vmatpush1.msra.mxu0 0.0
      %2148 = vmatprep.subr.mxu0 0.0
      %2149 = vmatpush1.msra.mxu0 0.0
      %2150 = vmatprep.subr.mxu0 0.0
      %2151 = vmatpush1.msra.mxu0 0.0
      %2152 = vmatprep.subr.mxu0 0.0
      %2153 = vmatpush1.msra.mxu0 0.0
      %2154 = vmatprep.subr.mxu0 0.0
      %2155 = vmatpush1.msra.mxu0 0.0
      %2156 = vmatprep.subr.mxu0 0.0
      %2157 = vmatpush1.msra.mxu0 0.0
      %2158 = vmatprep.subr.mxu0 0.0
      %2159 = vmatpush1.msra.mxu0 0.0
      %2160 = vmatprep.subr.mxu0 0.0
      %2161 = vmatpush1.msra.mxu0 0.0
      %2162 = vmatprep.subr.mxu0 0.0
      %2163 = vmatpush1.msra.mxu0 0.0
      %2164 = vmatprep.subr.mxu0 0.0
      %2165 = vmatpush1.msra.mxu0 0.0
      %2166 = vmatprep.subr.mxu0 0.0
      %2167 = vmatpush1.msra.mxu0 0.0
      %2168 = vmatprep.subr.mxu0 0.0
      %2169 = vmatpush1.msra.mxu0 0.0
      %2170 = vmatprep.subr.mxu0 0.0
      %2171 = vmatpush1.msra.mxu0 0.0
      %2172 = vmatprep.subr.mxu0 0.0
      %2173 = vmatpush1.msra.mxu0 0.0
      %2174 = vmatprep.subr.mxu0 0.0
      %2175 = vmatpush1.msra.mxu0 0.0
      %2176 = vmatprep.subr.mxu0 0.0
      %2177 = vmatpush1.msra.mxu0 0.0
      %2178 = vmatprep.subr.mxu0 0.0
      %2179 = vmatpush1.msra.mxu0 0.0
      %2180 = vmatprep.subr.mxu0 0.0
      %2181 = vmatpush1.msra.mxu0 0.0
      %2182 = vmatprep.subr.mxu0 0.0
      %2183 = vmatpush1.msra.mxu0 0.0
      %2184 = vmatprep.subr.mxu0 0.0
      %2185 = vmatpush1.msra.mxu0 0.0
      %2186 = vmatprep.subr.mxu0 0.0
      %2187 = vmatpush1.msra.mxu0 0.0
      %2188 = vmatprep.subr.mxu0 0.0
      %2189 = vmatpush1.msra.mxu0 0.0
      %2190 = vmatprep.subr.mxu0 0.0
      %2191 = vmatpush1.msra.mxu0 0.0
      %2192 = vmatprep.subr.mxu0 0.0
      %2193 = vmatpush1.msra.mxu0 0.0
      %2194 = vmatprep.subr.mxu0 0.0
      %2195 = vmatpush1.msra.mxu0 0.0
      %2196 = vmatprep.subr.mxu0 0.0
      %2197 = vmatpush1.msra.mxu0 0.0
      %2198 = vmatprep.subr.mxu0 0.0
      %2199 = vmatpush1.msra.mxu0 0.0
      %2200 = vmatprep.subr.mxu0 0.0
      %2201 = vmatpush1.msra.mxu0 0.0
      %2202 = vmatprep.subr.mxu0 0.0
      %2203 = vmatpush1.msra.mxu0 0.0
      %2204 = vmatprep.mubr.f32.mxu0 0.0
      %2205 = vmatmul.mubr.f32.gmra.mrb[0].mxu0 %v2138
      %v2206 = vpop.f32.mrb[0].mxu0
      %v2207 = vadd.f32 0.0, %v2206
      %v2208 = vpop.f32.mrb[0].mxu0
      %2209 = vdwg.mxu0
      %v2210 = vrcp.pop %v2130
      %v2211 = vmul.f32 %v2207, %v2210
      %2213 = vrot.lane.b32.xlu0 %v2211, 16
      %v2214 = vpop.permute.xlu0 %2213
      %2216 = vst.msk [vmem:[#allocation2] sm:$0xff] %vm1228, %v2214
      %2217 = vrot.lane.b32.xlu0 %v1594, 104
      %v2218 = vpop.permute.xlu0 %2217
      %2219 = vrot.lane.b32.xlu0 %v1681, 104
      %v2220 = vpop.permute.xlu0 %2219
      %2221 = vrot.lane.b32.xlu0 %v1686, 104
      %v2222 = vpop.permute.xlu0 %2221
      %v2223 = vsel %vm714, %v2218, 0
      %v2225 = vsel %vm714, %v2220, 0
      %v2227 = vsel %vm714, %v2222, 0
      %2229 = vmatprep.subr.mxu0 0.0
      %2230 = vmatpush1.xpose.msra.mxu0 %v2225
      %2231 = vmatprep.subr.mxu0 0.0
      %2232 = vmatpush1.xpose.msra.mxu0 %v2227
      %2233 = vmatprep.subr.mxu0 0.0
      %2234 = vmatpush1.xpose.msra.mxu0 0.0
      %2235 = vmatprep.subr.mxu0 0.0
      %2236 = vmatpush1.xpose.msra.mxu0 0.0
      %2237 = vmatprep.subr.mxu0 0.0
      %2238 = vmatpush1.xpose.msra.mxu0 0.0
      %2239 = vmatprep.subr.mxu0 0.0
      %2240 = vmatpush1.xpose.msra.mxu0 0.0
      %2241 = vmatprep.subr.mxu0 0.0
      %2242 = vmatpush1.xpose.msra.mxu0 0.0
      %2243 = vmatprep.subr.mxu0 0.0
      %2244 = vmatpush1.xpose.msra.mxu0 0.0
      %2245 = vmatprep.subr.mxu0 0.0
      %2246 = vmatpush1.xpose.msra.mxu0 0.0
      %2247 = vmatprep.subr.mxu0 0.0
      %2248 = vmatpush1.xpose.msra.mxu0 0.0
      %2249 = vmatprep.subr.mxu0 0.0
      %2250 = vmatpush1.xpose.msra.mxu0 0.0
      %2251 = vmatprep.subr.mxu0 0.0
      %2252 = vmatpush1.xpose.msra.mxu0 0.0
      %2253 = vmatprep.subr.mxu0 0.0
      %2254 = vmatpush1.xpose.msra.mxu0 0.0
      %2255 = vmatprep.subr.mxu0 0.0
      %2256 = vmatpush1.xpose.msra.mxu0 0.0
      %2257 = vmatprep.subr.mxu0 0.0
      %2258 = vmatpush1.xpose.msra.mxu0 0.0
      %2259 = vmatprep.subr.mxu0 0.0
      %2260 = vmatpush1.xpose.msra.mxu0 0.0
      %2261 = vmatprep.subr.mxu0 0.0
      %2262 = vmatpush1.xpose.msra.mxu0 0.0
      %2263 = vmatprep.subr.mxu0 0.0
      %2264 = vmatpush1.xpose.msra.mxu0 0.0
      %2265 = vmatprep.subr.mxu0 0.0
      %2266 = vmatpush1.xpose.msra.mxu0 0.0
      %2267 = vmatprep.subr.mxu0 0.0
      %2268 = vmatpush1.xpose.msra.mxu0 0.0
      %2269 = vmatprep.subr.mxu0 0.0
      %2270 = vmatpush1.xpose.msra.mxu0 0.0
      %2271 = vmatprep.subr.mxu0 0.0
      %2272 = vmatpush1.xpose.msra.mxu0 0.0
      %2273 = vmatprep.subr.mxu0 0.0
      %2274 = vmatpush1.xpose.msra.mxu0 0.0
      %2275 = vmatprep.subr.mxu0 0.0
      %2276 = vmatpush1.xpose.msra.mxu0 0.0
      %2277 = vmatprep.subr.mxu0 0.0
      %2278 = vmatpush1.xpose.msra.mxu0 0.0
      %2279 = vmatprep.subr.mxu0 0.0
      %2280 = vmatpush1.xpose.msra.mxu0 0.0
      %2281 = vmatprep.subr.mxu0 0.0
      %2282 = vmatpush1.xpose.msra.mxu0 0.0
      %2283 = vmatprep.subr.mxu0 0.0
      %2284 = vmatpush1.xpose.msra.mxu0 0.0
      %2285 = vmatprep.subr.mxu0 0.0
      %2286 = vmatpush1.xpose.msra.mxu0 0.0
      %2287 = vmatprep.subr.mxu0 0.0
      %2288 = vmatpush1.xpose.msra.mxu0 0.0
      %2289 = vmatprep.subr.mxu0 0.0
      %2290 = vmatpush1.xpose.msra.mxu0 0.0
      %2291 = vmatprep.subr.mxu0 0.0
      %2292 = vmatpush1.xpose.msra.mxu0 0.0
      %2293 = vmatprep.mubr.f32.mxu0 0.0
      %2294 = vmatmul.mubr.f32.gmra.mrb[0].mxu0 %v2223
      %v2295 = vpop.f32.mrb[0].mxu0
      %v2296 = vadd.f32 0.0, %v2295
      %v2297 = vpop.f32.mrb[0].mxu0
      %2298 = vdwg.mxu0
      %v2299 = vmul.f32 %v2296, 0.35355338
      %v2300 = vsel %vm1769, %v2299, -inf
      %2301 = vmax.xlane.f32.xlu0 %v2300
      %v2302 = vpop.xlane.xlu0 %2301
      %v2303 = vsub.f32 %v2299, %v2302
      %v2304 = vmul.f32 %v2303, 1.442695
      %v2305 = vpow.pop %v2304
      %v2306 = vsel %vm1769, %v2305, 0.0
      %2307 = vadd.xlane.f32.xlu0 %v2306
      %v2308 = vpop.xlane.xlu0 %2307
      %2309 = vrot.lane.b32.xlu0 %v1681, 72
      %v2310 = vpop.permute.xlu0 %2309
      %2311 = vrot.lane.b32.xlu0 %v1686, 72
      %v2312 = vpop.permute.xlu0 %2311
      %v2316 = vsel %vm1769, %v2305, 0
      %2318 = vmatprep.subr.mxu0 0.0
      %2319 = vmatpush1.msra.mxu0 %v2310
      %2320 = vmatprep.subr.mxu0 0.0
      %2321 = vmatpush1.msra.mxu0 %v2312
      %2322 = vmatprep.subr.mxu0 0.0
      %2323 = vmatpush1.msra.mxu0 0.0
      %2324 = vmatprep.subr.mxu0 0.0
      %2325 = vmatpush1.msra.mxu0 0.0
      %2326 = vmatprep.subr.mxu0 0.0
      %2327 = vmatpush1.msra.mxu0 0.0
      %2328 = vmatprep.subr.mxu0 0.0
      %2329 = vmatpush1.msra.mxu0 0.0
      %2330 = vmatprep.subr.mxu0 0.0
      %2331 = vmatpush1.msra.mxu0 0.0
      %2332 = vmatprep.subr.mxu0 0.0
      %2333 = vmatpush1.msra.mxu0 0.0
      %2334 = vmatprep.subr.mxu0 0.0
      %2335 = vmatpush1.msra.mxu0 0.0
      %2336 = vmatprep.subr.mxu0 0.0
      %2337 = vmatpush1.msra.mxu0 0.0
      %2338 = vmatprep.subr.mxu0 0.0
      %2339 = vmatpush1.msra.mxu0 0.0
      %2340 = vmatprep.subr.mxu0 0.0
      %2341 = vmatpush1.msra.mxu0 0.0
      %2342 = vmatprep.subr.mxu0 0.0
      %2343 = vmatpush1.msra.mxu0 0.0
      %2344 = vmatprep.subr.mxu0 0.0
      %2345 = vmatpush1.msra.mxu0 0.0
      %2346 = vmatprep.subr.mxu0 0.0
      %2347 = vmatpush1.msra.mxu0 0.0
      %2348 = vmatprep.subr.mxu0 0.0
      %2349 = vmatpush1.msra.mxu0 0.0
      %2350 = vmatprep.subr.mxu0 0.0
      %2351 = vmatpush1.msra.mxu0 0.0
      %2352 = vmatprep.subr.mxu0 0.0
      %2353 = vmatpush1.msra.mxu0 0.0
      %2354 = vmatprep.subr.mxu0 0.0
      %2355 = vmatpush1.msra.mxu0 0.0
      %2356 = vmatprep.subr.mxu0 0.0
      %2357 = vmatpush1.msra.mxu0 0.0
      %2358 = vmatprep.subr.mxu0 0.0
      %2359 = vmatpush1.msra.mxu0 0.0
      %2360 = vmatprep.subr.mxu0 0.0
      %2361 = vmatpush1.msra.mxu0 0.0
      %2362 = vmatprep.subr.mxu0 0.0
      %2363 = vmatpush1.msra.mxu0 0.0
      %2364 = vmatprep.subr.mxu0 0.0
      %2365 = vmatpush1.msra.mxu0 0.0
      %2366 = vmatprep.subr.mxu0 0.0
      %2367 = vmatpush1.msra.mxu0 0.0
      %2368 = vmatprep.subr.mxu0 0.0
      %2369 = vmatpush1.msra.mxu0 0.0
      %2370 = vmatprep.subr.mxu0 0.0
      %2371 = vmatpush1.msra.mxu0 0.0
      %2372 = vmatprep.subr.mxu0 0.0
      %2373 = vmatpush1.msra.mxu0 0.0
      %2374 = vmatprep.subr.mxu0 0.0
      %2375 = vmatpush1.msra.mxu0 0.0
      %2376 = vmatprep.subr.mxu0 0.0
      %2377 = vmatpush1.msra.mxu0 0.0
      %2378 = vmatprep.subr.mxu0 0.0
      %2379 = vmatpush1.msra.mxu0 0.0
      %2380 = vmatprep.subr.mxu0 0.0
      %2381 = vmatpush1.msra.mxu0 0.0
      %2382 = vmatprep.mubr.f32.mxu0 0.0
      %2383 = vmatmul.mubr.f32.gmra.mrb[0].mxu0 %v2316
      %v2384 = vpop.f32.mrb[0].mxu0
      %v2385 = vadd.f32 0.0, %v2384
      %v2386 = vpop.f32.mrb[0].mxu0
      %2387 = vdwg.mxu0
      %v2388 = vrcp.pop %v2308
      %v2389 = vmul.f32 %v2385, %v2388
      %2391 = vrot.lane.b32.xlu0 %v2389, 24
      %v2392 = vpop.permute.xlu0 %2391
      %2394 = vst.msk [vmem:[#allocation2] sm:$0xff] %vm1401, %v2392
      %v2395 = vld [vmem:[#allocation2] sm:$0xff]
      %v2396 = vld [vmem:[%s11] sm:$0xff]
      %v2397 = vld [vmem:[%s11 + $0x8] sm:$0xff]
      %v2398 = vld [vmem:[%s11 + $0x10] sm:$0xff]
      %v2399 = vld [vmem:[%s11 + $0x18] sm:$0xff]
      %v2400 = vld [vmem:[%s12] sm:$0x1]
      %v2402 = vlaneseq
      %v2403 = vshrl.u32 %v2402, 7
      %v2404 = vsub.s32 0, %v2403
      %v2405 = vrot.slane %v2400, %v2404
      %v2408 = vsel %vm637, %v2395, 0
      %2410 = vmatprep.subr.mxu0 0.0
      %2411 = vmatpush1.msra.mxu0 %v2396
      %2412 = vmatprep.subr.mxu0 0.0
      %2413 = vmatpush1.msra.mxu0 %v2397
      %2414 = vmatprep.subr.mxu0 0.0
      %2415 = vmatpush1.msra.mxu0 %v2398
      %2416 = vmatprep.subr.mxu0 0.0
      %2417 = vmatpush1.msra.mxu0 %v2399
      %2418 = vmatprep.subr.mxu0 0.0
      %2419 = vmatpush1.msra.mxu0 0.0
      %2420 = vmatprep.subr.mxu0 0.0
      %2421 = vmatpush1.msra.mxu0 0.0
      %2422 = vmatprep.subr.mxu0 0.0
      %2423 = vmatpush1.msra.mxu0 0.0
      %2424 = vmatprep.subr.mxu0 0.0
      %2425 = vmatpush1.msra.mxu0 0.0
      %2426 = vmatprep.subr.mxu0 0.0
      %2427 = vmatpush1.msra.mxu0 0.0
      %2428 = vmatprep.subr.mxu0 0.0
      %2429 = vmatpush1.msra.mxu0 0.0
      %2430 = vmatprep.subr.mxu0 0.0
      %2431 = vmatpush1.msra.mxu0 0.0
      %2432 = vmatprep.subr.mxu0 0.0
      %2433 = vmatpush1.msra.mxu0 0.0
      %2434 = vmatprep.subr.mxu0 0.0
      %2435 = vmatpush1.msra.mxu0 0.0
      %2436 = vmatprep.subr.mxu0 0.0
      %2437 = vmatpush1.msra.mxu0 0.0
      %2438 = vmatprep.subr.mxu0 0.0
      %2439 = vmatpush1.msra.mxu0 0.0
      %2440 = vmatprep.subr.mxu0 0.0
      %2441 = vmatpush1.msra.mxu0 0.0
      %2442 = vmatprep.subr.mxu0 0.0
      %2443 = vmatpush1.msra.mxu0 0.0
      %2444 = vmatprep.subr.mxu0 0.0
      %2445 = vmatpush1.msra.mxu0 0.0
      %2446 = vmatprep.subr.mxu0 0.0
      %2447 = vmatpush1.msra.mxu0 0.0
      %2448 = vmatprep.subr.mxu0 0.0
      %2449 = vmatpush1.msra.mxu0 0.0
      %2450 = vmatprep.subr.mxu0 0.0
      %2451 = vmatpush1.msra.mxu0 0.0
      %2452 = vmatprep.subr.mxu0 0.0
      %2453 = vmatpush1.msra.mxu0 0.0
      %2454 = vmatprep.subr.mxu0 0.0
      %2455 = vmatpush1.msra.mxu0 0.0
      %2456 = vmatprep.subr.mxu0 0.0
      %2457 = vmatpush1.msra.mxu0 0.0
      %2458 = vmatprep.subr.mxu0 0.0
      %2459 = vmatpush1.msra.mxu0 0.0
      %2460 = vmatprep.subr.mxu0 0.0
      %2461 = vmatpush1.msra.mxu0 0.0
      %2462 = vmatprep.subr.mxu0 0.0
      %2463 = vmatpush1.msra.mxu0 0.0
      %2464 = vmatprep.subr.mxu0 0.0
      %2465 = vmatpush1.msra.mxu0 0.0
      %2466 = vmatprep.subr.mxu0 0.0
      %2467 = vmatpush1.msra.mxu0 0.0
      %2468 = vmatprep.subr.mxu0 0.0
      %2469 = vmatpush1.msra.mxu0 0.0
      %2470 = vmatprep.subr.mxu0 0.0
      %2471 = vmatpush1.msra.mxu0 0.0
      %2472 = vmatprep.subr.mxu0 0.0
      %2473 = vmatpush1.msra.mxu0 0.0
      %2474 = vmatprep.mubr.f32.mxu0 0.0
      %2475 = vmatmul.mubr.f32.gmra.mrb[0].mxu0 %v2408
      %v2476 = vpop.f32.mrb[0].mxu0
      %v2477 = vadd.f32 %v2405, %v2476
      %v2478 = vpop.f32.mrb[0].mxu0
      %2479 = vdwg.mxu0
      %v2480 = vadd.f32 %v1512, %v2477
      %v2481 = vsel %vm637, %v2480, 0.0
      %2482 = vadd.xlane.f32.xlu0 %v2481
      %v2483 = vpop.xlane.xlu0 %2482
      %v2484 = vmul.f32 %v2483, %v1492
      %v2485 = vsub.f32 %v2480, %v2484
      %v2486 = vmul.f32 %v2485, %v2485
      %v2487 = vsel %vm637, %v2486, 0.0
      %2488 = vadd.xlane.f32.xlu0 %v2487
      %v2489 = vpop.xlane.xlu0 %2488
      %v2490 = vmul.f32 %v2489, %v1492
      %v2491 = vadd.f32 %v2490, 1e-05
      %v2492 = vrsqrt.pop %v2491
      %v2493 = vmul.f32 %v2485, %v2492
      %v2494 = vlaneseq
      %v2495 = vshrl.u32 %v2494, 7
      %v2496 = vsub.s32 1, %v2495
      %v2497 = vrot.slane %v624, %v2496
      %v2498 = vmul.f32 %v2493, %v2497
      %v2499 = vlaneseq
      %v2500 = vshrl.u32 %v2499, 7
      %v2501 = vsub.s32 1, %v2500
      %v2502 = vrot.slane %v625, %v2501
      %v2503 = vadd.f32 %v2498, %v2502
      %v2504 = vld [vmem:[%s15] sm:$0xff]
      %v2505 = vld [vmem:[%s15 + $0x8] sm:$0xff]
      %v2506 = vld [vmem:[%s15 + $0x10] sm:$0xff]
      %v2507 = vld [vmem:[%s15 + $0x18] sm:$0xff]
      %v2508 = vld [vmem:[%s16] sm:$0x1]
      %v2510 = vlaneseq
      %v2511 = vshrl.u32 %v2510, 7
      %v2512 = vsub.s32 0, %v2511
      %v2513 = vrot.slane %v2508, %v2512
      %v2516 = vsel %vm637, %v2503, 0
      %2518 = vmatprep.subr.mxu0 0.0
      %2519 = vmatpush1.msra.mxu0 %v2504
      %2520 = vmatprep.subr.mxu0 0.0
      %2521 = vmatpush1.msra.mxu0 %v2505
      %2522 = vmatprep.subr.mxu0 0.0
      %2523 = vmatpush1.msra.mxu0 %v2506
      %2524 = vmatprep.subr.mxu0 0.0
      %2525 = vmatpush1.msra.mxu0 %v2507
      %2526 = vmatprep.subr.mxu0 0.0
      %2527 = vmatpush1.msra.mxu0 0.0
      %2528 = vmatprep.subr.mxu0 0.0
      %2529 = vmatpush1.msra.mxu0 0.0
      %2530 = vmatprep.subr.mxu0 0.0
      %2531 = vmatpush1.msra.mxu0 0.0
      %2532 = vmatprep.subr.mxu0 0.0
      %2533 = vmatpush1.msra.mxu0 0.0
      %2534 = vmatprep.subr.mxu0 0.0
      %2535 = vmatpush1.msra.mxu0 0.0
      %2536 = vmatprep.subr.mxu0 0.0
      %2537 = vmatpush1.msra.mxu0 0.0
      %2538 = vmatprep.subr.mxu0 0.0
      %2539 = vmatpush1.msra.mxu0 0.0
      %2540 = vmatprep.subr.mxu0 0.0
      %2541 = vmatpush1.msra.mxu0 0.0
      %2542 = vmatprep.subr.mxu0 0.0
      %2543 = vmatpush1.msra.mxu0 0.0
      %2544 = vmatprep.subr.mxu0 0.0
      %2545 = vmatpush1.msra.mxu0 0.0
      %2546 = vmatprep.subr.mxu0 0.0
      %2547 = vmatpush1.msra.mxu0 0.0
      %2548 = vmatprep.subr.mxu0 0.0
      %2549 = vmatpush1.msra.mxu0 0.0
      %2550 = vmatprep.subr.mxu0 0.0
      %2551 = vmatpush1.msra.mxu0 0.0
      %2552 = vmatprep.subr.mxu0 0.0
      %2553 = vmatpush1.msra.mxu0 0.0
      %2554 = vmatprep.subr.mxu0 0.0
      %2555 = vmatpush1.msra.mxu0 0.0
      %2556 = vmatprep.subr.mxu0 0.0
      %2557 = vmatpush1.msra.mxu0 0.0
      %2558 = vmatprep.subr.mxu0 0.0
      %2559 = vmatpush1.msra.mxu0 0.0
      %2560 = vmatprep.subr.mxu0 0.0
      %2561 = vmatpush1.msra.mxu0 0.0
      %2562 = vmatprep.subr.mxu0 0.0
      %2563 = vmatpush1.msra.mxu0 0.0
      %2564 = vmatprep.subr.mxu0 0.0
      %2565 = vmatpush1.msra.mxu0 0.0
      %2566 = vmatprep.subr.mxu0 0.0
      %2567 = vmatpush1.msra.mxu0 0.0
      %2568 = vmatprep.subr.mxu0 0.0
      %2569 = vmatpush1.msra.mxu0 0.0
      %2570 = vmatprep.subr.mxu0 0.0
      %2571 = vmatpush1.msra.mxu0 0.0
      %2572 = vmatprep.subr.mxu0 0.0
      %2573 = vmatpush1.msra.mxu0 0.0
      %2574 = vmatprep.subr.mxu0 0.0
      %2575 = vmatpush1.msra.mxu0 0.0
      %2576 = vmatprep.subr.mxu0 0.0
      %2577 = vmatpush1.msra.mxu0 0.0
      %2578 = vmatprep.subr.mxu0 0.0
      %2579 = vmatpush1.msra.mxu0 0.0
      %2580 = vmatprep.subr.mxu0 0.0
      %2581 = vmatpush1.msra.mxu0 0.0
      %2582 = vmatprep.mubr.f32.mxu0 0.0
      %2583 = vmatmul.mubr.f32.gmra.mrb[0].mxu0 %v2516
      %v2584 = vpop.f32.mrb[0].mxu0
      %v2585 = vadd.f32 %v2513, %v2584
      %v2586 = vpop.f32.mrb[0].mxu0
      %2587 = vdwg.mxu0
      %v2588 = vmax.f32 %v2585, 0.0
      %v2589 = vld [vmem:[%s17] sm:$0xff]
      %v2590 = vld [vmem:[%s17 + $0x8] sm:$0xff]
      %v2591 = vld [vmem:[%s17 + $0x10] sm:$0xff]
      %v2592 = vld [vmem:[%s17 + $0x18] sm:$0xff]
      %v2593 = vld [vmem:[%s17 + $0x20] sm:$0xff]
      %v2594 = vld [vmem:[%s17 + $0x28] sm:$0xff]
      %v2595 = vld [vmem:[%s17 + $0x30] sm:$0xff]
      %v2596 = vld [vmem:[%s17 + $0x38] sm:$0xff]
      %v2597 = vld [vmem:[%s18] sm:$0x1]
      %v2599 = vlaneseq
      %v2600 = vshrl.u32 %v2599, 7
      %v2601 = vsub.s32 0, %v2600
      %v2602 = vrot.slane %v2597, %v2601
      %vm2604 = vcmask 523264
      %v2606 = vsel %vm2604, %v2588, 0
      %2608 = vmatprep.subr.mxu0 0.0
      %2609 = vmatpush1.msra.mxu0 %v2589
      %2610 = vmatprep.subr.mxu0 0.0
      %2611 = vmatpush1.msra.mxu0 %v2590
      %2612 = vmatprep.subr.mxu0 0.0
      %2613 = vmatpush1.msra.mxu0 %v2591
      %2614 = vmatprep.subr.mxu0 0.0
      %2615 = vmatpush1.msra.mxu0 %v2592
      %2616 = vmatprep.subr.mxu0 0.0
      %2617 = vmatpush1.msra.mxu0 %v2593
      %2618 = vmatprep.subr.mxu0 0.0
      %2619 = vmatpush1.msra.mxu0 %v2594
      %2620 = vmatprep.subr.mxu0 0.0
      %2621 = vmatpush1.msra.mxu0 %v2595
      %2622 = vmatprep.subr.mxu0 0.0
      %2623 = vmatpush1.msra.mxu0 %v2596
      %2624 = vmatprep.subr.mxu0 0.0
      %2625 = vmatpush1.msra.mxu0 0.0
      %2626 = vmatprep.subr.mxu0 0.0
      %2627 = vmatpush1.msra.mxu0 0.0
      %2628 = vmatprep.subr.mxu0 0.0
      %2629 = vmatpush1.msra.mxu0 0.0
      %2630 = vmatprep.subr.mxu0 0.0
      %2631 = vmatpush1.msra.mxu0 0.0
      %2632 = vmatprep.subr.mxu0 0.0
      %2633 = vmatpush1.msra.mxu0 0.0
      %2634 = vmatprep.subr.mxu0 0.0
      %2635 = vmatpush1.msra.mxu0 0.0
      %2636 = vmatprep.subr.mxu0 0.0
      %2637 = vmatpush1.msra.mxu0 0.0
      %2638 = vmatprep.subr.mxu0 0.0
      %2639 = vmatpush1.msra.mxu0 0.0
      %2640 = vmatprep.subr.mxu0 0.0
      %2641 = vmatpush1.msra.mxu0 0.0
      %2642 = vmatprep.subr.mxu0 0.0
      %2643 = vmatpush1.msra.mxu0 0.0
      %2644 = vmatprep.subr.mxu0 0.0
      %2645 = vmatpush1.msra.mxu0 0.0
      %2646 = vmatprep.subr.mxu0 0.0
      %2647 = vmatpush1.msra.mxu0 0.0
      %2648 = vmatprep.subr.mxu0 0.0
      %2649 = vmatpush1.msra.mxu0 0.0
      %2650 = vmatprep.subr.mxu0 0.0
      %2651 = vmatpush1.msra.mxu0 0.0
      %2652 = vmatprep.subr.mxu0 0.0
      %2653 = vmatpush1.msra.mxu0 0.0
      %2654 = vmatprep.subr.mxu0 0.0
      %2655 = vmatpush1.msra.mxu0 0.0
      %2656 = vmatprep.subr.mxu0 0.0
      %2657 = vmatpush1.msra.mxu0 0.0
      %2658 = vmatprep.subr.mxu0 0.0
      %2659 = vmatpush1.msra.mxu0 0.0
      %2660 = vmatprep.subr.mxu0 0.0
      %2661 = vmatpush1.msra.mxu0 0.0
      %2662 = vmatprep.subr.mxu0 0.0
      %2663 = vmatpush1.msra.mxu0 0.0
      %2664 = vmatprep.subr.mxu0 0.0
      %2665 = vmatpush1.msra.mxu0 0.0
      %2666 = vmatprep.subr.mxu0 0.0
      %2667 = vmatpush1.msra.mxu0 0.0
      %2668 = vmatprep.subr.mxu0 0.0
      %2669 = vmatpush1.msra.mxu0 0.0
      %2670 = vmatprep.subr.mxu0 0.0
      %2671 = vmatpush1.msra.mxu0 0.0
      %2672 = vmatprep.mubr.f32.mxu0 0.0
      %2673 = vmatmul.mubr.f32.gmra.mrb[0].mxu0 %v2606
      %v2674 = vpop.f32.mrb[0].mxu0
      %v2675 = vadd.f32 %v2602, %v2674
      %v2676 = vpop.f32.mrb[0].mxu0
      %2677 = vdwg.mxu0
      %v2678 = vadd.f32 %v2503, %v2675
      %v2679 = vsel %vm637, %v2678, 0.0
      %2680 = vadd.xlane.f32.xlu0 %v2679
      %v2681 = vpop.xlane.xlu0 %2680
      %v2682 = vmul.f32 %v2681, %v1492
      %v2683 = vsub.f32 %v2678, %v2682
      %v2684 = vmul.f32 %v2683, %v2683
      %v2685 = vsel %vm637, %v2684, 0.0
      %2686 = vadd.xlane.f32.xlu0 %v2685
      %v2687 = vpop.xlane.xlu0 %2686
      %v2688 = vmul.f32 %v2687, %v1492
      %v2689 = vadd.f32 %v2688, 1e-05
      %v2690 = vrsqrt.pop %v2689
      %v2691 = vmul.f32 %v2683, %v2690
      %v2692 = vlaneseq
      %v2693 = vshrl.u32 %v2692, 7
      %v2694 = vsub.s32 2, %v2693
      %v2695 = vrot.slane %v624, %v2694
      %v2696 = vmul.f32 %v2691, %v2695
      %v2697 = vlaneseq
      %v2698 = vshrl.u32 %v2697, 7
      %v2699 = vsub.s32 2, %v2698
      %v2700 = vrot.slane %v625, %v2699
      %v2701 = vadd.f32 %v2696, %v2700
      %2702 = vst.msk [vmem:[%s617] sm:$0xff] %vm637, %v2701
      %p2703 = scmp.lt.s32.totalorder %s30, 1
      %s2704 = scalar_select %p2703, %s30, 1
      %s2705 = smul.addr %s2704, 8
      %s2706 = scalar_lea.vmem %s19, %s2705
      // Predicated region
      $region97: #{image_captioning_forward.6} parent=95 // pred_check
        %p2707 = pneg %p457
      $region98: #{image_captioning_forward.6} parent=95 // pred_check_branch
        %2709 = sbr.rel (%p2707) target = $region100
      $region99: #{image_captioning_forward.6} parent=95 // pred_region
        _
      $region100: #{image_captioning_forward.6} parent=95 // pred_fallthru
        _
    $region96: #{image_captioning_forward.6} parent=5 // pred_fallthru
      _
    %p2710 = scmp.le.s32.totalorder 2, %s25
    // Predicated region
    $region101: #{image_captioning_forward.6} parent=5 // pred_check
      %p2711 = pneg %p2710
    $region102: #{image_captioning_forward.6} parent=5 // pred_check_branch
      %2713 = sbr.rel (%p2711) target = $region104
    $region103: #{image_captioning_forward.6} parent=5 // pred_region
      %s2714 = ssub.s32 %s25, 2
      // Predicated region
      $region105: #{image_captioning_forward.6} parent=103 // pred_check
        %p2715 = pneg %p463
      $region106: #{image_captioning_forward.6} parent=103 // pred_check_branch
        %2717 = sbr.rel (%p2715) target = $region108
      $region107: #{image_captioning_forward.6} parent=103 // pred_region
        %p2718 = scmp.lt.s32.totalorder %s31, 1
        %s2719 = scalar_select %p2718, %s31, 1
        %s2720 = smul.addr %s2719, 8
        %s2721 = scalar_lea.vmem %s19, %s2720
      $region108: #{image_captioning_forward.6} parent=103 // pred_fallthru
        _
    $region104: #{image_captioning_forward.6} parent=5 // pred_fallthru
      _
  $region6: #{image_captioning_forward.6} parent=0 // loop_footer
    %s29 = sadd.s32 1, %s25
  $region7: #{image_captioning_forward.6} parent=0 // loop_footer_branch
    %24 = sbr.rel target = $region3
  $region8: #{image_captioning_forward.6} parent=0 // loop_exit
    _

</llo_original>
